<compile_context>
chip_gen: v7x
topology: tpu7x:2x2x1
jax: 0.10.0
libtpu: 0.0.40
codegen_flags: <defaults>
</compile_context>

<pallas_src>
import numpy as np

import jax
import jax.numpy as jnp
from jax.experimental import pallas as pl
from jax.experimental.pallas import tpu as pltpu


# ------------------------------ fused kernel --------------------------------

def _qnet_fused_kernel(plan_ref, sa_ref,
                       t1_ref, cb1_ref, t2_ref, cb2_ref, t3_ref, cb3_ref,
                       w1sa_ref, w1c_ref, fb1_ref,
                       w2_ref, fb2_ref, w3_ref, fb3_ref,
                       w4_ref, fb4_ref,
                       o_ref):
    f32 = jnp.float32

    def dense(x, w_ref, b_ref, relu=True):
        # LHS cast to the (bf16) weight dtype in-vreg; f32 MXU accumulation.
        y = jnp.dot(x.astype(w_ref.dtype), w_ref[...],
                    preferred_element_type=f32) + b_ref[...]
        if relu:
            # carry activations in compute dtype -> halves spill traffic of
            # the big (bt, 1536) conv1 intermediate.
            return jnp.maximum(y, 0.0).astype(w_ref.dtype)
        return y

    # conv stack as flattened-NCHW Toeplitz matmuls (all stay on-chip)
    h = dense(plan_ref[...], t1_ref, cb1_ref)       # (Bt, 1536)  (1296 + zero pad)
    h = dense(h, t2_ref, cb2_ref)                   # (Bt, 256)
    conv = dense(h, t3_ref, cb3_ref)                # (Bt, 32)

    # fc_1 on cat([s, a, conv]) via split dots (no concat materialized);
    # [s, a] arrive pre-merged as one (Bt, sd+1) operand.
    h = (jnp.dot(sa_ref[...].astype(w1sa_ref.dtype), w1sa_ref[...],
                 preferred_element_type=f32)
         + jnp.dot(conv, w1c_ref[...], preferred_element_type=f32)
         + fb1_ref[...])
    h = jnp.maximum(h, 0.0).astype(w2_ref.dtype)    # (Bt, 64)

    h = dense(h, w2_ref, fb2_ref)                   # (Bt, 128)
    h = dense(h, w3_ref, fb3_ref)                   # (Bt, 128)
    # final layer is zero-padded to 128 output columns -> lane-dense store
    q = dense(h, w4_ref, fb4_ref, relu=False)       # (Bt, 128), col 0 = Q
    o_ref[...] = q.astype(o_ref.dtype)


# ------------------- weight-only conv -> matmul lowering ---------------------

def _conv_s2_toeplitz(w, b, H, W, stride=2):
    """Lower Conv2d(k=3, stride=2, VALID) to a dense matrix T such that
       flatNCHW(out) = flatNCHW(in) @ T + bias_expanded. Weight-only; done once."""
    OC, IC, KH, KW = w.shape
    OH = (H - KH) // stride + 1
    OW = (W - KW) // stride + 1
    oc, ic, ky, kx, oy, ox = np.meshgrid(
        np.arange(OC), np.arange(IC), np.arange(KH), np.arange(KW),
        np.arange(OH), np.arange(OW), indexing="ij")
    rows = (ic * H * W + (stride * oy + ky) * W + (stride * ox + kx)).ravel()
    cols = (oc * OH * OW + oy * OW + ox).ravel()
    vals = w[oc.ravel(), ic.ravel(), ky.ravel(), kx.ravel()]
    T = jnp.zeros((IC * H * W, OC * OH * OW), jnp.float32).at[rows, cols].set(vals)
    b_exp = jnp.repeat(b.astype(jnp.float32), OH * OW).reshape(1, OC * OH * OW)
    return T, b_exp, (OC, OH, OW)


def prepare_params(params, state_dim, *, compute_dtype=jnp.bfloat16):
    """One-time transform of the PyTorch-style params into kernel operands.
    All matmul weights are cast to `compute_dtype` here (bf16 default) so the
    hot path never pays a per-call XLA cast; biases stay f32."""
    t1, cb1, (_, oh1, ow1) = _conv_s2_toeplitz(*params["conv1"], H=20, W=20)
    t2, cb2, (_, oh2, ow2) = _conv_s2_toeplitz(*params["conv2"], H=oh1, W=ow1)
    t3, cb3, _ = _conv_s2_toeplitz(*params["conv3"], H=oh2, W=ow2)

    # pad conv1 output dim 1296 -> 1536 (multiple of 256) with exact zeros
    # (zero cols in T1 / zero bias -> ReLU keeps them zero; matching zero rows
    # in T2) so the MXU N-dimension is a clean multiple of 256.
    pad1 = (-t1.shape[1]) % 256
    if pad1:
        t1 = jnp.pad(t1, ((0, 0), (0, pad1)))
        cb1 = jnp.pad(cb1, ((0, 0), (0, pad1)))
        t2 = jnp.pad(t2, ((0, pad1), (0, 0)))

    (w1, b1), (w2, b2), (w3, b3), (w4, b4) = params["mlp"]
    sd = state_dim
    w1sa, w1c = w1[:sd + 1], w1[sd + 1:]          # cat-free fc_1: [s,a] part / conv part

    # lane-dense final layer: pad the single output column to 128 zero cols.
    w4p = jnp.pad(w4, ((0, 0), (0, 128 - w4.shape[1])))
    b4p = jnp.pad(b4.reshape(1, -1), ((0, 0), (0, 128 - b4.shape[0])))

    def row(v):
        return v.astype(jnp.float32).reshape(1, -1)

    cd = compute_dtype
    return (t1.astype(cd), cb1, t2.astype(cd), cb2, t3.astype(cd), cb3,
            w1sa.astype(cd), w1c.astype(cd), row(b1),
            w2.astype(cd), row(b2), w3.astype(cd), row(b3),
            w4p.astype(cd), b4p.astype(jnp.float32))


# ------------------------------- forward pass --------------------------------

def q_net_forward(prepared, s, a, plan, bsize, *, block_b=512, core_parallel=False):
    assert block_b % 16 == 0                      # bf16 sublane packing
    B = bsize
    plan = plan.reshape(B, -1)                    # (B, 400) flat (B,1,20,20); no dtype cast
    sa = jnp.concatenate([s, a], axis=1)          # (B, sd+1): one input stream instead of two

    weights = prepared
    n_plan = plan.shape[1]
    n_sa = sa.shape[1]

    # batch tiling: block_b rows per grid step; weights live at constant block.
    if B <= block_b:
        bt, grid = B, (1,)
    else:
        bt = block_b
        grid = (pl.cdiv(B, bt),)                  # partial last block: rows are independent

    def row_spec(n):
        return pl.BlockSpec((bt, n), lambda i: (i, 0))

    def full_spec(arr):
        return pl.BlockSpec(arr.shape, lambda i: (0, 0))

    batch_sem = (pltpu.CORE_PARALLEL,) if core_parallel else ("parallel",)

    out = pl.pallas_call(
        _qnet_fused_kernel,
        out_shape=jax.ShapeDtypeStruct((B, 128), jnp.float32),   # lane-dense output slab
        grid=grid,
        in_specs=[row_spec(n_plan), row_spec(n_sa)]
                 + [full_spec(w) for w in weights],
        out_specs=row_spec(128),
        compiler_params=pltpu.CompilerParams(
            dimension_semantics=batch_sem,
            vmem_limit_bytes=32 * 1024 * 1024),
    )(plan, sa, *weights)
    return out[:, :1]                             # column 0 holds Q


# ------------------------ pure-JAX reference (XLA) ----------------------------

def q_net_reference(params, s, a, plan, bsize):
    x = plan.reshape(bsize, 1, 20, 20).astype(jnp.float32)
    for name in ("conv1", "conv2", "conv3"):
        w, b = params[name]
        x = jax.lax.conv_general_dilated(
            x, w, window_strides=(2, 2), padding="VALID",
            dimension_numbers=("NCHW", "OIHW", "NCHW"))
        x = jnp.maximum(x + b.reshape(1, -1, 1, 1), 0.0)
    conv_out = x.reshape(bsize, 32)
    h = jnp.concatenate([s, a, conv_out], axis=1)
    (w1, b1), (w2, b2), (w3, b3), (w4, b4) = params["mlp"]
    h = jnp.maximum(h @ w1 + b1, 0.0)
    h = jnp.maximum(h @ w2 + b2, 0.0)
    h = jnp.maximum(h @ w3 + b3, 0.0)
    return h @ w4 + b4


# --------------------------- deterministic init -------------------------------

def _xavier_uniform_fc(key, din, dout):
    # matches nn.init.xavier_uniform_(gain=calculate_gain('relu')); bias = 0.
    gain = jnp.sqrt(2.0)
    bound = gain * jnp.sqrt(6.0 / (din + dout))
    w = jax.random.uniform(key, (din, dout), jnp.float32, -bound, bound)
    b = jnp.zeros((dout,), jnp.float32)
    return w, b


def _conv_default_init(key, oc, ic, k=3):
    # PyTorch Conv2d default: uniform(-1/sqrt(fan_in), 1/sqrt(fan_in))
    wkey, bkey = jax.random.split(key)
    fan_in = ic * k * k
    bound = 1.0 / jnp.sqrt(jnp.float32(fan_in))
    w = jax.random.uniform(wkey, (oc, ic, k, k), jnp.float32, -bound, bound)
    b = jax.random.uniform(bkey, (oc,), jnp.float32, -bound, bound)
    return w, b


def init_params(key, state_dim):
    ks = jax.random.split(key, 8)
    return {
        "conv1": _conv_default_init(ks[0], 16, 1),
        "conv2": _conv_default_init(ks[1], 16, 16),
        "conv3": _conv_default_init(ks[2], 32, 16),
        # conv_layer4 exists in __init__ but is never used in forward -> omitted.
        "mlp": (
            _xavier_uniform_fc(ks[3], state_dim + 1 + 32, 64),
            _xavier_uniform_fc(ks[4], 64, 128),
            _xavier_uniform_fc(ks[5], 128, 128),
            _xavier_uniform_fc(ks[6], 128, 1),
        ),
    }


# ---------------------------------- main --------------------------------------

if __name__ == "__main__":
    STATE_DIM = 6   # env.state_dim is environment-dependent; small synthetic value
    B = 2

    key = jax.random.PRNGKey(0)
    pkey, skey, akey, plankey = jax.random.split(key, 4)

    params = init_params(pkey, STATE_DIM)
    prepared_bf16 = prepare_params(params, STATE_DIM)                       # default bf16 MXU path
    prepared_f32 = prepare_params(params, STATE_DIM, compute_dtype=jnp.float32)

    s = jax.random.normal(skey, (B, STATE_DIM), jnp.float32)
    a = jax.random.normal(akey, (B, 1), jnp.float32)
    plan = jax.random.normal(plankey, (B, 400), jnp.float32)  # viewed as (B,1,20,20)

    fwd = jax.jit(q_net_forward,
                  static_argnames=("bsize", "block_b", "core_parallel"))

    # fast path (bf16 matmuls, f32 accumulation)
    Q = fwd(prepared_bf16, s, a, plan, bsize=B)
    jax.block_until_ready(Q)
    assert Q.shape == (B, 1)

    Q_ref = q_net_reference(params, s, a, plan, B)
    assert jnp.allclose(Q, Q_ref, rtol=5e-2, atol=5e-2), (Q, Q_ref)

    # exactness check on the f32 path against the XLA reference
    Q32 = fwd(prepared_f32, s, a, plan, bsize=B)
    jax.block_until_ready(Q32)
    assert jnp.allclose(Q32, Q_ref, rtol=1e-3, atol=1e-3), (Q32, Q_ref)

    print("KERNEL_OK")
</pallas_src>

<mosaic_0001>
module attributes {stable_mosaic.version = 11 : i64} {
  func.func @_qnet_fused_kernel(%arg0: i32, %arg1: memref<2x400xf32, #tpu.memory_space<vmem>>, %arg2: memref<2x7xf32, #tpu.memory_space<vmem>>, %arg3: memref<400x1536xbf16, #tpu.memory_space<vmem>>, %arg4: memref<1x1536xf32, #tpu.memory_space<vmem>>, %arg5: memref<1536x256xbf16, #tpu.memory_space<vmem>>, %arg6: memref<1x256xf32, #tpu.memory_space<vmem>>, %arg7: memref<256x32xbf16, #tpu.memory_space<vmem>>, %arg8: memref<1x32xf32, #tpu.memory_space<vmem>>, %arg9: memref<7x64xbf16, #tpu.memory_space<vmem>>, %arg10: memref<32x64xbf16, #tpu.memory_space<vmem>>, %arg11: memref<1x64xf32, #tpu.memory_space<vmem>>, %arg12: memref<64x128xbf16, #tpu.memory_space<vmem>>, %arg13: memref<1x128xf32, #tpu.memory_space<vmem>>, %arg14: memref<128x128xbf16, #tpu.memory_space<vmem>>, %arg15: memref<1x128xf32, #tpu.memory_space<vmem>>, %arg16: memref<128x128xbf16, #tpu.memory_space<vmem>>, %arg17: memref<1x128xf32, #tpu.memory_space<vmem>>, %arg18: memref<2x128xf32, #tpu.memory_space<vmem>>) attributes {dimension_semantics = [#tpu.dimension_semantics<parallel>], iteration_bounds = array<i64: 1>, scalar_prefetch = 0 : i64, scratch_operands = 0 : i64, tpu.core_type = #tpu.core_type<tc>, window_params = [{transform_indices = @transform_0, window_bounds = array<i64: 2, 400>}, {transform_indices = @transform_1, window_bounds = array<i64: 2, 7>}, {pipeline_mode = #tpu.pipeline_mode<synchronous>, transform_indices = @transform_2, window_bounds = array<i64: 400, 1536>}, {pipeline_mode = #tpu.pipeline_mode<synchronous>, transform_indices = @transform_3, window_bounds = array<i64: 1, 1536>}, {pipeline_mode = #tpu.pipeline_mode<synchronous>, transform_indices = @transform_4, window_bounds = array<i64: 1536, 256>}, {pipeline_mode = #tpu.pipeline_mode<synchronous>, transform_indices = @transform_5, window_bounds = array<i64: 1, 256>}, {pipeline_mode = #tpu.pipeline_mode<synchronous>, transform_indices = @transform_6, window_bounds = array<i64: 256, 32>}, {pipeline_mode = #tpu.pipeline_mode<synchronous>, transform_indices = @transform_7, window_bounds = array<i64: 1, 32>}, {pipeline_mode = #tpu.pipeline_mode<synchronous>, transform_indices = @transform_8, window_bounds = array<i64: 7, 64>}, {pipeline_mode = #tpu.pipeline_mode<synchronous>, transform_indices = @transform_9, window_bounds = array<i64: 32, 64>}, {pipeline_mode = #tpu.pipeline_mode<synchronous>, transform_indices = @transform_10, window_bounds = array<i64: 1, 64>}, {pipeline_mode = #tpu.pipeline_mode<synchronous>, transform_indices = @transform_11, window_bounds = array<i64: 64, 128>}, {pipeline_mode = #tpu.pipeline_mode<synchronous>, transform_indices = @transform_12, window_bounds = array<i64: 1, 128>}, {pipeline_mode = #tpu.pipeline_mode<synchronous>, transform_indices = @transform_13, window_bounds = array<i64: 128, 128>}, {pipeline_mode = #tpu.pipeline_mode<synchronous>, transform_indices = @transform_14, window_bounds = array<i64: 1, 128>}, {pipeline_mode = #tpu.pipeline_mode<synchronous>, transform_indices = @transform_15, window_bounds = array<i64: 128, 128>}, {pipeline_mode = #tpu.pipeline_mode<synchronous>, transform_indices = @transform_16, window_bounds = array<i64: 1, 128>}, {transform_indices = @transform_17, window_bounds = array<i64: 2, 128>}]} {
    %c0 = arith.constant 0 : index
    %c0_0 = arith.constant 0 : index
    %0 = vector.load %arg1[%c0, %c0_0] : memref<2x400xf32, #tpu.memory_space<vmem>>, vector<2x400xf32>
    %1 = arith.truncf %0 : vector<2x400xf32> to vector<2x400xbf16>
    %c0_1 = arith.constant 0 : index
    %c0_2 = arith.constant 0 : index
    %2 = vector.load %arg3[%c0_1, %c0_2] : memref<400x1536xbf16, #tpu.memory_space<vmem>>, vector<400x1536xbf16>
    %cst = arith.constant dense<0.000000e+00> : vector<2x1536xf32>
    %3 = tpu.matmul %1, %2, %cst {dimension_numbers = #tpu.dot_dimension_numbers<[1], [0], [0], [1], [0, 0, 1, 1], [], []>} : vector<2x400xbf16>, vector<400x1536xbf16>, vector<2x1536xf32> -> vector<2x1536xf32>
    %c0_3 = arith.constant 0 : index
    %c0_4 = arith.constant 0 : index
    %4 = vector.load %arg4[%c0_3, %c0_4] : memref<1x1536xf32, #tpu.memory_space<vmem>>, vector<1x1536xf32>
    %5 = vector.broadcast %4 : vector<1x1536xf32> to vector<2x1536xf32>
    %6 = arith.addf %3, %5 : vector<2x1536xf32>
    %cst_5 = arith.constant 0.000000e+00 : f32
    %7 = vector.broadcast %cst_5 : f32 to vector<2x1536xf32>
    %8 = arith.maximumf %6, %7 : vector<2x1536xf32>
    %9 = arith.truncf %8 : vector<2x1536xf32> to vector<2x1536xbf16>
    %c0_6 = arith.constant 0 : index
    %c0_7 = arith.constant 0 : index
    %10 = vector.load %arg5[%c0_6, %c0_7] : memref<1536x256xbf16, #tpu.memory_space<vmem>>, vector<1536x256xbf16>
    %cst_8 = arith.constant dense<0.000000e+00> : vector<2x256xf32>
    %11 = tpu.matmul %9, %10, %cst_8 {dimension_numbers = #tpu.dot_dimension_numbers<[1], [0], [0], [1], [0, 0, 1, 1], [], []>} : vector<2x1536xbf16>, vector<1536x256xbf16>, vector<2x256xf32> -> vector<2x256xf32>
    %c0_9 = arith.constant 0 : index
    %c0_10 = arith.constant 0 : index
    %12 = vector.load %arg6[%c0_9, %c0_10] : memref<1x256xf32, #tpu.memory_space<vmem>>, vector<1x256xf32>
    %13 = vector.broadcast %12 : vector<1x256xf32> to vector<2x256xf32>
    %14 = arith.addf %11, %13 : vector<2x256xf32>
    %cst_11 = arith.constant 0.000000e+00 : f32
    %15 = vector.broadcast %cst_11 : f32 to vector<2x256xf32>
    %16 = arith.maximumf %14, %15 : vector<2x256xf32>
    %17 = arith.truncf %16 : vector<2x256xf32> to vector<2x256xbf16>
    %c0_12 = arith.constant 0 : index
    %c0_13 = arith.constant 0 : index
    %18 = vector.load %arg7[%c0_12, %c0_13] : memref<256x32xbf16, #tpu.memory_space<vmem>>, vector<256x32xbf16>
    %cst_14 = arith.constant dense<0.000000e+00> : vector<2x32xf32>
    %19 = tpu.matmul %17, %18, %cst_14 {dimension_numbers = #tpu.dot_dimension_numbers<[1], [0], [0], [1], [0, 0, 1, 1], [], []>} : vector<2x256xbf16>, vector<256x32xbf16>, vector<2x32xf32> -> vector<2x32xf32>
    %c0_15 = arith.constant 0 : index
    %c0_16 = arith.constant 0 : index
    %20 = vector.load %arg8[%c0_15, %c0_16] : memref<1x32xf32, #tpu.memory_space<vmem>>, vector<1x32xf32>
    %21 = vector.broadcast %20 : vector<1x32xf32> to vector<2x32xf32>
    %22 = arith.addf %19, %21 : vector<2x32xf32>
    %cst_17 = arith.constant 0.000000e+00 : f32
    %23 = vector.broadcast %cst_17 : f32 to vector<2x32xf32>
    %24 = arith.maximumf %22, %23 : vector<2x32xf32>
    %25 = arith.truncf %24 : vector<2x32xf32> to vector<2x32xbf16>
    %c0_18 = arith.constant 0 : index
    %c0_19 = arith.constant 0 : index
    %26 = vector.load %arg2[%c0_18, %c0_19] : memref<2x7xf32, #tpu.memory_space<vmem>>, vector<2x7xf32>
    %27 = arith.truncf %26 : vector<2x7xf32> to vector<2x7xbf16>
    %c0_20 = arith.constant 0 : index
    %c0_21 = arith.constant 0 : index
    %28 = vector.load %arg9[%c0_20, %c0_21] : memref<7x64xbf16, #tpu.memory_space<vmem>>, vector<7x64xbf16>
    %cst_22 = arith.constant dense<0.000000e+00> : vector<2x64xf32>
    %29 = tpu.matmul %27, %28, %cst_22 {dimension_numbers = #tpu.dot_dimension_numbers<[1], [0], [0], [1], [0, 0, 1, 1], [], []>} : vector<2x7xbf16>, vector<7x64xbf16>, vector<2x64xf32> -> vector<2x64xf32>
    %c0_23 = arith.constant 0 : index
    %c0_24 = arith.constant 0 : index
    %30 = vector.load %arg10[%c0_23, %c0_24] : memref<32x64xbf16, #tpu.memory_space<vmem>>, vector<32x64xbf16>
    %cst_25 = arith.constant dense<0.000000e+00> : vector<2x64xf32>
    %31 = tpu.matmul %25, %30, %cst_25 {dimension_numbers = #tpu.dot_dimension_numbers<[1], [0], [0], [1], [0, 0, 1, 1], [], []>} : vector<2x32xbf16>, vector<32x64xbf16>, vector<2x64xf32> -> vector<2x64xf32>
    %32 = arith.addf %29, %31 : vector<2x64xf32>
    %c0_26 = arith.constant 0 : index
    %c0_27 = arith.constant 0 : index
    %33 = vector.load %arg11[%c0_26, %c0_27] : memref<1x64xf32, #tpu.memory_space<vmem>>, vector<1x64xf32>
    %34 = vector.broadcast %33 : vector<1x64xf32> to vector<2x64xf32>
    %35 = arith.addf %32, %34 : vector<2x64xf32>
    %cst_28 = arith.constant 0.000000e+00 : f32
    %36 = vector.broadcast %cst_28 : f32 to vector<2x64xf32>
    %37 = arith.maximumf %35, %36 : vector<2x64xf32>
    %38 = arith.truncf %37 : vector<2x64xf32> to vector<2x64xbf16>
    %c0_29 = arith.constant 0 : index
    %c0_30 = arith.constant 0 : index
    %39 = vector.load %arg12[%c0_29, %c0_30] : memref<64x128xbf16, #tpu.memory_space<vmem>>, vector<64x128xbf16>
    %cst_31 = arith.constant dense<0.000000e+00> : vector<2x128xf32>
    %40 = tpu.matmul %38, %39, %cst_31 {dimension_numbers = #tpu.dot_dimension_numbers<[1], [0], [0], [1], [0, 0, 1, 1], [], []>} : vector<2x64xbf16>, vector<64x128xbf16>, vector<2x128xf32> -> vector<2x128xf32>
    %c0_32 = arith.constant 0 : index
    %c0_33 = arith.constant 0 : index
    %41 = vector.load %arg13[%c0_32, %c0_33] : memref<1x128xf32, #tpu.memory_space<vmem>>, vector<1x128xf32>
    %42 = vector.broadcast %41 : vector<1x128xf32> to vector<2x128xf32>
    %43 = arith.addf %40, %42 : vector<2x128xf32>
    %cst_34 = arith.constant 0.000000e+00 : f32
    %44 = vector.broadcast %cst_34 : f32 to vector<2x128xf32>
    %45 = arith.maximumf %43, %44 : vector<2x128xf32>
    %46 = arith.truncf %45 : vector<2x128xf32> to vector<2x128xbf16>
    %c0_35 = arith.constant 0 : index
    %c0_36 = arith.constant 0 : index
    %47 = vector.load %arg14[%c0_35, %c0_36] : memref<128x128xbf16, #tpu.memory_space<vmem>>, vector<128x128xbf16>
    %cst_37 = arith.constant dense<0.000000e+00> : vector<2x128xf32>
    %48 = tpu.matmul %46, %47, %cst_37 {dimension_numbers = #tpu.dot_dimension_numbers<[1], [0], [0], [1], [0, 0, 1, 1], [], []>} : vector<2x128xbf16>, vector<128x128xbf16>, vector<2x128xf32> -> vector<2x128xf32>
    %c0_38 = arith.constant 0 : index
    %c0_39 = arith.constant 0 : index
    %49 = vector.load %arg15[%c0_38, %c0_39] : memref<1x128xf32, #tpu.memory_space<vmem>>, vector<1x128xf32>
    %50 = vector.broadcast %49 : vector<1x128xf32> to vector<2x128xf32>
    %51 = arith.addf %48, %50 : vector<2x128xf32>
    %cst_40 = arith.constant 0.000000e+00 : f32
    %52 = vector.broadcast %cst_40 : f32 to vector<2x128xf32>
    %53 = arith.maximumf %51, %52 : vector<2x128xf32>
    %54 = arith.truncf %53 : vector<2x128xf32> to vector<2x128xbf16>
    %c0_41 = arith.constant 0 : index
    %c0_42 = arith.constant 0 : index
    %55 = vector.load %arg16[%c0_41, %c0_42] : memref<128x128xbf16, #tpu.memory_space<vmem>>, vector<128x128xbf16>
    %cst_43 = arith.constant dense<0.000000e+00> : vector<2x128xf32>
    %56 = tpu.matmul %54, %55, %cst_43 {dimension_numbers = #tpu.dot_dimension_numbers<[1], [0], [0], [1], [0, 0, 1, 1], [], []>} : vector<2x128xbf16>, vector<128x128xbf16>, vector<2x128xf32> -> vector<2x128xf32>
    %c0_44 = arith.constant 0 : index
    %c0_45 = arith.constant 0 : index
    %57 = vector.load %arg17[%c0_44, %c0_45] : memref<1x128xf32, #tpu.memory_space<vmem>>, vector<1x128xf32>
    %58 = vector.broadcast %57 : vector<1x128xf32> to vector<2x128xf32>
    %59 = arith.addf %56, %58 : vector<2x128xf32>
    %c0_46 = arith.constant 0 : index
    %c0_47 = arith.constant 0 : index
    %60 = vector.load %arg18[%c0_46, %c0_47] : memref<2x128xf32, #tpu.memory_space<vmem>>, vector<2x128xf32>
    tpu.vector_store %arg18[%c0_46, %c0_47], %59 {strides = array<i32>} : memref<2x128xf32, #tpu.memory_space<vmem>>, vector<2x128xf32>,
    return
  }
  func.func @transform_0(%arg0: i32) -> (i32, i32) {
    %c0_i32 = arith.constant 0 : i32
    %c0_i32_0 = arith.constant 0 : i32
    return %arg0, %c0_i32 : i32, i32
  }
  func.func @transform_1(%arg0: i32) -> (i32, i32) {
    %c0_i32 = arith.constant 0 : i32
    %c0_i32_0 = arith.constant 0 : i32
    return %arg0, %c0_i32 : i32, i32
  }
  func.func @transform_2(%arg0: i32) -> (i32, i32) {
    %c0_i32 = arith.constant 0 : i32
    %c0_i32_0 = arith.constant 0 : i32
    %c0_i32_1 = arith.constant 0 : i32
    return %c0_i32, %c0_i32_0 : i32, i32
  }
  func.func @transform_3(%arg0: i32) -> (i32, i32) {
    %c0_i32 = arith.constant 0 : i32
    %c0_i32_0 = arith.constant 0 : i32
    %c0_i32_1 = arith.constant 0 : i32
    return %c0_i32, %c0_i32_0 : i32, i32
  }
  func.func @transform_4(%arg0: i32) -> (i32, i32) {
    %c0_i32 = arith.constant 0 : i32
    %c0_i32_0 = arith.constant 0 : i32
    %c0_i32_1 = arith.constant 0 : i32
    return %c0_i32, %c0_i32_0 : i32, i32
  }
  func.func @transform_5(%arg0: i32) -> (i32, i32) {
    %c0_i32 = arith.constant 0 : i32
    %c0_i32_0 = arith.constant 0 : i32
    %c0_i32_1 = arith.constant 0 : i32
    return %c0_i32, %c0_i32_0 : i32, i32
  }
  func.func @transform_6(%arg0: i32) -> (i32, i32) {
    %c0_i32 = arith.constant 0 : i32
    %c0_i32_0 = arith.constant 0 : i32
    %c0_i32_1 = arith.constant 0 : i32
    return %c0_i32, %c0_i32_0 : i32, i32
  }
  func.func @transform_7(%arg0: i32) -> (i32, i32) {
    %c0_i32 = arith.constant 0 : i32
    %c0_i32_0 = arith.constant 0 : i32
    %c0_i32_1 = arith.constant 0 : i32
    return %c0_i32, %c0_i32_0 : i32, i32
  }
  func.func @transform_8(%arg0: i32) -> (i32, i32) {
    %c0_i32 = arith.constant 0 : i32
    %c0_i32_0 = arith.constant 0 : i32
    %c0_i32_1 = arith.constant 0 : i32
    return %c0_i32, %c0_i32_0 : i32, i32
  }
  func.func @transform_9(%arg0: i32) -> (i32, i32) {
    %c0_i32 = arith.constant 0 : i32
    %c0_i32_0 = arith.constant 0 : i32
    %c0_i32_1 = arith.constant 0 : i32
    return %c0_i32, %c0_i32_0 : i32, i32
  }
  func.func @transform_10(%arg0: i32) -> (i32, i32) {
    %c0_i32 = arith.constant 0 : i32
    %c0_i32_0 = arith.constant 0 : i32
    %c0_i32_1 = arith.constant 0 : i32
    return %c0_i32, %c0_i32_0 : i32, i32
  }
  func.func @transform_11(%arg0: i32) -> (i32, i32) {
    %c0_i32 = arith.constant 0 : i32
    %c0_i32_0 = arith.constant 0 : i32
    %c0_i32_1 = arith.constant 0 : i32
    return %c0_i32, %c0_i32_0 : i32, i32
  }
  func.func @transform_12(%arg0: i32) -> (i32, i32) {
    %c0_i32 = arith.constant 0 : i32
    %c0_i32_0 = arith.constant 0 : i32
    %c0_i32_1 = arith.constant 0 : i32
    return %c0_i32, %c0_i32_0 : i32, i32
  }
  func.func @transform_13(%arg0: i32) -> (i32, i32) {
    %c0_i32 = arith.constant 0 : i32
    %c0_i32_0 = arith.constant 0 : i32
    %c0_i32_1 = arith.constant 0 : i32
    return %c0_i32, %c0_i32_0 : i32, i32
  }
  func.func @transform_14(%arg0: i32) -> (i32, i32) {
    %c0_i32 = arith.constant 0 : i32
    %c0_i32_0 = arith.constant 0 : i32
    %c0_i32_1 = arith.constant 0 : i32
    return %c0_i32, %c0_i32_0 : i32, i32
  }
  func.func @transform_15(%arg0: i32) -> (i32, i32) {
    %c0_i32 = arith.constant 0 : i32
    %c0_i32_0 = arith.constant 0 : i32
    %c0_i32_1 = arith.constant 0 : i32
    return %c0_i32, %c0_i32_0 : i32, i32
  }
  func.func @transform_16(%arg0: i32) -> (i32, i32) {
    %c0_i32 = arith.constant 0 : i32
    %c0_i32_0 = arith.constant 0 : i32
    %c0_i32_1 = arith.constant 0 : i32
    return %c0_i32, %c0_i32_0 : i32, i32
  }
  func.func @transform_17(%arg0: i32) -> (i32, i32) {
    %c0_i32 = arith.constant 0 : i32
    %c0_i32_0 = arith.constant 0 : i32
    return %arg0, %c0_i32 : i32, i32
  }
}

</mosaic_0001>

<llo_original>
// kernel: q_net_forward.1
$region0: #{q_net_forward.1}
  #allocation0 [shape = 'u32[]', space=smem, size = 0x4, offset = 0x4, fixed_abs, tag = 'smem constant byte address 0x4 - core index']
  #allocation1 [shape = 'u32[144,128]{1,0:T(1,128)}', space=vmem, size = 0x12000, scoped, tag = 'internal scratch']
  %s0 = inlined_call_operand.hbm [shape: f32[2,400], index: 0, kind: input, shape index: {}]
  %s1 = inlined_call_operand.vmem [shape: f32[2,7], index: 1, kind: input, shape index: {}]
  %s2 = inlined_call_operand.hbm [shape: bf16[400,1536], index: 2, kind: input, shape index: {}]
  %s3 = inlined_call_operand.hbm [shape: f32[1,1536], index: 3, kind: input, shape index: {}]
  %s4 = inlined_call_operand.hbm [shape: bf16[1536,256], index: 4, kind: input, shape index: {}]
  %s5 = inlined_call_operand.hbm [shape: f32[1,256], index: 5, kind: input, shape index: {}]
  %s6 = inlined_call_operand.vmem [shape: bf16[256,32], index: 6, kind: input, shape index: {}]
  %s7 = inlined_call_operand.hbm [shape: f32[1,32], index: 7, kind: input, shape index: {}]
  %s8 = inlined_call_operand.hbm [shape: bf16[7,64], index: 8, kind: input, shape index: {}]
  %s9 = inlined_call_operand.hbm [shape: bf16[32,64], index: 9, kind: input, shape index: {}]
  %s10 = inlined_call_operand.hbm [shape: f32[1,64], index: 10, kind: input, shape index: {}]
  %s11 = inlined_call_operand.hbm [shape: bf16[64,128], index: 11, kind: input, shape index: {}]
  %s12 = inlined_call_operand.hbm [shape: f32[1,128], index: 12, kind: input, shape index: {}]
  %s13 = inlined_call_operand.hbm [shape: bf16[128,128], index: 13, kind: input, shape index: {}]
  %s14 = inlined_call_operand.hbm [shape: f32[1,128], index: 14, kind: input, shape index: {}]
  %s15 = inlined_call_operand.hbm [shape: bf16[128,128], index: 15, kind: input, shape index: {}]
  %s16 = inlined_call_operand.hbm [shape: f32[1,128], index: 16, kind: input, shape index: {}]
  %s17 = inlined_call_operand.vmem [shape: f32[2,128], index: 17, kind: output, shape index: {}]
  %s18 = sld [smem:[#allocation0]]
  $region138: #{q_net_forward.1} parent=0
    _
  %s20 = ssub.s32 1, %s18
  %s21 = scalar_select 0, %s20, %s18
  $region1: #{q_net_forward.1} parent=0
    #allocation2 [shape = 'u8[4096]{0}', space=vmem, size = 0x1000, scoped, tag = 'input window, operand 0, single buffered']
    #allocation3 [shape = 's32[1]{0}', space=sflag, size = 0x4, scoped, tag = 'scoped memory for q_net_forward.1']
    #allocation4 [shape = 'u8[1228800]{0}', space=vmem, size = 0x12c000, scoped, tag = 'input window, operand 2, single buffered']
    #allocation5 [shape = 's32[1]{0}', space=sflag, size = 0x4, scoped, tag = 'scoped memory for q_net_forward.1']
    #allocation6 [shape = 'u8[6144]{0}', space=vmem, size = 0x1800, scoped, tag = 'input window, operand 3, single buffered']
    #allocation7 [shape = 'u8[786432]{0}', space=vmem, size = 0xc0000, scoped, tag = 'input window, operand 4, single buffered']
    #allocation8 [shape = 's32[1]{0}', space=sflag, size = 0x4, scoped, tag = 'scoped memory for q_net_forward.1']
    #allocation9 [shape = 'u8[1024]{0}', space=vmem, size = 0x400, scoped, tag = 'input window, operand 5, single buffered']
    #allocation10 [shape = 'u8[512]{0}', space=vmem, size = 0x400, scoped, tag = 'input window, operand 7, single buffered']
    #allocation11 [shape = 's32[1]{0}', space=sflag, size = 0x4, scoped, tag = 'scoped memory for q_net_forward.1']
    #allocation12 [shape = 'u8[2048]{0}', space=vmem, size = 0x800, scoped, tag = 'input window, operand 8, single buffered']
    #allocation13 [shape = 'u8[8192]{0}', space=vmem, size = 0x2000, scoped, tag = 'input window, operand 9, single buffered']
    #allocation14 [shape = 's32[1]{0}', space=sflag, size = 0x4, scoped, tag = 'scoped memory for q_net_forward.1']
    #allocation15 [shape = 'u8[512]{0}', space=vmem, size = 0x400, scoped, tag = 'input window, operand 10, single buffered']
    #allocation16 [shape = 'u8[16384]{0}', space=vmem, size = 0x4000, scoped, tag = 'input window, operand 11, single buffered']
    #allocation17 [shape = 's32[1]{0}', space=sflag, size = 0x4, scoped, tag = 'scoped memory for q_net_forward.1']
    #allocation18 [shape = 'u8[512]{0}', space=vmem, size = 0x400, scoped, tag = 'input window, operand 12, single buffered']
    #allocation19 [shape = 'u8[32768]{0}', space=vmem, size = 0x8000, scoped, tag = 'input window, operand 13, single buffered']
    #allocation20 [shape = 's32[1]{0}', space=sflag, size = 0x4, scoped, tag = 'scoped memory for q_net_forward.1']
    #allocation21 [shape = 'u8[512]{0}', space=vmem, size = 0x400, scoped, tag = 'input window, operand 14, single buffered']
    #allocation22 [shape = 'u8[32768]{0}', space=vmem, size = 0x8000, scoped, tag = 'input window, operand 15, single buffered']
    #allocation23 [shape = 's32[1]{0}', space=sflag, size = 0x4, scoped, tag = 'scoped memory for q_net_forward.1']
    #allocation24 [shape = 'u8[512]{0}', space=vmem, size = 0x400, scoped, tag = 'input window, operand 16, single buffered']
    %22 = vsyncpa [#allocation3], 0
    %23 = vsyncpa [#allocation5], 0
    %24 = vsyncpa [#allocation8], 0
    %25 = vsyncpa [#allocation11], 0
    %26 = vsyncpa [#allocation14], 0
    %27 = vsyncpa [#allocation17], 0
    %28 = vsyncpa [#allocation20], 0
    %29 = vsyncpa [#allocation23], 0
    // Predicated region
    $region2: #{q_net_forward.1} parent=1 // pred_check
      _
    $region3: #{q_net_forward.1} parent=1 // pred_check_branch
      %31 = sbr.rel (0) target = $region5
    $region4: #{q_net_forward.1} parent=1 // pred_region
      %s33 = ssub.s32 128, 128
      %34 = vsyncadd [#allocation3], %s33
      %s36 = sshll.u32 [#allocation2], 4
      %s37 = int_to_ptr.vmem [resolvable:$true] %s36
      %39 = dma.hbm_to_vmem [thread:$0]  %s0, 128, %s37, [#allocation3]
    $region5: #{q_net_forward.1} parent=1 // pred_fallthru
      _
    // Predicated region
    $region6: #{q_net_forward.1} parent=1 // pred_check
      _
    $region7: #{q_net_forward.1} parent=1 // pred_check_branch
      %41 = sbr.rel (0) target = $region9
    $region8: #{q_net_forward.1} parent=1 // pred_region
      _
    $region9: #{q_net_forward.1} parent=1 // pred_fallthru
      _
    // Predicated region
    $region10: #{q_net_forward.1} parent=1 // pred_check
      _
    $region11: #{q_net_forward.1} parent=1 // pred_check_branch
      %43 = sbr.rel (0) target = $region13
    $region12: #{q_net_forward.1} parent=1 // pred_region
      %s45 = ssub.s32 38400, 38400
      %46 = vsyncadd [#allocation5], %s45
      %s47 = sshll.u32 [#allocation4], 4
      %s48 = int_to_ptr.vmem [resolvable:$true] %s47
      %53 = dma.hbm_to_vmem [thread:$0]  %s2, 38400, %s48, [#allocation5], 768, 768, 48
    $region13: #{q_net_forward.1} parent=1 // pred_fallthru
      _
    // Predicated region
    $region14: #{q_net_forward.1} parent=1 // pred_check
      _
    $region15: #{q_net_forward.1} parent=1 // pred_check_branch
      %55 = sbr.rel (0) target = $region17
    $region16: #{q_net_forward.1} parent=1 // pred_region
      %s57 = ssub.s32 192, 192
      %58 = vsyncadd [#allocation5], %s57
      %s60 = sshll.u32 [#allocation6], 4
      %s61 = int_to_ptr.vmem [resolvable:$true] %s60
      %63 = dma.hbm_to_vmem [thread:$0]  %s3, 192, %s61, [#allocation5]
    $region17: #{q_net_forward.1} parent=1 // pred_fallthru
      _
    // Predicated region
    $region18: #{q_net_forward.1} parent=1 // pred_check
      _
    $region19: #{q_net_forward.1} parent=1 // pred_check_branch
      %65 = sbr.rel (0) target = $region21
    $region20: #{q_net_forward.1} parent=1 // pred_region
      %s67 = ssub.s32 24576, 24576
      %68 = vsyncadd [#allocation8], %s67
      %s69 = sshll.u32 [#allocation7], 4
      %s70 = int_to_ptr.vmem [resolvable:$true] %s69
      %75 = dma.hbm_to_vmem [thread:$0]  %s4, 24576, %s70, [#allocation8], 128, 128, 8
    $region21: #{q_net_forward.1} parent=1 // pred_fallthru
      _
    // Predicated region
    $region22: #{q_net_forward.1} parent=1 // pred_check
      _
    $region23: #{q_net_forward.1} parent=1 // pred_check_branch
      %77 = sbr.rel (0) target = $region25
    $region24: #{q_net_forward.1} parent=1 // pred_region
      %s79 = ssub.s32 32, 32
      %80 = vsyncadd [#allocation8], %s79
      %s82 = sshll.u32 [#allocation9], 4
      %s83 = int_to_ptr.vmem [resolvable:$true] %s82
      %85 = dma.hbm_to_vmem [thread:$0]  %s5, 32, %s83, [#allocation8]
    $region25: #{q_net_forward.1} parent=1 // pred_fallthru
      _
    // Predicated region
    $region26: #{q_net_forward.1} parent=1 // pred_check
      _
    $region27: #{q_net_forward.1} parent=1 // pred_check_branch
      %87 = sbr.rel (0) target = $region29
    $region28: #{q_net_forward.1} parent=1 // pred_region
      _
    $region29: #{q_net_forward.1} parent=1 // pred_fallthru
      _
    // Predicated region
    $region30: #{q_net_forward.1} parent=1 // pred_check
      _
    $region31: #{q_net_forward.1} parent=1 // pred_check_branch
      %89 = sbr.rel (0) target = $region33
    $region32: #{q_net_forward.1} parent=1 // pred_region
      %s91 = ssub.s32 16, 16
      %92 = vsyncadd [#allocation11], %s91
      %s94 = sshll.u32 [#allocation10], 4
      %s95 = int_to_ptr.vmem [resolvable:$true] %s94
      %97 = dma.hbm_to_vmem [thread:$0]  %s7, 16, %s95, [#allocation11]
    $region33: #{q_net_forward.1} parent=1 // pred_fallthru
      _
    // Predicated region
    $region34: #{q_net_forward.1} parent=1 // pred_check
      _
    $region35: #{q_net_forward.1} parent=1 // pred_check_branch
      %99 = sbr.rel (0) target = $region37
    $region36: #{q_net_forward.1} parent=1 // pred_region
      %s101 = ssub.s32 64, 64
      %102 = vsyncadd [#allocation11], %s101
      %s104 = sshll.u32 [#allocation12], 4
      %s105 = int_to_ptr.vmem [resolvable:$true] %s104
      %107 = dma.hbm_to_vmem [thread:$0]  %s8, 64, %s105, [#allocation11]
    $region37: #{q_net_forward.1} parent=1 // pred_fallthru
      _
    // Predicated region
    $region38: #{q_net_forward.1} parent=1 // pred_check
      _
    $region39: #{q_net_forward.1} parent=1 // pred_check_branch
      %109 = sbr.rel (0) target = $region41
    $region40: #{q_net_forward.1} parent=1 // pred_region
      %s111 = ssub.s32 256, 256
      %112 = vsyncadd [#allocation14], %s111
      %s113 = sshll.u32 [#allocation13], 4
      %s114 = int_to_ptr.vmem [resolvable:$true] %s113
      %119 = dma.hbm_to_vmem [thread:$0]  %s9, 256, %s114, [#allocation14], 64, 64, 4
    $region41: #{q_net_forward.1} parent=1 // pred_fallthru
      _
    // Predicated region
    $region42: #{q_net_forward.1} parent=1 // pred_check
      _
    $region43: #{q_net_forward.1} parent=1 // pred_check_branch
      %121 = sbr.rel (0) target = $region45
    $region44: #{q_net_forward.1} parent=1 // pred_region
      %s123 = ssub.s32 16, 16
      %124 = vsyncadd [#allocation14], %s123
      %s126 = sshll.u32 [#allocation15], 4
      %s127 = int_to_ptr.vmem [resolvable:$true] %s126
      %129 = dma.hbm_to_vmem [thread:$0]  %s10, 16, %s127, [#allocation14]
    $region45: #{q_net_forward.1} parent=1 // pred_fallthru
      _
    // Predicated region
    $region46: #{q_net_forward.1} parent=1 // pred_check
      _
    $region47: #{q_net_forward.1} parent=1 // pred_check_branch
      %131 = sbr.rel (0) target = $region49
    $region48: #{q_net_forward.1} parent=1 // pred_region
      %s133 = ssub.s32 512, 512
      %134 = vsyncadd [#allocation17], %s133
      %s135 = sshll.u32 [#allocation16], 4
      %s136 = int_to_ptr.vmem [resolvable:$true] %s135
      %141 = dma.hbm_to_vmem [thread:$0]  %s11, 512, %s136, [#allocation17], 64, 64, 4
    $region49: #{q_net_forward.1} parent=1 // pred_fallthru
      _
    // Predicated region
    $region50: #{q_net_forward.1} parent=1 // pred_check
      _
    $region51: #{q_net_forward.1} parent=1 // pred_check_branch
      %143 = sbr.rel (0) target = $region53
    $region52: #{q_net_forward.1} parent=1 // pred_region
      %s145 = ssub.s32 16, 16
      %146 = vsyncadd [#allocation17], %s145
      %s148 = sshll.u32 [#allocation18], 4
      %s149 = int_to_ptr.vmem [resolvable:$true] %s148
      %151 = dma.hbm_to_vmem [thread:$0]  %s12, 16, %s149, [#allocation17]
    $region53: #{q_net_forward.1} parent=1 // pred_fallthru
      _
    // Predicated region
    $region54: #{q_net_forward.1} parent=1 // pred_check
      _
    $region55: #{q_net_forward.1} parent=1 // pred_check_branch
      %153 = sbr.rel (0) target = $region57
    $region56: #{q_net_forward.1} parent=1 // pred_region
      %s155 = ssub.s32 1024, 1024
      %156 = vsyncadd [#allocation20], %s155
      %s157 = sshll.u32 [#allocation19], 4
      %s158 = int_to_ptr.vmem [resolvable:$true] %s157
      %163 = dma.hbm_to_vmem [thread:$0]  %s13, 1024, %s158, [#allocation20], 64, 64, 4
    $region57: #{q_net_forward.1} parent=1 // pred_fallthru
      _
    // Predicated region
    $region58: #{q_net_forward.1} parent=1 // pred_check
      _
    $region59: #{q_net_forward.1} parent=1 // pred_check_branch
      %165 = sbr.rel (0) target = $region61
    $region60: #{q_net_forward.1} parent=1 // pred_region
      %s167 = ssub.s32 16, 16
      %168 = vsyncadd [#allocation20], %s167
      %s170 = sshll.u32 [#allocation21], 4
      %s171 = int_to_ptr.vmem [resolvable:$true] %s170
      %173 = dma.hbm_to_vmem [thread:$0]  %s14, 16, %s171, [#allocation20]
    $region61: #{q_net_forward.1} parent=1 // pred_fallthru
      _
    // Predicated region
    $region62: #{q_net_forward.1} parent=1 // pred_check
      _
    $region63: #{q_net_forward.1} parent=1 // pred_check_branch
      %175 = sbr.rel (0) target = $region65
    $region64: #{q_net_forward.1} parent=1 // pred_region
      %s177 = ssub.s32 1024, 1024
      %178 = vsyncadd [#allocation23], %s177
      %s179 = sshll.u32 [#allocation22], 4
      %s180 = int_to_ptr.vmem [resolvable:$true] %s179
      %185 = dma.hbm_to_vmem [thread:$0]  %s15, 1024, %s180, [#allocation23], 64, 64, 4
    $region65: #{q_net_forward.1} parent=1 // pred_fallthru
      _
    // Predicated region
    $region66: #{q_net_forward.1} parent=1 // pred_check
      _
    $region67: #{q_net_forward.1} parent=1 // pred_check_branch
      %187 = sbr.rel (0) target = $region69
    $region68: #{q_net_forward.1} parent=1 // pred_region
      %s189 = ssub.s32 16, 16
      %190 = vsyncadd [#allocation23], %s189
      %s192 = sshll.u32 [#allocation24], 4
      %s193 = int_to_ptr.vmem [resolvable:$true] %s192
      %195 = dma.hbm_to_vmem [thread:$0]  %s16, 16, %s193, [#allocation23]
    $region69: #{q_net_forward.1} parent=1 // pred_fallthru
      _
    // Predicated region
    $region70: #{q_net_forward.1} parent=1 // pred_check
      _
    $region71: #{q_net_forward.1} parent=1 // pred_check_branch
      %197 = sbr.rel (0) target = $region73
    $region72: #{q_net_forward.1} parent=1 // pred_region
      %198 = dma.done [#allocation3], 128
    $region73: #{q_net_forward.1} parent=1 // pred_fallthru
      _
    // Predicated region
    $region74: #{q_net_forward.1} parent=1 // pred_check
      _
    $region75: #{q_net_forward.1} parent=1 // pred_check_branch
      %200 = sbr.rel (0) target = $region77
    $region76: #{q_net_forward.1} parent=1 // pred_region
      %201 = dma.done [#allocation5], 38400
    $region77: #{q_net_forward.1} parent=1 // pred_fallthru
      _
    // Predicated region
    $region78: #{q_net_forward.1} parent=1 // pred_check
      _
    $region79: #{q_net_forward.1} parent=1 // pred_check_branch
      %203 = sbr.rel (0) target = $region81
    $region80: #{q_net_forward.1} parent=1 // pred_region
      %204 = dma.done [#allocation5], 192
    $region81: #{q_net_forward.1} parent=1 // pred_fallthru
      _
    // Predicated region
    $region82: #{q_net_forward.1} parent=1 // pred_check
      _
    $region83: #{q_net_forward.1} parent=1 // pred_check_branch
      %206 = sbr.rel (0) target = $region85
    $region84: #{q_net_forward.1} parent=1 // pred_region
      %207 = dma.done [#allocation8], 24576
    $region85: #{q_net_forward.1} parent=1 // pred_fallthru
      _
    // Predicated region
    $region86: #{q_net_forward.1} parent=1 // pred_check
      _
    $region87: #{q_net_forward.1} parent=1 // pred_check_branch
      %209 = sbr.rel (0) target = $region89
    $region88: #{q_net_forward.1} parent=1 // pred_region
      %210 = dma.done [#allocation8], 32
    $region89: #{q_net_forward.1} parent=1 // pred_fallthru
      _
    // Predicated region
    $region90: #{q_net_forward.1} parent=1 // pred_check
      _
    $region91: #{q_net_forward.1} parent=1 // pred_check_branch
      %212 = sbr.rel (0) target = $region93
    $region92: #{q_net_forward.1} parent=1 // pred_region
      %213 = dma.done [#allocation11], 16
    $region93: #{q_net_forward.1} parent=1 // pred_fallthru
      _
    // Predicated region
    $region94: #{q_net_forward.1} parent=1 // pred_check
      _
    $region95: #{q_net_forward.1} parent=1 // pred_check_branch
      %215 = sbr.rel (0) target = $region97
    $region96: #{q_net_forward.1} parent=1 // pred_region
      %216 = dma.done [#allocation11], 64
    $region97: #{q_net_forward.1} parent=1 // pred_fallthru
      _
    // Predicated region
    $region98: #{q_net_forward.1} parent=1 // pred_check
      _
    $region99: #{q_net_forward.1} parent=1 // pred_check_branch
      %218 = sbr.rel (0) target = $region101
    $region100: #{q_net_forward.1} parent=1 // pred_region
      %219 = dma.done [#allocation14], 256
    $region101: #{q_net_forward.1} parent=1 // pred_fallthru
      _
    // Predicated region
    $region102: #{q_net_forward.1} parent=1 // pred_check
      _
    $region103: #{q_net_forward.1} parent=1 // pred_check_branch
      %221 = sbr.rel (0) target = $region105
    $region104: #{q_net_forward.1} parent=1 // pred_region
      %222 = dma.done [#allocation14], 16
    $region105: #{q_net_forward.1} parent=1 // pred_fallthru
      _
    // Predicated region
    $region106: #{q_net_forward.1} parent=1 // pred_check
      _
    $region107: #{q_net_forward.1} parent=1 // pred_check_branch
      %224 = sbr.rel (0) target = $region109
    $region108: #{q_net_forward.1} parent=1 // pred_region
      %225 = dma.done [#allocation17], 512
    $region109: #{q_net_forward.1} parent=1 // pred_fallthru
      _
    // Predicated region
    $region110: #{q_net_forward.1} parent=1 // pred_check
      _
    $region111: #{q_net_forward.1} parent=1 // pred_check_branch
      %227 = sbr.rel (0) target = $region113
    $region112: #{q_net_forward.1} parent=1 // pred_region
      %228 = dma.done [#allocation17], 16
    $region113: #{q_net_forward.1} parent=1 // pred_fallthru
      _
    // Predicated region
    $region114: #{q_net_forward.1} parent=1 // pred_check
      _
    $region115: #{q_net_forward.1} parent=1 // pred_check_branch
      %230 = sbr.rel (0) target = $region117
    $region116: #{q_net_forward.1} parent=1 // pred_region
      %231 = dma.done [#allocation20], 1024
    $region117: #{q_net_forward.1} parent=1 // pred_fallthru
      _
    // Predicated region
    $region118: #{q_net_forward.1} parent=1 // pred_check
      _
    $region119: #{q_net_forward.1} parent=1 // pred_check_branch
      %233 = sbr.rel (0) target = $region121
    $region120: #{q_net_forward.1} parent=1 // pred_region
      %234 = dma.done [#allocation20], 16
    $region121: #{q_net_forward.1} parent=1 // pred_fallthru
      _
    // Predicated region
    $region122: #{q_net_forward.1} parent=1 // pred_check
      _
    $region123: #{q_net_forward.1} parent=1 // pred_check_branch
      %236 = sbr.rel (0) target = $region125
    $region124: #{q_net_forward.1} parent=1 // pred_region
      %237 = dma.done [#allocation23], 1024
    $region125: #{q_net_forward.1} parent=1 // pred_fallthru
      _
    // Predicated region
    $region126: #{q_net_forward.1} parent=1 // pred_check
      _
    $region127: #{q_net_forward.1} parent=1 // pred_check_branch
      %239 = sbr.rel (0) target = $region129
    $region128: #{q_net_forward.1} parent=1 // pred_region
      %240 = dma.done [#allocation23], 16
    $region129: #{q_net_forward.1} parent=1 // pred_fallthru
      _
    %v242 = vld [vmem:[#allocation2] sm:$0xff]
    %v244 = vcombine.high %v242, %v242
    %v246 = vunpack.c.l.s4 1983009808
    %v247 = vunpack.c.0.s8 %v246
    %v248 = vlaneseq
    %v249 = vshrl.u32 %v248, 7
    %v250 = vsub.s32 %v247, %v249
    %v251 = vrot.slane %v242, %v250
    %v253 = vunpack.c.l.s4 1983009808
    %v254 = vunpack.c.0.s8 %v253
    %v255 = vlaneseq
    %v256 = vshrl.u32 %v255, 7
    %v257 = vsub.s32 %v254, %v256
    %v258 = vrot.slane %v244, %v257
    %v259 = vcombine.high %v251, %v251
    %v260 = vcombine.high %v258, %v258
    %v265 = vpack.c.bf16 %v251, %v251
    %v266 = vpack.c.bf16 %v259, %v259
    %v267 = vpack.c.bf16 %v258, %v258
    %v268 = vpack.c.bf16 %v260, %v260
    %v269 = vld [vmem:[#allocation4] sm:$0xff]
    %v270 = vld [vmem:[#allocation4 + $0x8] sm:$0xff]
    %v271 = vld [vmem:[#allocation4 + $0x10] sm:$0xff]
    %v272 = vld [vmem:[#allocation4 + $0x18] sm:$0xff]
    %v273 = vld [vmem:[#allocation4 + $0x20] sm:$0xff]
    %v274 = vld [vmem:[#allocation4 + $0x28] sm:$0xff]
    %v275 = vld [vmem:[#allocation4 + $0x30] sm:$0xff]
    %v276 = vld [vmem:[#allocation4 + $0x38] sm:$0xff]
    %v277 = vld [vmem:[#allocation4 + $0x40] sm:$0xff]
    %v278 = vld [vmem:[#allocation4 + $0x48] sm:$0xff]
    %v279 = vld [vmem:[#allocation4 + $0x50] sm:$0xff]
    %v280 = vld [vmem:[#allocation4 + $0x58] sm:$0xff]
    %v281 = vld [vmem:[#allocation4 + $0x60] sm:$0xff]
    %v282 = vld [vmem:[#allocation4 + $0x68] sm:$0xff]
    %v283 = vld [vmem:[#allocation4 + $0x70] sm:$0xff]
    %v284 = vld [vmem:[#allocation4 + $0x78] sm:$0xff]
    %v285 = vld [vmem:[#allocation4 + $0x80] sm:$0xff]
    %v286 = vld [vmem:[#allocation4 + $0x88] sm:$0xff]
    %v287 = vld [vmem:[#allocation4 + $0x90] sm:$0xff]
    %v288 = vld [vmem:[#allocation4 + $0x98] sm:$0xff]
    %v289 = vld [vmem:[#allocation4 + $0xa0] sm:$0xff]
    %v290 = vld [vmem:[#allocation4 + $0xa8] sm:$0xff]
    %v291 = vld [vmem:[#allocation4 + $0xb0] sm:$0xff]
    %v292 = vld [vmem:[#allocation4 + $0xb8] sm:$0xff]
    %v293 = vld [vmem:[#allocation4 + $0xc0] sm:$0xff]
    %v294 = vld [vmem:[#allocation4 + $0xc8] sm:$0xff]
    %v295 = vld [vmem:[#allocation4 + $0xd0] sm:$0xff]
    %v296 = vld [vmem:[#allocation4 + $0xd8] sm:$0xff]
    %v297 = vld [vmem:[#allocation4 + $0xe0] sm:$0xff]
    %v298 = vld [vmem:[#allocation4 + $0xe8] sm:$0xff]
    %v299 = vld [vmem:[#allocation4 + $0xf0] sm:$0xff]
    %v300 = vld [vmem:[#allocation4 + $0xf8] sm:$0xff]
    %v301 = vld [vmem:[#allocation4 + $0x100] sm:$0xff]
    %v302 = vld [vmem:[#allocation4 + $0x108] sm:$0xff]
    %v303 = vld [vmem:[#allocation4 + $0x110] sm:$0xff]
    %v304 = vld [vmem:[#allocation4 + $0x118] sm:$0xff]
    %v305 = vld [vmem:[#allocation4 + $0x120] sm:$0xff]
    %v306 = vld [vmem:[#allocation4 + $0x128] sm:$0xff]
    %v307 = vld [vmem:[#allocation4 + $0x130] sm:$0xff]
    %v308 = vld [vmem:[#allocation4 + $0x138] sm:$0xff]
    %v309 = vld [vmem:[#allocation4 + $0x140] sm:$0xff]
    %v310 = vld [vmem:[#allocation4 + $0x148] sm:$0xff]
    %v311 = vld [vmem:[#allocation4 + $0x150] sm:$0xff]
    %v312 = vld [vmem:[#allocation4 + $0x158] sm:$0xff]
    %v313 = vld [vmem:[#allocation4 + $0x160] sm:$0xff]
    %v314 = vld [vmem:[#allocation4 + $0x168] sm:$0xff]
    %v315 = vld [vmem:[#allocation4 + $0x170] sm:$0xff]
    %v316 = vld [vmem:[#allocation4 + $0x178] sm:$0xff]
    %v317 = vld [vmem:[#allocation4 + $0x180] sm:$0xff]
    %v318 = vld [vmem:[#allocation4 + $0x188] sm:$0xff]
    %v319 = vld [vmem:[#allocation4 + $0x190] sm:$0xff]
    %v320 = vld [vmem:[#allocation4 + $0x198] sm:$0xff]
    %v321 = vld [vmem:[#allocation4 + $0x1a0] sm:$0xff]
    %v322 = vld [vmem:[#allocation4 + $0x1a8] sm:$0xff]
    %v323 = vld [vmem:[#allocation4 + $0x1b0] sm:$0xff]
    %v324 = vld [vmem:[#allocation4 + $0x1b8] sm:$0xff]
    %v325 = vld [vmem:[#allocation4 + $0x1c0] sm:$0xff]
    %v326 = vld [vmem:[#allocation4 + $0x1c8] sm:$0xff]
    %v327 = vld [vmem:[#allocation4 + $0x1d0] sm:$0xff]
    %v328 = vld [vmem:[#allocation4 + $0x1d8] sm:$0xff]
    %v329 = vld [vmem:[#allocation4 + $0x1e0] sm:$0xff]
    %v330 = vld [vmem:[#allocation4 + $0x1e8] sm:$0xff]
    %v331 = vld [vmem:[#allocation4 + $0x1f0] sm:$0xff]
    %v332 = vld [vmem:[#allocation4 + $0x1f8] sm:$0xff]
    %v333 = vld [vmem:[#allocation4 + $0x200] sm:$0xff]
    %v334 = vld [vmem:[#allocation4 + $0x208] sm:$0xff]
    %v335 = vld [vmem:[#allocation4 + $0x210] sm:$0xff]
    %v336 = vld [vmem:[#allocation4 + $0x218] sm:$0xff]
    %v337 = vld [vmem:[#allocation4 + $0x220] sm:$0xff]
    %v338 = vld [vmem:[#allocation4 + $0x228] sm:$0xff]
    %v339 = vld [vmem:[#allocation4 + $0x230] sm:$0xff]
    %v340 = vld [vmem:[#allocation4 + $0x238] sm:$0xff]
    %v341 = vld [vmem:[#allocation4 + $0x240] sm:$0xff]
    %v342 = vld [vmem:[#allocation4 + $0x248] sm:$0xff]
    %v343 = vld [vmem:[#allocation4 + $0x250] sm:$0xff]
    %v344 = vld [vmem:[#allocation4 + $0x258] sm:$0xff]
    %v345 = vld [vmem:[#allocation4 + $0x260] sm:$0xff]
    %v346 = vld [vmem:[#allocation4 + $0x268] sm:$0xff]
    %v347 = vld [vmem:[#allocation4 + $0x270] sm:$0xff]
    %v348 = vld [vmem:[#allocation4 + $0x278] sm:$0xff]
    %v349 = vld [vmem:[#allocation4 + $0x280] sm:$0xff]
    %v350 = vld [vmem:[#allocation4 + $0x288] sm:$0xff]
    %v351 = vld [vmem:[#allocation4 + $0x290] sm:$0xff]
    %v352 = vld [vmem:[#allocation4 + $0x298] sm:$0xff]
    %v353 = vld [vmem:[#allocation4 + $0x2a0] sm:$0xff]
    %v354 = vld [vmem:[#allocation4 + $0x2a8] sm:$0xff]
    %v355 = vld [vmem:[#allocation4 + $0x2b0] sm:$0xff]
    %v356 = vld [vmem:[#allocation4 + $0x2b8] sm:$0xff]
    %v357 = vld [vmem:[#allocation4 + $0x2c0] sm:$0xff]
    %v358 = vld [vmem:[#allocation4 + $0x2c8] sm:$0xff]
    %v359 = vld [vmem:[#allocation4 + $0x2d0] sm:$0xff]
    %v360 = vld [vmem:[#allocation4 + $0x2d8] sm:$0xff]
    %v361 = vld [vmem:[#allocation4 + $0x2e0] sm:$0xff]
    %v362 = vld [vmem:[#allocation4 + $0x2e8] sm:$0xff]
    %v363 = vld [vmem:[#allocation4 + $0x2f0] sm:$0xff]
    %v364 = vld [vmem:[#allocation4 + $0x2f8] sm:$0xff]
    %v365 = vld [vmem:[#allocation4 + $0x300] sm:$0xff]
    %v366 = vld [vmem:[#allocation4 + $0x308] sm:$0xff]
    %v367 = vld [vmem:[#allocation4 + $0x310] sm:$0xff]
    %v368 = vld [vmem:[#allocation4 + $0x318] sm:$0xff]
    %v369 = vld [vmem:[#allocation4 + $0x320] sm:$0xff]
    %v370 = vld [vmem:[#allocation4 + $0x328] sm:$0xff]
    %v371 = vld [vmem:[#allocation4 + $0x330] sm:$0xff]
    %v372 = vld [vmem:[#allocation4 + $0x338] sm:$0xff]
    %v373 = vld [vmem:[#allocation4 + $0x340] sm:$0xff]
    %v374 = vld [vmem:[#allocation4 + $0x348] sm:$0xff]
    %v375 = vld [vmem:[#allocation4 + $0x350] sm:$0xff]
    %v376 = vld [vmem:[#allocation4 + $0x358] sm:$0xff]
    %v377 = vld [vmem:[#allocation4 + $0x360] sm:$0xff]
    %v378 = vld [vmem:[#allocation4 + $0x368] sm:$0xff]
    %v379 = vld [vmem:[#allocation4 + $0x370] sm:$0xff]
    %v380 = vld [vmem:[#allocation4 + $0x378] sm:$0xff]
    %v381 = vld [vmem:[#allocation4 + $0x380] sm:$0xff]
    %v382 = vld [vmem:[#allocation4 + $0x388] sm:$0xff]
    %v383 = vld [vmem:[#allocation4 + $0x390] sm:$0xff]
    %v384 = vld [vmem:[#allocation4 + $0x398] sm:$0xff]
    %v385 = vld [vmem:[#allocation4 + $0x3a0] sm:$0xff]
    %v386 = vld [vmem:[#allocation4 + $0x3a8] sm:$0xff]
    %v387 = vld [vmem:[#allocation4 + $0x3b0] sm:$0xff]
    %v388 = vld [vmem:[#allocation4 + $0x3b8] sm:$0xff]
    %v389 = vld [vmem:[#allocation4 + $0x3c0] sm:$0xff]
    %v390 = vld [vmem:[#allocation4 + $0x3c8] sm:$0xff]
    %v391 = vld [vmem:[#allocation4 + $0x3d0] sm:$0xff]
    %v392 = vld [vmem:[#allocation4 + $0x3d8] sm:$0xff]
    %v393 = vld [vmem:[#allocation4 + $0x3e0] sm:$0xff]
    %v394 = vld [vmem:[#allocation4 + $0x3e8] sm:$0xff]
    %v395 = vld [vmem:[#allocation4 + $0x3f0] sm:$0xff]
    %v396 = vld [vmem:[#allocation4 + $0x3f8] sm:$0xff]
    %v397 = vld [vmem:[#allocation4 + $0x400] sm:$0xff]
    %v398 = vld [vmem:[#allocation4 + $0x408] sm:$0xff]
    %v399 = vld [vmem:[#allocation4 + $0x410] sm:$0xff]
    %v400 = vld [vmem:[#allocation4 + $0x418] sm:$0xff]
    %v401 = vld [vmem:[#allocation4 + $0x420] sm:$0xff]
    %v402 = vld [vmem:[#allocation4 + $0x428] sm:$0xff]
    %v403 = vld [vmem:[#allocation4 + $0x430] sm:$0xff]
    %v404 = vld [vmem:[#allocation4 + $0x438] sm:$0xff]
    %v405 = vld [vmem:[#allocation4 + $0x440] sm:$0xff]
    %v406 = vld [vmem:[#allocation4 + $0x448] sm:$0xff]
    %v407 = vld [vmem:[#allocation4 + $0x450] sm:$0xff]
    %v408 = vld [vmem:[#allocation4 + $0x458] sm:$0xff]
    %v409 = vld [vmem:[#allocation4 + $0x460] sm:$0xff]
    %v410 = vld [vmem:[#allocation4 + $0x468] sm:$0xff]
    %v411 = vld [vmem:[#allocation4 + $0x470] sm:$0xff]
    %v412 = vld [vmem:[#allocation4 + $0x478] sm:$0xff]
    %v413 = vld [vmem:[#allocation4 + $0x480] sm:$0xff]
    %v414 = vld [vmem:[#allocation4 + $0x488] sm:$0xff]
    %v415 = vld [vmem:[#allocation4 + $0x490] sm:$0xff]
    %v416 = vld [vmem:[#allocation4 + $0x498] sm:$0xff]
    %v417 = vld [vmem:[#allocation4 + $0x4a0] sm:$0xff]
    %v418 = vld [vmem:[#allocation4 + $0x4a8] sm:$0xff]
    %v419 = vld [vmem:[#allocation4 + $0x4b0] sm:$0xff]
    %v420 = vld [vmem:[#allocation4 + $0x4b8] sm:$0xff]
    %v421 = vld [vmem:[#allocation4 + $0x4c0] sm:$0xff]
    %v422 = vld [vmem:[#allocation4 + $0x4c8] sm:$0xff]
    %v423 = vld [vmem:[#allocation4 + $0x4d0] sm:$0xff]
    %v424 = vld [vmem:[#allocation4 + $0x4d8] sm:$0xff]
    %v425 = vld [vmem:[#allocation4 + $0x4e0] sm:$0xff]
    %v426 = vld [vmem:[#allocation4 + $0x4e8] sm:$0xff]
    %v427 = vld [vmem:[#allocation4 + $0x4f0] sm:$0xff]
    %v428 = vld [vmem:[#allocation4 + $0x4f8] sm:$0xff]
    %v429 = vld [vmem:[#allocation4 + $0x500] sm:$0xff]
    %v430 = vld [vmem:[#allocation4 + $0x508] sm:$0xff]
    %v431 = vld [vmem:[#allocation4 + $0x510] sm:$0xff]
    %v432 = vld [vmem:[#allocation4 + $0x518] sm:$0xff]
    %v433 = vld [vmem:[#allocation4 + $0x520] sm:$0xff]
    %v434 = vld [vmem:[#allocation4 + $0x528] sm:$0xff]
    %v435 = vld [vmem:[#allocation4 + $0x530] sm:$0xff]
    %v436 = vld [vmem:[#allocation4 + $0x538] sm:$0xff]
    %v437 = vld [vmem:[#allocation4 + $0x540] sm:$0xff]
    %v438 = vld [vmem:[#allocation4 + $0x548] sm:$0xff]
    %v439 = vld [vmem:[#allocation4 + $0x550] sm:$0xff]
    %v440 = vld [vmem:[#allocation4 + $0x558] sm:$0xff]
    %v441 = vld [vmem:[#allocation4 + $0x560] sm:$0xff]
    %v442 = vld [vmem:[#allocation4 + $0x568] sm:$0xff]
    %v443 = vld [vmem:[#allocation4 + $0x570] sm:$0xff]
    %v444 = vld [vmem:[#allocation4 + $0x578] sm:$0xff]
    %v445 = vld [vmem:[#allocation4 + $0x580] sm:$0xff]
    %v446 = vld [vmem:[#allocation4 + $0x588] sm:$0xff]
    %v447 = vld [vmem:[#allocation4 + $0x590] sm:$0xff]
    %v448 = vld [vmem:[#allocation4 + $0x598] sm:$0xff]
    %v449 = vld [vmem:[#allocation4 + $0x5a0] sm:$0xff]
    %v450 = vld [vmem:[#allocation4 + $0x5a8] sm:$0xff]
    %v451 = vld [vmem:[#allocation4 + $0x5b0] sm:$0xff]
    %v452 = vld [vmem:[#allocation4 + $0x5b8] sm:$0xff]
    %v453 = vld [vmem:[#allocation4 + $0x5c0] sm:$0xff]
    %v454 = vld [vmem:[#allocation4 + $0x5c8] sm:$0xff]
    %v455 = vld [vmem:[#allocation4 + $0x5d0] sm:$0xff]
    %v456 = vld [vmem:[#allocation4 + $0x5d8] sm:$0xff]
    %v457 = vld [vmem:[#allocation4 + $0x5e0] sm:$0xff]
    %v458 = vld [vmem:[#allocation4 + $0x5e8] sm:$0xff]
    %v459 = vld [vmem:[#allocation4 + $0x5f0] sm:$0xff]
    %v460 = vld [vmem:[#allocation4 + $0x5f8] sm:$0xff]
    %v461 = vld [vmem:[#allocation4 + $0x600] sm:$0xff]
    %v462 = vld [vmem:[#allocation4 + $0x608] sm:$0xff]
    %v463 = vld [vmem:[#allocation4 + $0x610] sm:$0xff]
    %v464 = vld [vmem:[#allocation4 + $0x618] sm:$0xff]
    %v465 = vld [vmem:[#allocation4 + $0x620] sm:$0xff]
    %v466 = vld [vmem:[#allocation4 + $0x628] sm:$0xff]
    %v467 = vld [vmem:[#allocation4 + $0x630] sm:$0xff]
    %v468 = vld [vmem:[#allocation4 + $0x638] sm:$0xff]
    %v469 = vld [vmem:[#allocation4 + $0x640] sm:$0xff]
    %v470 = vld [vmem:[#allocation4 + $0x648] sm:$0xff]
    %v471 = vld [vmem:[#allocation4 + $0x650] sm:$0xff]
    %v472 = vld [vmem:[#allocation4 + $0x658] sm:$0xff]
    %v473 = vld [vmem:[#allocation4 + $0x660] sm:$0xff]
    %v474 = vld [vmem:[#allocation4 + $0x668] sm:$0xff]
    %v475 = vld [vmem:[#allocation4 + $0x670] sm:$0xff]
    %v476 = vld [vmem:[#allocation4 + $0x678] sm:$0xff]
    %v477 = vld [vmem:[#allocation4 + $0x680] sm:$0xff]
    %v478 = vld [vmem:[#allocation4 + $0x688] sm:$0xff]
    %v479 = vld [vmem:[#allocation4 + $0x690] sm:$0xff]
    %v480 = vld [vmem:[#allocation4 + $0x698] sm:$0xff]
    %v481 = vld [vmem:[#allocation4 + $0x6a0] sm:$0xff]
    %v482 = vld [vmem:[#allocation4 + $0x6a8] sm:$0xff]
    %v483 = vld [vmem:[#allocation4 + $0x6b0] sm:$0xff]
    %v484 = vld [vmem:[#allocation4 + $0x6b8] sm:$0xff]
    %v485 = vld [vmem:[#allocation4 + $0x6c0] sm:$0xff]
    %v486 = vld [vmem:[#allocation4 + $0x6c8] sm:$0xff]
    %v487 = vld [vmem:[#allocation4 + $0x6d0] sm:$0xff]
    %v488 = vld [vmem:[#allocation4 + $0x6d8] sm:$0xff]
    %v489 = vld [vmem:[#allocation4 + $0x6e0] sm:$0xff]
    %v490 = vld [vmem:[#allocation4 + $0x6e8] sm:$0xff]
    %v491 = vld [vmem:[#allocation4 + $0x6f0] sm:$0xff]
    %v492 = vld [vmem:[#allocation4 + $0x6f8] sm:$0xff]
    %v493 = vld [vmem:[#allocation4 + $0x700] sm:$0xff]
    %v494 = vld [vmem:[#allocation4 + $0x708] sm:$0xff]
    %v495 = vld [vmem:[#allocation4 + $0x710] sm:$0xff]
    %v496 = vld [vmem:[#allocation4 + $0x718] sm:$0xff]
    %v497 = vld [vmem:[#allocation4 + $0x720] sm:$0xff]
    %v498 = vld [vmem:[#allocation4 + $0x728] sm:$0xff]
    %v499 = vld [vmem:[#allocation4 + $0x730] sm:$0xff]
    %v500 = vld [vmem:[#allocation4 + $0x738] sm:$0xff]
    %v501 = vld [vmem:[#allocation4 + $0x740] sm:$0xff]
    %v502 = vld [vmem:[#allocation4 + $0x748] sm:$0xff]
    %v503 = vld [vmem:[#allocation4 + $0x750] sm:$0xff]
    %v504 = vld [vmem:[#allocation4 + $0x758] sm:$0xff]
    %v505 = vld [vmem:[#allocation4 + $0x760] sm:$0xff]
    %v506 = vld [vmem:[#allocation4 + $0x768] sm:$0xff]
    %v507 = vld [vmem:[#allocation4 + $0x770] sm:$0xff]
    %v508 = vld [vmem:[#allocation4 + $0x778] sm:$0xff]
    %v509 = vld [vmem:[#allocation4 + $0x780] sm:$0xff]
    %v510 = vld [vmem:[#allocation4 + $0x788] sm:$0xff]
    %v511 = vld [vmem:[#allocation4 + $0x790] sm:$0xff]
    %v512 = vld [vmem:[#allocation4 + $0x798] sm:$0xff]
    %v513 = vld [vmem:[#allocation4 + $0x7a0] sm:$0xff]
    %v514 = vld [vmem:[#allocation4 + $0x7a8] sm:$0xff]
    %v515 = vld [vmem:[#allocation4 + $0x7b0] sm:$0xff]
    %v516 = vld [vmem:[#allocation4 + $0x7b8] sm:$0xff]
    %v517 = vld [vmem:[#allocation4 + $0x7c0] sm:$0xff]
    %v518 = vld [vmem:[#allocation4 + $0x7c8] sm:$0xff]
    %v519 = vld [vmem:[#allocation4 + $0x7d0] sm:$0xff]
    %v520 = vld [vmem:[#allocation4 + $0x7d8] sm:$0xff]
    %v521 = vld [vmem:[#allocation4 + $0x7e0] sm:$0xff]
    %v522 = vld [vmem:[#allocation4 + $0x7e8] sm:$0xff]
    %v523 = vld [vmem:[#allocation4 + $0x7f0] sm:$0xff]
    %v524 = vld [vmem:[#allocation4 + $0x7f8] sm:$0xff]
    %v525 = vld [vmem:[#allocation4 + $0x800] sm:$0xff]
    %v526 = vld [vmem:[#allocation4 + $0x808] sm:$0xff]
    %v527 = vld [vmem:[#allocation4 + $0x810] sm:$0xff]
    %v528 = vld [vmem:[#allocation4 + $0x818] sm:$0xff]
    %v529 = vld [vmem:[#allocation4 + $0x820] sm:$0xff]
    %v530 = vld [vmem:[#allocation4 + $0x828] sm:$0xff]
    %v531 = vld [vmem:[#allocation4 + $0x830] sm:$0xff]
    %v532 = vld [vmem:[#allocation4 + $0x838] sm:$0xff]
    %v533 = vld [vmem:[#allocation4 + $0x840] sm:$0xff]
    %v534 = vld [vmem:[#allocation4 + $0x848] sm:$0xff]
    %v535 = vld [vmem:[#allocation4 + $0x850] sm:$0xff]
    %v536 = vld [vmem:[#allocation4 + $0x858] sm:$0xff]
    %v537 = vld [vmem:[#allocation4 + $0x860] sm:$0xff]
    %v538 = vld [vmem:[#allocation4 + $0x868] sm:$0xff]
    %v539 = vld [vmem:[#allocation4 + $0x870] sm:$0xff]
    %v540 = vld [vmem:[#allocation4 + $0x878] sm:$0xff]
    %v541 = vld [vmem:[#allocation4 + $0x880] sm:$0xff]
    %v542 = vld [vmem:[#allocation4 + $0x888] sm:$0xff]
    %v543 = vld [vmem:[#allocation4 + $0x890] sm:$0xff]
    %v544 = vld [vmem:[#allocation4 + $0x898] sm:$0xff]
    %v545 = vld [vmem:[#allocation4 + $0x8a0] sm:$0xff]
    %v546 = vld [vmem:[#allocation4 + $0x8a8] sm:$0xff]
    %v547 = vld [vmem:[#allocation4 + $0x8b0] sm:$0xff]
    %v548 = vld [vmem:[#allocation4 + $0x8b8] sm:$0xff]
    %v549 = vld [vmem:[#allocation4 + $0x8c0] sm:$0xff]
    %v550 = vld [vmem:[#allocation4 + $0x8c8] sm:$0xff]
    %v551 = vld [vmem:[#allocation4 + $0x8d0] sm:$0xff]
    %v552 = vld [vmem:[#allocation4 + $0x8d8] sm:$0xff]
    %v553 = vld [vmem:[#allocation4 + $0x8e0] sm:$0xff]
    %v554 = vld [vmem:[#allocation4 + $0x8e8] sm:$0xff]
    %v555 = vld [vmem:[#allocation4 + $0x8f0] sm:$0xff]
    %v556 = vld [vmem:[#allocation4 + $0x8f8] sm:$0xff]
    %v557 = vld [vmem:[#allocation4 + $0x900] sm:$0xff]
    %v558 = vld [vmem:[#allocation4 + $0x908] sm:$0xff]
    %v559 = vld [vmem:[#allocation4 + $0x910] sm:$0xff]
    %v560 = vld [vmem:[#allocation4 + $0x918] sm:$0xff]
    %v561 = vld [vmem:[#allocation4 + $0x920] sm:$0xff]
    %v562 = vld [vmem:[#allocation4 + $0x928] sm:$0xff]
    %v563 = vld [vmem:[#allocation4 + $0x930] sm:$0xff]
    %v564 = vld [vmem:[#allocation4 + $0x938] sm:$0xff]
    %v565 = vld [vmem:[#allocation4 + $0x940] sm:$0xff]
    %v566 = vld [vmem:[#allocation4 + $0x948] sm:$0xff]
    %v567 = vld [vmem:[#allocation4 + $0x950] sm:$0xff]
    %v568 = vld [vmem:[#allocation4 + $0x958] sm:$0xff]
    %v569 = vld [vmem:[#allocation6] sm:$0xff]
    %v570 = vld [vmem:[#allocation6 + $0x8] sm:$0xf]
    %v573 = vlaneseq
    %v574 = vshrl.u32 %v573, 7
    %v575 = vsub.s32 0, %v574
    %v576 = vrot.slane %v569, %v575
    %v577 = vlaneseq
    %v578 = vshrl.u32 %v577, 7
    %v579 = vsub.s32 1, %v578
    %v580 = vrot.slane %v569, %v579
    %v581 = vlaneseq
    %v582 = vshrl.u32 %v581, 7
    %v583 = vsub.s32 2, %v582
    %v584 = vrot.slane %v569, %v583
    %v585 = vlaneseq
    %v586 = vshrl.u32 %v585, 7
    %v587 = vsub.s32 3, %v586
    %v588 = vrot.slane %v569, %v587
    %v589 = vlaneseq
    %v590 = vshrl.u32 %v589, 7
    %v591 = vsub.s32 4, %v590
    %v592 = vrot.slane %v569, %v591
    %v593 = vlaneseq
    %v594 = vshrl.u32 %v593, 7
    %v595 = vsub.s32 5, %v594
    %v596 = vrot.slane %v569, %v595
    %v597 = vlaneseq
    %v598 = vshrl.u32 %v597, 7
    %v599 = vsub.s32 6, %v598
    %v600 = vrot.slane %v569, %v599
    %v601 = vlaneseq
    %v602 = vshrl.u32 %v601, 7
    %v603 = vsub.s32 7, %v602
    %v604 = vrot.slane %v569, %v603
    %v605 = vlaneseq
    %v606 = vshrl.u32 %v605, 7
    %v607 = vsub.s32 0, %v606
    %v608 = vrot.slane %v570, %v607
    %v609 = vlaneseq
    %v610 = vshrl.u32 %v609, 7
    %v611 = vsub.s32 1, %v610
    %v612 = vrot.slane %v570, %v611
    %v613 = vlaneseq
    %v614 = vshrl.u32 %v613, 7
    %v615 = vsub.s32 2, %v614
    %v616 = vrot.slane %v570, %v615
    %v617 = vlaneseq
    %v618 = vshrl.u32 %v617, 7
    %v619 = vsub.s32 3, %v618
    %v620 = vrot.slane %v570, %v619
    %v933 = vunpack.c.l.b16 %v269
    %v934 = vunpack.c.h.b16 %v269
    %v935 = vunpack.c.l.b16 %v270
    %v936 = vunpack.c.h.b16 %v270
    %v937 = vunpack.c.l.b16 %v271
    %v938 = vunpack.c.h.b16 %v271
    %v939 = vunpack.c.l.b16 %v272
    %v940 = vunpack.c.h.b16 %v272
    %v941 = vunpack.c.l.b16 %v273
    %v942 = vunpack.c.h.b16 %v273
    %v943 = vunpack.c.l.b16 %v274
    %v944 = vunpack.c.h.b16 %v274
    %v945 = vunpack.c.l.b16 %v275
    %v946 = vunpack.c.h.b16 %v275
    %v947 = vunpack.c.l.b16 %v276
    %v948 = vunpack.c.h.b16 %v276
    %v949 = vunpack.c.l.b16 %v277
    %v950 = vunpack.c.h.b16 %v277
    %v951 = vunpack.c.l.b16 %v278
    %v952 = vunpack.c.h.b16 %v278
    %v953 = vunpack.c.l.b16 %v279
    %v954 = vunpack.c.h.b16 %v279
    %v955 = vunpack.c.l.b16 %v280
    %v956 = vunpack.c.h.b16 %v280
    %v957 = vunpack.c.l.b16 %v281
    %v958 = vunpack.c.h.b16 %v281
    %v959 = vunpack.c.l.b16 %v282
    %v960 = vunpack.c.h.b16 %v282
    %v961 = vunpack.c.l.b16 %v283
    %v962 = vunpack.c.h.b16 %v283
    %v963 = vunpack.c.l.b16 %v284
    %v964 = vunpack.c.h.b16 %v284
    %v965 = vunpack.c.l.b16 %v285
    %v966 = vunpack.c.h.b16 %v285
    %v967 = vunpack.c.l.b16 %v286
    %v968 = vunpack.c.h.b16 %v286
    %v969 = vunpack.c.l.b16 %v287
    %v970 = vunpack.c.h.b16 %v287
    %v971 = vunpack.c.l.b16 %v288
    %v972 = vunpack.c.h.b16 %v288
    %v973 = vunpack.c.l.b16 %v289
    %v974 = vunpack.c.h.b16 %v289
    %v975 = vunpack.c.l.b16 %v290
    %v976 = vunpack.c.h.b16 %v290
    %v977 = vunpack.c.l.b16 %v291
    %v978 = vunpack.c.h.b16 %v291
    %v979 = vunpack.c.l.b16 %v292
    %v980 = vunpack.c.h.b16 %v292
    %v981 = vunpack.c.l.b16 %v293
    %v982 = vunpack.c.h.b16 %v293
    %v983 = vunpack.c.l.b16 %v294
    %v984 = vunpack.c.h.b16 %v294
    %v985 = vunpack.c.l.b16 %v295
    %v986 = vunpack.c.h.b16 %v295
    %v987 = vunpack.c.l.b16 %v296
    %v988 = vunpack.c.h.b16 %v296
    %v989 = vunpack.c.l.b16 %v297
    %v990 = vunpack.c.h.b16 %v297
    %v991 = vunpack.c.l.b16 %v298
    %v992 = vunpack.c.h.b16 %v298
    %v993 = vunpack.c.l.b16 %v299
    %v994 = vunpack.c.h.b16 %v299
    %v995 = vunpack.c.l.b16 %v300
    %v996 = vunpack.c.h.b16 %v300
    %v997 = vunpack.c.l.b16 %v301
    %v998 = vunpack.c.h.b16 %v301
    %v999 = vunpack.c.l.b16 %v302
    %v1000 = vunpack.c.h.b16 %v302
    %v1001 = vunpack.c.l.b16 %v303
    %v1002 = vunpack.c.h.b16 %v303
    %v1003 = vunpack.c.l.b16 %v304
    %v1004 = vunpack.c.h.b16 %v304
    %v1005 = vunpack.c.l.b16 %v305
    %v1006 = vunpack.c.h.b16 %v305
    %v1007 = vunpack.c.l.b16 %v306
    %v1008 = vunpack.c.h.b16 %v306
    %v1009 = vunpack.c.l.b16 %v307
    %v1010 = vunpack.c.h.b16 %v307
    %v1011 = vunpack.c.l.b16 %v308
    %v1012 = vunpack.c.h.b16 %v308
    %v1013 = vunpack.c.l.b16 %v309
    %v1014 = vunpack.c.h.b16 %v309
    %v1015 = vunpack.c.l.b16 %v310
    %v1016 = vunpack.c.h.b16 %v310
    %v1017 = vunpack.c.l.b16 %v311
    %v1018 = vunpack.c.h.b16 %v311
    %v1019 = vunpack.c.l.b16 %v312
    %v1020 = vunpack.c.h.b16 %v312
    %v1021 = vunpack.c.l.b16 %v313
    %v1022 = vunpack.c.h.b16 %v313
    %v1023 = vunpack.c.l.b16 %v314
    %v1024 = vunpack.c.h.b16 %v314
    %v1025 = vunpack.c.l.b16 %v315
    %v1026 = vunpack.c.h.b16 %v315
    %v1027 = vunpack.c.l.b16 %v316
    %v1028 = vunpack.c.h.b16 %v316
    %v1029 = vunpack.c.l.b16 %v317
    %v1030 = vunpack.c.h.b16 %v317
    %v1031 = vunpack.c.l.b16 %v318
    %v1032 = vunpack.c.h.b16 %v318
    %v1033 = vunpack.c.l.b16 %v319
    %v1034 = vunpack.c.h.b16 %v319
    %v1035 = vunpack.c.l.b16 %v320
    %v1036 = vunpack.c.h.b16 %v320
    %v1037 = vunpack.c.l.b16 %v321
    %v1038 = vunpack.c.h.b16 %v321
    %v1039 = vunpack.c.l.b16 %v322
    %v1040 = vunpack.c.h.b16 %v322
    %v1041 = vunpack.c.l.b16 %v323
    %v1042 = vunpack.c.h.b16 %v323
    %v1043 = vunpack.c.l.b16 %v324
    %v1044 = vunpack.c.h.b16 %v324
    %v1045 = vunpack.c.l.b16 %v325
    %v1046 = vunpack.c.h.b16 %v325
    %v1047 = vunpack.c.l.b16 %v326
    %v1048 = vunpack.c.h.b16 %v326
    %v1049 = vunpack.c.l.b16 %v327
    %v1050 = vunpack.c.h.b16 %v327
    %v1051 = vunpack.c.l.b16 %v328
    %v1052 = vunpack.c.h.b16 %v328
    %v1053 = vunpack.c.l.b16 %v329
    %v1054 = vunpack.c.h.b16 %v329
    %v1055 = vunpack.c.l.b16 %v330
    %v1056 = vunpack.c.h.b16 %v330
    %v1057 = vunpack.c.l.b16 %v331
    %v1058 = vunpack.c.h.b16 %v331
    %v1059 = vunpack.c.l.b16 %v332
    %v1060 = vunpack.c.h.b16 %v332
    %v1061 = vunpack.c.l.b16 %v333
    %v1062 = vunpack.c.h.b16 %v333
    %v1063 = vunpack.c.l.b16 %v334
    %v1064 = vunpack.c.h.b16 %v334
    %v1065 = vunpack.c.l.b16 %v335
    %v1066 = vunpack.c.h.b16 %v335
    %v1067 = vunpack.c.l.b16 %v336
    %v1068 = vunpack.c.h.b16 %v336
    %v1069 = vunpack.c.l.b16 %v337
    %v1070 = vunpack.c.h.b16 %v337
    %v1071 = vunpack.c.l.b16 %v338
    %v1072 = vunpack.c.h.b16 %v338
    %v1073 = vunpack.c.l.b16 %v339
    %v1074 = vunpack.c.h.b16 %v339
    %v1075 = vunpack.c.l.b16 %v340
    %v1076 = vunpack.c.h.b16 %v340
    %v1077 = vunpack.c.l.b16 %v341
    %v1078 = vunpack.c.h.b16 %v341
    %v1079 = vunpack.c.l.b16 %v342
    %v1080 = vunpack.c.h.b16 %v342
    %v1081 = vunpack.c.l.b16 %v343
    %v1082 = vunpack.c.h.b16 %v343
    %v1083 = vunpack.c.l.b16 %v344
    %v1084 = vunpack.c.h.b16 %v344
    %v1085 = vunpack.c.l.b16 %v345
    %v1086 = vunpack.c.h.b16 %v345
    %v1087 = vunpack.c.l.b16 %v346
    %v1088 = vunpack.c.h.b16 %v346
    %v1089 = vunpack.c.l.b16 %v347
    %v1090 = vunpack.c.h.b16 %v347
    %v1091 = vunpack.c.l.b16 %v348
    %v1092 = vunpack.c.h.b16 %v348
    %v1093 = vunpack.c.l.b16 %v349
    %v1094 = vunpack.c.h.b16 %v349
    %v1095 = vunpack.c.l.b16 %v350
    %v1096 = vunpack.c.h.b16 %v350
    %v1097 = vunpack.c.l.b16 %v351
    %v1098 = vunpack.c.h.b16 %v351
    %v1099 = vunpack.c.l.b16 %v352
    %v1100 = vunpack.c.h.b16 %v352
    %v1101 = vunpack.c.l.b16 %v353
    %v1102 = vunpack.c.h.b16 %v353
    %v1103 = vunpack.c.l.b16 %v354
    %v1104 = vunpack.c.h.b16 %v354
    %v1105 = vunpack.c.l.b16 %v355
    %v1106 = vunpack.c.h.b16 %v355
    %v1107 = vunpack.c.l.b16 %v356
    %v1108 = vunpack.c.h.b16 %v356
    %v1109 = vunpack.c.l.b16 %v357
    %v1110 = vunpack.c.h.b16 %v357
    %v1111 = vunpack.c.l.b16 %v358
    %v1112 = vunpack.c.h.b16 %v358
    %v1113 = vunpack.c.l.b16 %v359
    %v1114 = vunpack.c.h.b16 %v359
    %v1115 = vunpack.c.l.b16 %v360
    %v1116 = vunpack.c.h.b16 %v360
    %v1117 = vunpack.c.l.b16 %v361
    %v1118 = vunpack.c.h.b16 %v361
    %v1119 = vunpack.c.l.b16 %v362
    %v1120 = vunpack.c.h.b16 %v362
    %v1121 = vunpack.c.l.b16 %v363
    %v1122 = vunpack.c.h.b16 %v363
    %v1123 = vunpack.c.l.b16 %v364
    %v1124 = vunpack.c.h.b16 %v364
    %v1125 = vunpack.c.l.b16 %v365
    %v1126 = vunpack.c.h.b16 %v365
    %v1127 = vunpack.c.l.b16 %v366
    %v1128 = vunpack.c.h.b16 %v366
    %v1129 = vunpack.c.l.b16 %v367
    %v1130 = vunpack.c.h.b16 %v367
    %v1131 = vunpack.c.l.b16 %v368
    %v1132 = vunpack.c.h.b16 %v368
    %v1133 = vunpack.c.l.b16 %v369
    %v1134 = vunpack.c.h.b16 %v369
    %v1135 = vunpack.c.l.b16 %v370
    %v1136 = vunpack.c.h.b16 %v370
    %v1137 = vunpack.c.l.b16 %v371
    %v1138 = vunpack.c.h.b16 %v371
    %v1139 = vunpack.c.l.b16 %v372
    %v1140 = vunpack.c.h.b16 %v372
    %v1141 = vunpack.c.l.b16 %v373
    %v1142 = vunpack.c.h.b16 %v373
    %v1143 = vunpack.c.l.b16 %v374
    %v1144 = vunpack.c.h.b16 %v374
    %v1145 = vunpack.c.l.b16 %v375
    %v1146 = vunpack.c.h.b16 %v375
    %v1147 = vunpack.c.l.b16 %v376
    %v1148 = vunpack.c.h.b16 %v376
    %v1149 = vunpack.c.l.b16 %v377
    %v1150 = vunpack.c.h.b16 %v377
    %v1151 = vunpack.c.l.b16 %v378
    %v1152 = vunpack.c.h.b16 %v378
    %v1153 = vunpack.c.l.b16 %v379
    %v1154 = vunpack.c.h.b16 %v379
    %v1155 = vunpack.c.l.b16 %v380
    %v1156 = vunpack.c.h.b16 %v380
    %v1157 = vunpack.c.l.b16 %v381
    %v1158 = vunpack.c.h.b16 %v381
    %v1159 = vunpack.c.l.b16 %v382
    %v1160 = vunpack.c.h.b16 %v382
    %v1161 = vunpack.c.l.b16 %v383
    %v1162 = vunpack.c.h.b16 %v383
    %v1163 = vunpack.c.l.b16 %v384
    %v1164 = vunpack.c.h.b16 %v384
    %v1165 = vunpack.c.l.b16 %v385
    %v1166 = vunpack.c.h.b16 %v385
    %v1167 = vunpack.c.l.b16 %v386
    %v1168 = vunpack.c.h.b16 %v386
    %v1169 = vunpack.c.l.b16 %v387
    %v1170 = vunpack.c.h.b16 %v387
    %v1171 = vunpack.c.l.b16 %v388
    %v1172 = vunpack.c.h.b16 %v388
    %v1173 = vunpack.c.l.b16 %v389
    %v1174 = vunpack.c.h.b16 %v389
    %v1175 = vunpack.c.l.b16 %v390
    %v1176 = vunpack.c.h.b16 %v390
    %v1177 = vunpack.c.l.b16 %v391
    %v1178 = vunpack.c.h.b16 %v391
    %v1179 = vunpack.c.l.b16 %v392
    %v1180 = vunpack.c.h.b16 %v392
    %v1181 = vunpack.c.l.b16 %v393
    %v1182 = vunpack.c.h.b16 %v393
    %v1183 = vunpack.c.l.b16 %v394
    %v1184 = vunpack.c.h.b16 %v394
    %v1185 = vunpack.c.l.b16 %v395
    %v1186 = vunpack.c.h.b16 %v395
    %v1187 = vunpack.c.l.b16 %v396
    %v1188 = vunpack.c.h.b16 %v396
    %v1189 = vunpack.c.l.b16 %v397
    %v1190 = vunpack.c.h.b16 %v397
    %v1191 = vunpack.c.l.b16 %v398
    %v1192 = vunpack.c.h.b16 %v398
    %v1193 = vunpack.c.l.b16 %v399
    %v1194 = vunpack.c.h.b16 %v399
    %v1195 = vunpack.c.l.b16 %v400
    %v1196 = vunpack.c.h.b16 %v400
    %v1197 = vunpack.c.l.b16 %v401
    %v1198 = vunpack.c.h.b16 %v401
    %v1199 = vunpack.c.l.b16 %v402
    %v1200 = vunpack.c.h.b16 %v402
    %v1201 = vunpack.c.l.b16 %v403
    %v1202 = vunpack.c.h.b16 %v403
    %v1203 = vunpack.c.l.b16 %v404
    %v1204 = vunpack.c.h.b16 %v404
    %v1205 = vunpack.c.l.b16 %v405
    %v1206 = vunpack.c.h.b16 %v405
    %v1207 = vunpack.c.l.b16 %v406
    %v1208 = vunpack.c.h.b16 %v406
    %v1209 = vunpack.c.l.b16 %v407
    %v1210 = vunpack.c.h.b16 %v407
    %v1211 = vunpack.c.l.b16 %v408
    %v1212 = vunpack.c.h.b16 %v408
    %v1213 = vunpack.c.l.b16 %v409
    %v1214 = vunpack.c.h.b16 %v409
    %v1215 = vunpack.c.l.b16 %v410
    %v1216 = vunpack.c.h.b16 %v410
    %v1217 = vunpack.c.l.b16 %v411
    %v1218 = vunpack.c.h.b16 %v411
    %v1219 = vunpack.c.l.b16 %v412
    %v1220 = vunpack.c.h.b16 %v412
    %v1221 = vunpack.c.l.b16 %v413
    %v1222 = vunpack.c.h.b16 %v413
    %v1223 = vunpack.c.l.b16 %v414
    %v1224 = vunpack.c.h.b16 %v414
    %v1225 = vunpack.c.l.b16 %v415
    %v1226 = vunpack.c.h.b16 %v415
    %v1227 = vunpack.c.l.b16 %v416
    %v1228 = vunpack.c.h.b16 %v416
    %v1229 = vunpack.c.l.b16 %v417
    %v1230 = vunpack.c.h.b16 %v417
    %v1231 = vunpack.c.l.b16 %v418
    %v1232 = vunpack.c.h.b16 %v418
    %v1233 = vunpack.c.l.b16 %v419
    %v1234 = vunpack.c.h.b16 %v419
    %v1235 = vunpack.c.l.b16 %v420
    %v1236 = vunpack.c.h.b16 %v420
    %v1237 = vunpack.c.l.b16 %v421
    %v1238 = vunpack.c.h.b16 %v421
    %v1239 = vunpack.c.l.b16 %v422
    %v1240 = vunpack.c.h.b16 %v422
    %v1241 = vunpack.c.l.b16 %v423
    %v1242 = vunpack.c.h.b16 %v423
    %v1243 = vunpack.c.l.b16 %v424
    %v1244 = vunpack.c.h.b16 %v424
    %v1245 = vunpack.c.l.b16 %v425
    %v1246 = vunpack.c.h.b16 %v425
    %v1247 = vunpack.c.l.b16 %v426
    %v1248 = vunpack.c.h.b16 %v426
    %v1249 = vunpack.c.l.b16 %v427
    %v1250 = vunpack.c.h.b16 %v427
    %v1251 = vunpack.c.l.b16 %v428
    %v1252 = vunpack.c.h.b16 %v428
    %v1253 = vunpack.c.l.b16 %v429
    %v1254 = vunpack.c.h.b16 %v429
    %v1255 = vunpack.c.l.b16 %v430
    %v1256 = vunpack.c.h.b16 %v430
    %v1257 = vunpack.c.l.b16 %v431
    %v1258 = vunpack.c.h.b16 %v431
    %v1259 = vunpack.c.l.b16 %v432
    %v1260 = vunpack.c.h.b16 %v432
    %v1261 = vunpack.c.l.b16 %v433
    %v1262 = vunpack.c.h.b16 %v433
    %v1263 = vunpack.c.l.b16 %v434
    %v1264 = vunpack.c.h.b16 %v434
    %v1265 = vunpack.c.l.b16 %v435
    %v1266 = vunpack.c.h.b16 %v435
    %v1267 = vunpack.c.l.b16 %v436
    %v1268 = vunpack.c.h.b16 %v436
    %v1269 = vunpack.c.l.b16 %v437
    %v1270 = vunpack.c.h.b16 %v437
    %v1271 = vunpack.c.l.b16 %v438
    %v1272 = vunpack.c.h.b16 %v438
    %v1273 = vunpack.c.l.b16 %v439
    %v1274 = vunpack.c.h.b16 %v439
    %v1275 = vunpack.c.l.b16 %v440
    %v1276 = vunpack.c.h.b16 %v440
    %v1277 = vunpack.c.l.b16 %v441
    %v1278 = vunpack.c.h.b16 %v441
    %v1279 = vunpack.c.l.b16 %v442
    %v1280 = vunpack.c.h.b16 %v442
    %v1281 = vunpack.c.l.b16 %v443
    %v1282 = vunpack.c.h.b16 %v443
    %v1283 = vunpack.c.l.b16 %v444
    %v1284 = vunpack.c.h.b16 %v444
    %v1285 = vunpack.c.l.b16 %v445
    %v1286 = vunpack.c.h.b16 %v445
    %v1287 = vunpack.c.l.b16 %v446
    %v1288 = vunpack.c.h.b16 %v446
    %v1289 = vunpack.c.l.b16 %v447
    %v1290 = vunpack.c.h.b16 %v447
    %v1291 = vunpack.c.l.b16 %v448
    %v1292 = vunpack.c.h.b16 %v448
    %v1293 = vunpack.c.l.b16 %v449
    %v1294 = vunpack.c.h.b16 %v449
    %v1295 = vunpack.c.l.b16 %v450
    %v1296 = vunpack.c.h.b16 %v450
    %v1297 = vunpack.c.l.b16 %v451
    %v1298 = vunpack.c.h.b16 %v451
    %v1299 = vunpack.c.l.b16 %v452
    %v1300 = vunpack.c.h.b16 %v452
    %v1301 = vunpack.c.l.b16 %v453
    %v1302 = vunpack.c.h.b16 %v453
    %v1303 = vunpack.c.l.b16 %v454
    %v1304 = vunpack.c.h.b16 %v454
    %v1305 = vunpack.c.l.b16 %v455
    %v1306 = vunpack.c.h.b16 %v455
    %v1307 = vunpack.c.l.b16 %v456
    %v1308 = vunpack.c.h.b16 %v456
    %v1309 = vunpack.c.l.b16 %v457
    %v1310 = vunpack.c.h.b16 %v457
    %v1311 = vunpack.c.l.b16 %v458
    %v1312 = vunpack.c.h.b16 %v458
    %v1313 = vunpack.c.l.b16 %v459
    %v1314 = vunpack.c.h.b16 %v459
    %v1315 = vunpack.c.l.b16 %v460
    %v1316 = vunpack.c.h.b16 %v460
    %v1317 = vunpack.c.l.b16 %v461
    %v1318 = vunpack.c.h.b16 %v461
    %v1319 = vunpack.c.l.b16 %v462
    %v1320 = vunpack.c.h.b16 %v462
    %v1321 = vunpack.c.l.b16 %v463
    %v1322 = vunpack.c.h.b16 %v463
    %v1323 = vunpack.c.l.b16 %v464
    %v1324 = vunpack.c.h.b16 %v464
    %v1325 = vunpack.c.l.b16 %v465
    %v1326 = vunpack.c.h.b16 %v465
    %v1327 = vunpack.c.l.b16 %v466
    %v1328 = vunpack.c.h.b16 %v466
    %v1329 = vunpack.c.l.b16 %v467
    %v1330 = vunpack.c.h.b16 %v467
    %v1331 = vunpack.c.l.b16 %v468
    %v1332 = vunpack.c.h.b16 %v468
    %v1333 = vunpack.c.l.b16 %v469
    %v1334 = vunpack.c.h.b16 %v469
    %v1335 = vunpack.c.l.b16 %v470
    %v1336 = vunpack.c.h.b16 %v470
    %v1337 = vunpack.c.l.b16 %v471
    %v1338 = vunpack.c.h.b16 %v471
    %v1339 = vunpack.c.l.b16 %v472
    %v1340 = vunpack.c.h.b16 %v472
    %v1341 = vunpack.c.l.b16 %v473
    %v1342 = vunpack.c.h.b16 %v473
    %v1343 = vunpack.c.l.b16 %v474
    %v1344 = vunpack.c.h.b16 %v474
    %v1345 = vunpack.c.l.b16 %v475
    %v1346 = vunpack.c.h.b16 %v475
    %v1347 = vunpack.c.l.b16 %v476
    %v1348 = vunpack.c.h.b16 %v476
    %v1349 = vunpack.c.l.b16 %v477
    %v1350 = vunpack.c.h.b16 %v477
    %v1351 = vunpack.c.l.b16 %v478
    %v1352 = vunpack.c.h.b16 %v478
    %v1353 = vunpack.c.l.b16 %v479
    %v1354 = vunpack.c.h.b16 %v479
    %v1355 = vunpack.c.l.b16 %v480
    %v1356 = vunpack.c.h.b16 %v480
    %v1357 = vunpack.c.l.b16 %v481
    %v1358 = vunpack.c.h.b16 %v481
    %v1359 = vunpack.c.l.b16 %v482
    %v1360 = vunpack.c.h.b16 %v482
    %v1361 = vunpack.c.l.b16 %v483
    %v1362 = vunpack.c.h.b16 %v483
    %v1363 = vunpack.c.l.b16 %v484
    %v1364 = vunpack.c.h.b16 %v484
    %v1365 = vunpack.c.l.b16 %v485
    %v1366 = vunpack.c.h.b16 %v485
    %v1367 = vunpack.c.l.b16 %v486
    %v1368 = vunpack.c.h.b16 %v486
    %v1369 = vunpack.c.l.b16 %v487
    %v1370 = vunpack.c.h.b16 %v487
    %v1371 = vunpack.c.l.b16 %v488
    %v1372 = vunpack.c.h.b16 %v488
    %v1373 = vunpack.c.l.b16 %v489
    %v1374 = vunpack.c.h.b16 %v489
    %v1375 = vunpack.c.l.b16 %v490
    %v1376 = vunpack.c.h.b16 %v490
    %v1377 = vunpack.c.l.b16 %v491
    %v1378 = vunpack.c.h.b16 %v491
    %v1379 = vunpack.c.l.b16 %v492
    %v1380 = vunpack.c.h.b16 %v492
    %v1381 = vunpack.c.l.b16 %v493
    %v1382 = vunpack.c.h.b16 %v493
    %v1383 = vunpack.c.l.b16 %v494
    %v1384 = vunpack.c.h.b16 %v494
    %v1385 = vunpack.c.l.b16 %v495
    %v1386 = vunpack.c.h.b16 %v495
    %v1387 = vunpack.c.l.b16 %v496
    %v1388 = vunpack.c.h.b16 %v496
    %v1389 = vunpack.c.l.b16 %v497
    %v1390 = vunpack.c.h.b16 %v497
    %v1391 = vunpack.c.l.b16 %v498
    %v1392 = vunpack.c.h.b16 %v498
    %v1393 = vunpack.c.l.b16 %v499
    %v1394 = vunpack.c.h.b16 %v499
    %v1395 = vunpack.c.l.b16 %v500
    %v1396 = vunpack.c.h.b16 %v500
    %v1397 = vunpack.c.l.b16 %v501
    %v1398 = vunpack.c.h.b16 %v501
    %v1399 = vunpack.c.l.b16 %v502
    %v1400 = vunpack.c.h.b16 %v502
    %v1401 = vunpack.c.l.b16 %v503
    %v1402 = vunpack.c.h.b16 %v503
    %v1403 = vunpack.c.l.b16 %v504
    %v1404 = vunpack.c.h.b16 %v504
    %v1405 = vunpack.c.l.b16 %v505
    %v1406 = vunpack.c.h.b16 %v505
    %v1407 = vunpack.c.l.b16 %v506
    %v1408 = vunpack.c.h.b16 %v506
    %v1409 = vunpack.c.l.b16 %v507
    %v1410 = vunpack.c.h.b16 %v507
    %v1411 = vunpack.c.l.b16 %v508
    %v1412 = vunpack.c.h.b16 %v508
    %v1413 = vunpack.c.l.b16 %v509
    %v1414 = vunpack.c.h.b16 %v509
    %v1415 = vunpack.c.l.b16 %v510
    %v1416 = vunpack.c.h.b16 %v510
    %v1417 = vunpack.c.l.b16 %v511
    %v1418 = vunpack.c.h.b16 %v511
    %v1419 = vunpack.c.l.b16 %v512
    %v1420 = vunpack.c.h.b16 %v512
    %v1421 = vunpack.c.l.b16 %v513
    %v1422 = vunpack.c.h.b16 %v513
    %v1423 = vunpack.c.l.b16 %v514
    %v1424 = vunpack.c.h.b16 %v514
    %v1425 = vunpack.c.l.b16 %v515
    %v1426 = vunpack.c.h.b16 %v515
    %v1427 = vunpack.c.l.b16 %v516
    %v1428 = vunpack.c.h.b16 %v516
    %v1429 = vunpack.c.l.b16 %v517
    %v1430 = vunpack.c.h.b16 %v517
    %v1431 = vunpack.c.l.b16 %v518
    %v1432 = vunpack.c.h.b16 %v518
    %v1433 = vunpack.c.l.b16 %v519
    %v1434 = vunpack.c.h.b16 %v519
    %v1435 = vunpack.c.l.b16 %v520
    %v1436 = vunpack.c.h.b16 %v520
    %v1437 = vunpack.c.l.b16 %v521
    %v1438 = vunpack.c.h.b16 %v521
    %v1439 = vunpack.c.l.b16 %v522
    %v1440 = vunpack.c.h.b16 %v522
    %v1441 = vunpack.c.l.b16 %v523
    %v1442 = vunpack.c.h.b16 %v523
    %v1443 = vunpack.c.l.b16 %v524
    %v1444 = vunpack.c.h.b16 %v524
    %v1445 = vunpack.c.l.b16 %v525
    %v1446 = vunpack.c.h.b16 %v525
    %v1447 = vunpack.c.l.b16 %v526
    %v1448 = vunpack.c.h.b16 %v526
    %v1449 = vunpack.c.l.b16 %v527
    %v1450 = vunpack.c.h.b16 %v527
    %v1451 = vunpack.c.l.b16 %v528
    %v1452 = vunpack.c.h.b16 %v528
    %v1453 = vunpack.c.l.b16 %v529
    %v1454 = vunpack.c.h.b16 %v529
    %v1455 = vunpack.c.l.b16 %v530
    %v1456 = vunpack.c.h.b16 %v530
    %v1457 = vunpack.c.l.b16 %v531
    %v1458 = vunpack.c.h.b16 %v531
    %v1459 = vunpack.c.l.b16 %v532
    %v1460 = vunpack.c.h.b16 %v532
    %v1461 = vunpack.c.l.b16 %v533
    %v1462 = vunpack.c.h.b16 %v533
    %v1463 = vunpack.c.l.b16 %v534
    %v1464 = vunpack.c.h.b16 %v534
    %v1465 = vunpack.c.l.b16 %v535
    %v1466 = vunpack.c.h.b16 %v535
    %v1467 = vunpack.c.l.b16 %v536
    %v1468 = vunpack.c.h.b16 %v536
    %v1469 = vunpack.c.l.b16 %v537
    %v1470 = vunpack.c.h.b16 %v537
    %v1471 = vunpack.c.l.b16 %v538
    %v1472 = vunpack.c.h.b16 %v538
    %v1473 = vunpack.c.l.b16 %v539
    %v1474 = vunpack.c.h.b16 %v539
    %v1475 = vunpack.c.l.b16 %v540
    %v1476 = vunpack.c.h.b16 %v540
    %v1477 = vunpack.c.l.b16 %v541
    %v1478 = vunpack.c.h.b16 %v541
    %v1479 = vunpack.c.l.b16 %v542
    %v1480 = vunpack.c.h.b16 %v542
    %v1481 = vunpack.c.l.b16 %v543
    %v1482 = vunpack.c.h.b16 %v543
    %v1483 = vunpack.c.l.b16 %v544
    %v1484 = vunpack.c.h.b16 %v544
    %v1485 = vunpack.c.l.b16 %v545
    %v1486 = vunpack.c.h.b16 %v545
    %v1487 = vunpack.c.l.b16 %v546
    %v1488 = vunpack.c.h.b16 %v546
    %v1489 = vunpack.c.l.b16 %v547
    %v1490 = vunpack.c.h.b16 %v547
    %v1491 = vunpack.c.l.b16 %v548
    %v1492 = vunpack.c.h.b16 %v548
    %v1493 = vunpack.c.l.b16 %v549
    %v1494 = vunpack.c.h.b16 %v549
    %v1495 = vunpack.c.l.b16 %v550
    %v1496 = vunpack.c.h.b16 %v550
    %v1497 = vunpack.c.l.b16 %v551
    %v1498 = vunpack.c.h.b16 %v551
    %v1499 = vunpack.c.l.b16 %v552
    %v1500 = vunpack.c.h.b16 %v552
    %v1501 = vunpack.c.l.b16 %v553
    %v1502 = vunpack.c.h.b16 %v553
    %v1503 = vunpack.c.l.b16 %v554
    %v1504 = vunpack.c.h.b16 %v554
    %v1505 = vunpack.c.l.b16 %v555
    %v1506 = vunpack.c.h.b16 %v555
    %v1507 = vunpack.c.l.b16 %v556
    %v1508 = vunpack.c.h.b16 %v556
    %v1509 = vunpack.c.l.b16 %v557
    %v1510 = vunpack.c.h.b16 %v557
    %v1511 = vunpack.c.l.b16 %v558
    %v1512 = vunpack.c.h.b16 %v558
    %v1513 = vunpack.c.l.b16 %v559
    %v1514 = vunpack.c.h.b16 %v559
    %v1515 = vunpack.c.l.b16 %v560
    %v1516 = vunpack.c.h.b16 %v560
    %v1517 = vunpack.c.l.b16 %v561
    %v1518 = vunpack.c.h.b16 %v561
    %v1519 = vunpack.c.l.b16 %v562
    %v1520 = vunpack.c.h.b16 %v562
    %v1521 = vunpack.c.l.b16 %v563
    %v1522 = vunpack.c.h.b16 %v563
    %v1523 = vunpack.c.l.b16 %v564
    %v1524 = vunpack.c.h.b16 %v564
    %v1525 = vunpack.c.l.b16 %v565
    %v1526 = vunpack.c.h.b16 %v565
    %v1527 = vunpack.c.l.b16 %v566
    %v1528 = vunpack.c.h.b16 %v566
    %v1529 = vunpack.c.l.b16 %v567
    %v1530 = vunpack.c.h.b16 %v567
    %v1531 = vunpack.c.l.b16 %v568
    %v1532 = vunpack.c.h.b16 %v568
    %v1533 = vpack.c.b16 %v945, %v933
    %v1534 = vpack.c.b16 %v946, %v934
    %v1535 = vpack.c.b16 %v947, %v935
    %v1536 = vpack.c.b16 %v948, %v936
    %v1537 = vpack.c.b16 %v949, %v937
    %v1538 = vpack.c.b16 %v950, %v938
    %v1539 = vpack.c.b16 %v951, %v939
    %v1540 = vpack.c.b16 %v952, %v940
    %v1541 = vpack.c.b16 %v953, %v941
    %v1542 = vpack.c.b16 %v954, %v942
    %v1543 = vpack.c.b16 %v955, %v943
    %v1544 = vpack.c.b16 %v956, %v944
    %v1545 = vpack.c.b16 %v969, %v957
    %v1546 = vpack.c.b16 %v970, %v958
    %v1547 = vpack.c.b16 %v971, %v959
    %v1548 = vpack.c.b16 %v972, %v960
    %v1549 = vpack.c.b16 %v973, %v961
    %v1550 = vpack.c.b16 %v974, %v962
    %v1551 = vpack.c.b16 %v975, %v963
    %v1552 = vpack.c.b16 %v976, %v964
    %v1553 = vpack.c.b16 %v977, %v965
    %v1554 = vpack.c.b16 %v978, %v966
    %v1555 = vpack.c.b16 %v979, %v967
    %v1556 = vpack.c.b16 %v980, %v968
    %v1557 = vpack.c.b16 %v993, %v981
    %v1558 = vpack.c.b16 %v994, %v982
    %v1559 = vpack.c.b16 %v995, %v983
    %v1560 = vpack.c.b16 %v996, %v984
    %v1561 = vpack.c.b16 %v997, %v985
    %v1562 = vpack.c.b16 %v998, %v986
    %v1563 = vpack.c.b16 %v999, %v987
    %v1564 = vpack.c.b16 %v1000, %v988
    %v1565 = vpack.c.b16 %v1001, %v989
    %v1566 = vpack.c.b16 %v1002, %v990
    %v1567 = vpack.c.b16 %v1003, %v991
    %v1568 = vpack.c.b16 %v1004, %v992
    %v1569 = vpack.c.b16 %v1017, %v1005
    %v1570 = vpack.c.b16 %v1018, %v1006
    %v1571 = vpack.c.b16 %v1019, %v1007
    %v1572 = vpack.c.b16 %v1020, %v1008
    %v1573 = vpack.c.b16 %v1021, %v1009
    %v1574 = vpack.c.b16 %v1022, %v1010
    %v1575 = vpack.c.b16 %v1023, %v1011
    %v1576 = vpack.c.b16 %v1024, %v1012
    %v1577 = vpack.c.b16 %v1025, %v1013
    %v1578 = vpack.c.b16 %v1026, %v1014
    %v1579 = vpack.c.b16 %v1027, %v1015
    %v1580 = vpack.c.b16 %v1028, %v1016
    %v1581 = vpack.c.b16 %v1041, %v1029
    %v1582 = vpack.c.b16 %v1042, %v1030
    %v1583 = vpack.c.b16 %v1043, %v1031
    %v1584 = vpack.c.b16 %v1044, %v1032
    %v1585 = vpack.c.b16 %v1045, %v1033
    %v1586 = vpack.c.b16 %v1046, %v1034
    %v1587 = vpack.c.b16 %v1047, %v1035
    %v1588 = vpack.c.b16 %v1048, %v1036
    %v1589 = vpack.c.b16 %v1049, %v1037
    %v1590 = vpack.c.b16 %v1050, %v1038
    %v1591 = vpack.c.b16 %v1051, %v1039
    %v1592 = vpack.c.b16 %v1052, %v1040
    %v1593 = vpack.c.b16 %v1065, %v1053
    %v1594 = vpack.c.b16 %v1066, %v1054
    %v1595 = vpack.c.b16 %v1067, %v1055
    %v1596 = vpack.c.b16 %v1068, %v1056
    %v1597 = vpack.c.b16 %v1069, %v1057
    %v1598 = vpack.c.b16 %v1070, %v1058
    %v1599 = vpack.c.b16 %v1071, %v1059
    %v1600 = vpack.c.b16 %v1072, %v1060
    %v1601 = vpack.c.b16 %v1073, %v1061
    %v1602 = vpack.c.b16 %v1074, %v1062
    %v1603 = vpack.c.b16 %v1075, %v1063
    %v1604 = vpack.c.b16 %v1076, %v1064
    %v1605 = vpack.c.b16 %v1089, %v1077
    %v1606 = vpack.c.b16 %v1090, %v1078
    %v1607 = vpack.c.b16 %v1091, %v1079
    %v1608 = vpack.c.b16 %v1092, %v1080
    %v1609 = vpack.c.b16 %v1093, %v1081
    %v1610 = vpack.c.b16 %v1094, %v1082
    %v1611 = vpack.c.b16 %v1095, %v1083
    %v1612 = vpack.c.b16 %v1096, %v1084
    %v1613 = vpack.c.b16 %v1097, %v1085
    %v1614 = vpack.c.b16 %v1098, %v1086
    %v1615 = vpack.c.b16 %v1099, %v1087
    %v1616 = vpack.c.b16 %v1100, %v1088
    %v1617 = vpack.c.b16 %v1113, %v1101
    %v1618 = vpack.c.b16 %v1114, %v1102
    %v1619 = vpack.c.b16 %v1115, %v1103
    %v1620 = vpack.c.b16 %v1116, %v1104
    %v1621 = vpack.c.b16 %v1117, %v1105
    %v1622 = vpack.c.b16 %v1118, %v1106
    %v1623 = vpack.c.b16 %v1119, %v1107
    %v1624 = vpack.c.b16 %v1120, %v1108
    %v1625 = vpack.c.b16 %v1121, %v1109
    %v1626 = vpack.c.b16 %v1122, %v1110
    %v1627 = vpack.c.b16 %v1123, %v1111
    %v1628 = vpack.c.b16 %v1124, %v1112
    %v1629 = vpack.c.b16 %v1137, %v1125
    %v1630 = vpack.c.b16 %v1138, %v1126
    %v1631 = vpack.c.b16 %v1139, %v1127
    %v1632 = vpack.c.b16 %v1140, %v1128
    %v1633 = vpack.c.b16 %v1141, %v1129
    %v1634 = vpack.c.b16 %v1142, %v1130
    %v1635 = vpack.c.b16 %v1143, %v1131
    %v1636 = vpack.c.b16 %v1144, %v1132
    %v1637 = vpack.c.b16 %v1145, %v1133
    %v1638 = vpack.c.b16 %v1146, %v1134
    %v1639 = vpack.c.b16 %v1147, %v1135
    %v1640 = vpack.c.b16 %v1148, %v1136
    %v1641 = vpack.c.b16 %v1161, %v1149
    %v1642 = vpack.c.b16 %v1162, %v1150
    %v1643 = vpack.c.b16 %v1163, %v1151
    %v1644 = vpack.c.b16 %v1164, %v1152
    %v1645 = vpack.c.b16 %v1165, %v1153
    %v1646 = vpack.c.b16 %v1166, %v1154
    %v1647 = vpack.c.b16 %v1167, %v1155
    %v1648 = vpack.c.b16 %v1168, %v1156
    %v1649 = vpack.c.b16 %v1169, %v1157
    %v1650 = vpack.c.b16 %v1170, %v1158
    %v1651 = vpack.c.b16 %v1171, %v1159
    %v1652 = vpack.c.b16 %v1172, %v1160
    %v1653 = vpack.c.b16 %v1185, %v1173
    %v1654 = vpack.c.b16 %v1186, %v1174
    %v1655 = vpack.c.b16 %v1187, %v1175
    %v1656 = vpack.c.b16 %v1188, %v1176
    %v1657 = vpack.c.b16 %v1189, %v1177
    %v1658 = vpack.c.b16 %v1190, %v1178
    %v1659 = vpack.c.b16 %v1191, %v1179
    %v1660 = vpack.c.b16 %v1192, %v1180
    %v1661 = vpack.c.b16 %v1193, %v1181
    %v1662 = vpack.c.b16 %v1194, %v1182
    %v1663 = vpack.c.b16 %v1195, %v1183
    %v1664 = vpack.c.b16 %v1196, %v1184
    %v1665 = vpack.c.b16 %v1209, %v1197
    %v1666 = vpack.c.b16 %v1210, %v1198
    %v1667 = vpack.c.b16 %v1211, %v1199
    %v1668 = vpack.c.b16 %v1212, %v1200
    %v1669 = vpack.c.b16 %v1213, %v1201
    %v1670 = vpack.c.b16 %v1214, %v1202
    %v1671 = vpack.c.b16 %v1215, %v1203
    %v1672 = vpack.c.b16 %v1216, %v1204
    %v1673 = vpack.c.b16 %v1217, %v1205
    %v1674 = vpack.c.b16 %v1218, %v1206
    %v1675 = vpack.c.b16 %v1219, %v1207
    %v1676 = vpack.c.b16 %v1220, %v1208
    %v1677 = vpack.c.b16 %v1233, %v1221
    %v1678 = vpack.c.b16 %v1234, %v1222
    %v1679 = vpack.c.b16 %v1235, %v1223
    %v1680 = vpack.c.b16 %v1236, %v1224
    %v1681 = vpack.c.b16 %v1237, %v1225
    %v1682 = vpack.c.b16 %v1238, %v1226
    %v1683 = vpack.c.b16 %v1239, %v1227
    %v1684 = vpack.c.b16 %v1240, %v1228
    %v1685 = vpack.c.b16 %v1241, %v1229
    %v1686 = vpack.c.b16 %v1242, %v1230
    %v1687 = vpack.c.b16 %v1243, %v1231
    %v1688 = vpack.c.b16 %v1244, %v1232
    %v1689 = vpack.c.b16 %v1257, %v1245
    %v1690 = vpack.c.b16 %v1258, %v1246
    %v1691 = vpack.c.b16 %v1259, %v1247
    %v1692 = vpack.c.b16 %v1260, %v1248
    %v1693 = vpack.c.b16 %v1261, %v1249
    %v1694 = vpack.c.b16 %v1262, %v1250
    %v1695 = vpack.c.b16 %v1263, %v1251
    %v1696 = vpack.c.b16 %v1264, %v1252
    %v1697 = vpack.c.b16 %v1265, %v1253
    %v1698 = vpack.c.b16 %v1266, %v1254
    %v1699 = vpack.c.b16 %v1267, %v1255
    %v1700 = vpack.c.b16 %v1268, %v1256
    %v1701 = vpack.c.b16 %v1281, %v1269
    %v1702 = vpack.c.b16 %v1282, %v1270
    %v1703 = vpack.c.b16 %v1283, %v1271
    %v1704 = vpack.c.b16 %v1284, %v1272
    %v1705 = vpack.c.b16 %v1285, %v1273
    %v1706 = vpack.c.b16 %v1286, %v1274
    %v1707 = vpack.c.b16 %v1287, %v1275
    %v1708 = vpack.c.b16 %v1288, %v1276
    %v1709 = vpack.c.b16 %v1289, %v1277
    %v1710 = vpack.c.b16 %v1290, %v1278
    %v1711 = vpack.c.b16 %v1291, %v1279
    %v1712 = vpack.c.b16 %v1292, %v1280
    %v1713 = vpack.c.b16 %v1305, %v1293
    %v1714 = vpack.c.b16 %v1306, %v1294
    %v1715 = vpack.c.b16 %v1307, %v1295
    %v1716 = vpack.c.b16 %v1308, %v1296
    %v1717 = vpack.c.b16 %v1309, %v1297
    %v1718 = vpack.c.b16 %v1310, %v1298
    %v1719 = vpack.c.b16 %v1311, %v1299
    %v1720 = vpack.c.b16 %v1312, %v1300
    %v1721 = vpack.c.b16 %v1313, %v1301
    %v1722 = vpack.c.b16 %v1314, %v1302
    %v1723 = vpack.c.b16 %v1315, %v1303
    %v1724 = vpack.c.b16 %v1316, %v1304
    %v1725 = vpack.c.b16 %v1329, %v1317
    %v1726 = vpack.c.b16 %v1330, %v1318
    %v1727 = vpack.c.b16 %v1331, %v1319
    %v1728 = vpack.c.b16 %v1332, %v1320
    %v1729 = vpack.c.b16 %v1333, %v1321
    %v1730 = vpack.c.b16 %v1334, %v1322
    %v1731 = vpack.c.b16 %v1335, %v1323
    %v1732 = vpack.c.b16 %v1336, %v1324
    %v1733 = vpack.c.b16 %v1337, %v1325
    %v1734 = vpack.c.b16 %v1338, %v1326
    %v1735 = vpack.c.b16 %v1339, %v1327
    %v1736 = vpack.c.b16 %v1340, %v1328
    %v1737 = vpack.c.b16 %v1353, %v1341
    %v1738 = vpack.c.b16 %v1354, %v1342
    %v1739 = vpack.c.b16 %v1355, %v1343
    %v1740 = vpack.c.b16 %v1356, %v1344
    %v1741 = vpack.c.b16 %v1357, %v1345
    %v1742 = vpack.c.b16 %v1358, %v1346
    %v1743 = vpack.c.b16 %v1359, %v1347
    %v1744 = vpack.c.b16 %v1360, %v1348
    %v1745 = vpack.c.b16 %v1361, %v1349
    %v1746 = vpack.c.b16 %v1362, %v1350
    %v1747 = vpack.c.b16 %v1363, %v1351
    %v1748 = vpack.c.b16 %v1364, %v1352
    %v1749 = vpack.c.b16 %v1377, %v1365
    %v1750 = vpack.c.b16 %v1378, %v1366
    %v1751 = vpack.c.b16 %v1379, %v1367
    %v1752 = vpack.c.b16 %v1380, %v1368
    %v1753 = vpack.c.b16 %v1381, %v1369
    %v1754 = vpack.c.b16 %v1382, %v1370
    %v1755 = vpack.c.b16 %v1383, %v1371
    %v1756 = vpack.c.b16 %v1384, %v1372
    %v1757 = vpack.c.b16 %v1385, %v1373
    %v1758 = vpack.c.b16 %v1386, %v1374
    %v1759 = vpack.c.b16 %v1387, %v1375
    %v1760 = vpack.c.b16 %v1388, %v1376
    %v1761 = vpack.c.b16 %v1401, %v1389
    %v1762 = vpack.c.b16 %v1402, %v1390
    %v1763 = vpack.c.b16 %v1403, %v1391
    %v1764 = vpack.c.b16 %v1404, %v1392
    %v1765 = vpack.c.b16 %v1405, %v1393
    %v1766 = vpack.c.b16 %v1406, %v1394
    %v1767 = vpack.c.b16 %v1407, %v1395
    %v1768 = vpack.c.b16 %v1408, %v1396
    %v1769 = vpack.c.b16 %v1409, %v1397
    %v1770 = vpack.c.b16 %v1410, %v1398
    %v1771 = vpack.c.b16 %v1411, %v1399
    %v1772 = vpack.c.b16 %v1412, %v1400
    %v1773 = vpack.c.b16 %v1425, %v1413
    %v1774 = vpack.c.b16 %v1426, %v1414
    %v1775 = vpack.c.b16 %v1427, %v1415
    %v1776 = vpack.c.b16 %v1428, %v1416
    %v1777 = vpack.c.b16 %v1429, %v1417
    %v1778 = vpack.c.b16 %v1430, %v1418
    %v1779 = vpack.c.b16 %v1431, %v1419
    %v1780 = vpack.c.b16 %v1432, %v1420
    %v1781 = vpack.c.b16 %v1433, %v1421
    %v1782 = vpack.c.b16 %v1434, %v1422
    %v1783 = vpack.c.b16 %v1435, %v1423
    %v1784 = vpack.c.b16 %v1436, %v1424
    %v1785 = vpack.c.b16 %v1449, %v1437
    %v1786 = vpack.c.b16 %v1450, %v1438
    %v1787 = vpack.c.b16 %v1451, %v1439
    %v1788 = vpack.c.b16 %v1452, %v1440
    %v1789 = vpack.c.b16 %v1453, %v1441
    %v1790 = vpack.c.b16 %v1454, %v1442
    %v1791 = vpack.c.b16 %v1455, %v1443
    %v1792 = vpack.c.b16 %v1456, %v1444
    %v1793 = vpack.c.b16 %v1457, %v1445
    %v1794 = vpack.c.b16 %v1458, %v1446
    %v1795 = vpack.c.b16 %v1459, %v1447
    %v1796 = vpack.c.b16 %v1460, %v1448
    %v1797 = vpack.c.b16 %v1473, %v1461
    %v1798 = vpack.c.b16 %v1474, %v1462
    %v1799 = vpack.c.b16 %v1475, %v1463
    %v1800 = vpack.c.b16 %v1476, %v1464
    %v1801 = vpack.c.b16 %v1477, %v1465
    %v1802 = vpack.c.b16 %v1478, %v1466
    %v1803 = vpack.c.b16 %v1479, %v1467
    %v1804 = vpack.c.b16 %v1480, %v1468
    %v1805 = vpack.c.b16 %v1481, %v1469
    %v1806 = vpack.c.b16 %v1482, %v1470
    %v1807 = vpack.c.b16 %v1483, %v1471
    %v1808 = vpack.c.b16 %v1484, %v1472
    %v1809 = vpack.c.b16 %v1497, %v1485
    %v1810 = vpack.c.b16 %v1498, %v1486
    %v1811 = vpack.c.b16 %v1499, %v1487
    %v1812 = vpack.c.b16 %v1500, %v1488
    %v1813 = vpack.c.b16 %v1501, %v1489
    %v1814 = vpack.c.b16 %v1502, %v1490
    %v1815 = vpack.c.b16 %v1503, %v1491
    %v1816 = vpack.c.b16 %v1504, %v1492
    %v1817 = vpack.c.b16 %v1505, %v1493
    %v1818 = vpack.c.b16 %v1506, %v1494
    %v1819 = vpack.c.b16 %v1507, %v1495
    %v1820 = vpack.c.b16 %v1508, %v1496
    %v1821 = vpack.c.b16 %v1521, %v1509
    %v1822 = vpack.c.b16 %v1522, %v1510
    %v1823 = vpack.c.b16 %v1523, %v1511
    %v1824 = vpack.c.b16 %v1524, %v1512
    %v1825 = vpack.c.b16 %v1525, %v1513
    %v1826 = vpack.c.b16 %v1526, %v1514
    %v1827 = vpack.c.b16 %v1527, %v1515
    %v1828 = vpack.c.b16 %v1528, %v1516
    %v1829 = vpack.c.b16 %v1529, %v1517
    %v1830 = vpack.c.b16 %v1530, %v1518
    %v1831 = vpack.c.b16 %v1531, %v1519
    %v1832 = vpack.c.b16 %v1532, %v1520
    %vm2133 = vcmask 130048
    %v2135 = vsel %vm2133, %v268, 0
    %2137 = vmatprep.subr.bf16.mxu0 %v1534
    %2138 = vmatpush1.bf16.msra.mxu0 %v1533
    %2139 = vmatprep.subr.bf16.mxu0 %v1546
    %2140 = vmatpush1.bf16.msra.mxu0 %v1545
    %2141 = vmatprep.subr.bf16.mxu0 %v1558
    %2142 = vmatpush1.bf16.msra.mxu0 %v1557
    %2143 = vmatprep.subr.bf16.mxu0 %v1570
    %2144 = vmatpush1.bf16.msra.mxu0 %v1569
    %2145 = vmatprep.subr.bf16.mxu0 %v1582
    %2146 = vmatpush1.bf16.msra.mxu0 %v1581
    %2147 = vmatprep.subr.bf16.mxu0 %v1594
    %2148 = vmatpush1.bf16.msra.mxu0 %v1593
    %2149 = vmatprep.subr.bf16.mxu0 %v1606
    %2150 = vmatpush1.bf16.msra.mxu0 %v1605
    %2151 = vmatprep.subr.bf16.mxu0 %v1618
    %2152 = vmatpush1.bf16.msra.mxu0 %v1617
    %2153 = vmatprep.subr.bf16.mxu0 %v1630
    %2154 = vmatpush1.bf16.msra.mxu0 %v1629
    %2155 = vmatprep.subr.bf16.mxu0 %v1642
    %2156 = vmatpush1.bf16.msra.mxu0 %v1641
    %2157 = vmatprep.subr.bf16.mxu0 %v1654
    %2158 = vmatpush1.bf16.msra.mxu0 %v1653
    %2159 = vmatprep.subr.bf16.mxu0 %v1666
    %2160 = vmatpush1.bf16.msra.mxu0 %v1665
    %2161 = vmatprep.subr.bf16.mxu0 %v1678
    %2162 = vmatpush1.bf16.msra.mxu0 %v1677
    %2163 = vmatprep.subr.bf16.mxu0 %v1690
    %2164 = vmatpush1.bf16.msra.mxu0 %v1689
    %2165 = vmatprep.subr.bf16.mxu0 %v1702
    %2166 = vmatpush1.bf16.msra.mxu0 %v1701
    %2167 = vmatprep.subr.bf16.mxu0 %v1714
    %2168 = vmatpush1.bf16.msra.mxu0 %v1713
    %2169 = vmatprep.mubr.bf16.mxu0 %v266
    %2170 = vmatmul.mubr.bf16.gmra.mrb[0].mxu0 %v265
    %v2171 = vpop.f32.mrb[0].mxu0
    %v2172 = vadd.f32 %v576, %v2171
    %v2173 = vpop.f32.mrb[0].mxu0
    %v2174 = vadd.f32 %v580, %v2173
    %v2175 = vpop.f32.mrb[0].mxu0
    %v2176 = vpop.f32.mrb[0].mxu0
    %2177 = vdwg.mxu0
    %2178 = vmatprep.subr.bf16.mxu0 %v1726
    %2179 = vmatpush1.bf16.msra.mxu0 %v1725
    %2180 = vmatprep.subr.bf16.mxu0 %v1738
    %2181 = vmatpush1.bf16.msra.mxu0 %v1737
    %2182 = vmatprep.subr.bf16.mxu0 %v1750
    %2183 = vmatpush1.bf16.msra.mxu0 %v1749
    %2184 = vmatprep.subr.bf16.mxu0 %v1762
    %2185 = vmatpush1.bf16.msra.mxu0 %v1761
    %2186 = vmatprep.subr.bf16.mxu0 %v1774
    %2187 = vmatpush1.bf16.msra.mxu0 %v1773
    %2188 = vmatprep.subr.bf16.mxu0 %v1786
    %2189 = vmatpush1.bf16.msra.mxu0 %v1785
    %2190 = vmatprep.subr.bf16.mxu0 %v1798
    %2191 = vmatpush1.bf16.msra.mxu0 %v1797
    %2192 = vmatprep.subr.bf16.mxu0 %v1810
    %2193 = vmatpush1.bf16.msra.mxu0 %v1809
    %2194 = vmatprep.subr.bf16.mxu0 %v1822
    %2195 = vmatpush1.bf16.msra.mxu0 %v1821
    %2196 = vmatprep.subr.bf16.mxu0 0
    %2197 = vmatpush1.bf16.msra.mxu0 0
    %2198 = vmatprep.subr.bf16.mxu0 0
    %2199 = vmatpush1.bf16.msra.mxu0 0
    %2200 = vmatprep.subr.bf16.mxu0 0
    %2201 = vmatpush1.bf16.msra.mxu0 0
    %2202 = vmatprep.subr.bf16.mxu0 0
    %2203 = vmatpush1.bf16.msra.mxu0 0
    %2204 = vmatprep.subr.bf16.mxu0 0
    %2205 = vmatpush1.bf16.msra.mxu0 0
    %2206 = vmatprep.subr.bf16.mxu0 0
    %2207 = vmatpush1.bf16.msra.mxu0 0
    %2208 = vmatprep.subr.bf16.mxu0 0
    %2209 = vmatpush1.bf16.msra.mxu0 0
    %2210 = vmatprep.mubr.bf16.mxu0 %v2135
    %2211 = vmatmul.mubr.bf16.gmra.mrb[0].mxu0 %v267
    %v2212 = vpop.f32.mrb[0].mxu0
    %v2213 = vadd.f32 %v2172, %v2212
    %v2214 = vpop.f32.mrb[0].mxu0
    %v2215 = vadd.f32 %v2174, %v2214
    %v2216 = vpop.f32.mrb[0].mxu0
    %v2217 = vpop.f32.mrb[0].mxu0
    %2218 = vdwg.mxu0
    %2219 = vmatprep.subr.bf16.mxu0 %v1536
    %2220 = vmatpush1.bf16.msra.mxu0 %v1535
    %2221 = vmatprep.subr.bf16.mxu0 %v1548
    %2222 = vmatpush1.bf16.msra.mxu0 %v1547
    %2223 = vmatprep.subr.bf16.mxu0 %v1560
    %2224 = vmatpush1.bf16.msra.mxu0 %v1559
    %2225 = vmatprep.subr.bf16.mxu0 %v1572
    %2226 = vmatpush1.bf16.msra.mxu0 %v1571
    %2227 = vmatprep.subr.bf16.mxu0 %v1584
    %2228 = vmatpush1.bf16.msra.mxu0 %v1583
    %2229 = vmatprep.subr.bf16.mxu0 %v1596
    %2230 = vmatpush1.bf16.msra.mxu0 %v1595
    %2231 = vmatprep.subr.bf16.mxu0 %v1608
    %2232 = vmatpush1.bf16.msra.mxu0 %v1607
    %2233 = vmatprep.subr.bf16.mxu0 %v1620
    %2234 = vmatpush1.bf16.msra.mxu0 %v1619
    %2235 = vmatprep.subr.bf16.mxu0 %v1632
    %2236 = vmatpush1.bf16.msra.mxu0 %v1631
    %2237 = vmatprep.subr.bf16.mxu0 %v1644
    %2238 = vmatpush1.bf16.msra.mxu0 %v1643
    %2239 = vmatprep.subr.bf16.mxu0 %v1656
    %2240 = vmatpush1.bf16.msra.mxu0 %v1655
    %2241 = vmatprep.subr.bf16.mxu0 %v1668
    %2242 = vmatpush1.bf16.msra.mxu0 %v1667
    %2243 = vmatprep.subr.bf16.mxu0 %v1680
    %2244 = vmatpush1.bf16.msra.mxu0 %v1679
    %2245 = vmatprep.subr.bf16.mxu0 %v1692
    %2246 = vmatpush1.bf16.msra.mxu0 %v1691
    %2247 = vmatprep.subr.bf16.mxu0 %v1704
    %2248 = vmatpush1.bf16.msra.mxu0 %v1703
    %2249 = vmatprep.subr.bf16.mxu0 %v1716
    %2250 = vmatpush1.bf16.msra.mxu0 %v1715
    %2251 = vmatprep.mubr.bf16.mxu0 %v266
    %2252 = vmatmul.mubr.bf16.gmra.mrb[0].mxu0 %v265
    %v2253 = vpop.f32.mrb[0].mxu0
    %v2254 = vadd.f32 %v584, %v2253
    %v2255 = vpop.f32.mrb[0].mxu0
    %v2256 = vadd.f32 %v588, %v2255
    %v2257 = vpop.f32.mrb[0].mxu0
    %v2258 = vpop.f32.mrb[0].mxu0
    %2259 = vdwg.mxu0
    %2260 = vmatprep.subr.bf16.mxu0 %v1728
    %2261 = vmatpush1.bf16.msra.mxu0 %v1727
    %2262 = vmatprep.subr.bf16.mxu0 %v1740
    %2263 = vmatpush1.bf16.msra.mxu0 %v1739
    %2264 = vmatprep.subr.bf16.mxu0 %v1752
    %2265 = vmatpush1.bf16.msra.mxu0 %v1751
    %2266 = vmatprep.subr.bf16.mxu0 %v1764
    %2267 = vmatpush1.bf16.msra.mxu0 %v1763
    %2268 = vmatprep.subr.bf16.mxu0 %v1776
    %2269 = vmatpush1.bf16.msra.mxu0 %v1775
    %2270 = vmatprep.subr.bf16.mxu0 %v1788
    %2271 = vmatpush1.bf16.msra.mxu0 %v1787
    %2272 = vmatprep.subr.bf16.mxu0 %v1800
    %2273 = vmatpush1.bf16.msra.mxu0 %v1799
    %2274 = vmatprep.subr.bf16.mxu0 %v1812
    %2275 = vmatpush1.bf16.msra.mxu0 %v1811
    %2276 = vmatprep.subr.bf16.mxu0 %v1824
    %2277 = vmatpush1.bf16.msra.mxu0 %v1823
    %2278 = vmatprep.subr.bf16.mxu0 0
    %2279 = vmatpush1.bf16.msra.mxu0 0
    %2280 = vmatprep.subr.bf16.mxu0 0
    %2281 = vmatpush1.bf16.msra.mxu0 0
    %2282 = vmatprep.subr.bf16.mxu0 0
    %2283 = vmatpush1.bf16.msra.mxu0 0
    %2284 = vmatprep.subr.bf16.mxu0 0
    %2285 = vmatpush1.bf16.msra.mxu0 0
    %2286 = vmatprep.subr.bf16.mxu0 0
    %2287 = vmatpush1.bf16.msra.mxu0 0
    %2288 = vmatprep.subr.bf16.mxu0 0
    %2289 = vmatpush1.bf16.msra.mxu0 0
    %2290 = vmatprep.subr.bf16.mxu0 0
    %2291 = vmatpush1.bf16.msra.mxu0 0
    %2292 = vmatprep.mubr.bf16.mxu0 %v2135
    %2293 = vmatmul.mubr.bf16.gmra.mrb[0].mxu0 %v267
    %v2294 = vpop.f32.mrb[0].mxu0
    %v2295 = vadd.f32 %v2254, %v2294
    %v2296 = vpop.f32.mrb[0].mxu0
    %v2297 = vadd.f32 %v2256, %v2296
    %v2298 = vpop.f32.mrb[0].mxu0
    %v2299 = vpop.f32.mrb[0].mxu0
    %2300 = vdwg.mxu0
    %2301 = vmatprep.subr.bf16.mxu0 %v1538
    %2302 = vmatpush1.bf16.msra.mxu0 %v1537
    %2303 = vmatprep.subr.bf16.mxu0 %v1550
    %2304 = vmatpush1.bf16.msra.mxu0 %v1549
    %2305 = vmatprep.subr.bf16.mxu0 %v1562
    %2306 = vmatpush1.bf16.msra.mxu0 %v1561
    %2307 = vmatprep.subr.bf16.mxu0 %v1574
    %2308 = vmatpush1.bf16.msra.mxu0 %v1573
    %2309 = vmatprep.subr.bf16.mxu0 %v1586
    %2310 = vmatpush1.bf16.msra.mxu0 %v1585
    %2311 = vmatprep.subr.bf16.mxu0 %v1598
    %2312 = vmatpush1.bf16.msra.mxu0 %v1597
    %2313 = vmatprep.subr.bf16.mxu0 %v1610
    %2314 = vmatpush1.bf16.msra.mxu0 %v1609
    %2315 = vmatprep.subr.bf16.mxu0 %v1622
    %2316 = vmatpush1.bf16.msra.mxu0 %v1621
    %2317 = vmatprep.subr.bf16.mxu0 %v1634
    %2318 = vmatpush1.bf16.msra.mxu0 %v1633
    %2319 = vmatprep.subr.bf16.mxu0 %v1646
    %2320 = vmatpush1.bf16.msra.mxu0 %v1645
    %2321 = vmatprep.subr.bf16.mxu0 %v1658
    %2322 = vmatpush1.bf16.msra.mxu0 %v1657
    %2323 = vmatprep.subr.bf16.mxu0 %v1670
    %2324 = vmatpush1.bf16.msra.mxu0 %v1669
    %2325 = vmatprep.subr.bf16.mxu0 %v1682
    %2326 = vmatpush1.bf16.msra.mxu0 %v1681
    %2327 = vmatprep.subr.bf16.mxu0 %v1694
    %2328 = vmatpush1.bf16.msra.mxu0 %v1693
    %2329 = vmatprep.subr.bf16.mxu0 %v1706
    %2330 = vmatpush1.bf16.msra.mxu0 %v1705
    %2331 = vmatprep.subr.bf16.mxu0 %v1718
    %2332 = vmatpush1.bf16.msra.mxu0 %v1717
    %2333 = vmatprep.mubr.bf16.mxu0 %v266
    %2334 = vmatmul.mubr.bf16.gmra.mrb[0].mxu0 %v265
    %v2335 = vpop.f32.mrb[0].mxu0
    %v2336 = vadd.f32 %v592, %v2335
    %v2337 = vpop.f32.mrb[0].mxu0
    %v2338 = vadd.f32 %v596, %v2337
    %v2339 = vpop.f32.mrb[0].mxu0
    %v2340 = vpop.f32.mrb[0].mxu0
    %2341 = vdwg.mxu0
    %2342 = vmatprep.subr.bf16.mxu0 %v1730
    %2343 = vmatpush1.bf16.msra.mxu0 %v1729
    %2344 = vmatprep.subr.bf16.mxu0 %v1742
    %2345 = vmatpush1.bf16.msra.mxu0 %v1741
    %2346 = vmatprep.subr.bf16.mxu0 %v1754
    %2347 = vmatpush1.bf16.msra.mxu0 %v1753
    %2348 = vmatprep.subr.bf16.mxu0 %v1766
    %2349 = vmatpush1.bf16.msra.mxu0 %v1765
    %2350 = vmatprep.subr.bf16.mxu0 %v1778
    %2351 = vmatpush1.bf16.msra.mxu0 %v1777
    %2352 = vmatprep.subr.bf16.mxu0 %v1790
    %2353 = vmatpush1.bf16.msra.mxu0 %v1789
    %2354 = vmatprep.subr.bf16.mxu0 %v1802
    %2355 = vmatpush1.bf16.msra.mxu0 %v1801
    %2356 = vmatprep.subr.bf16.mxu0 %v1814
    %2357 = vmatpush1.bf16.msra.mxu0 %v1813
    %2358 = vmatprep.subr.bf16.mxu0 %v1826
    %2359 = vmatpush1.bf16.msra.mxu0 %v1825
    %2360 = vmatprep.subr.bf16.mxu0 0
    %2361 = vmatpush1.bf16.msra.mxu0 0
    %2362 = vmatprep.subr.bf16.mxu0 0
    %2363 = vmatpush1.bf16.msra.mxu0 0
    %2364 = vmatprep.subr.bf16.mxu0 0
    %2365 = vmatpush1.bf16.msra.mxu0 0
    %2366 = vmatprep.subr.bf16.mxu0 0
    %2367 = vmatpush1.bf16.msra.mxu0 0
    %2368 = vmatprep.subr.bf16.mxu0 0
    %2369 = vmatpush1.bf16.msra.mxu0 0
    %2370 = vmatprep.subr.bf16.mxu0 0
    %2371 = vmatpush1.bf16.msra.mxu0 0
    %2372 = vmatprep.subr.bf16.mxu0 0
    %2373 = vmatpush1.bf16.msra.mxu0 0
    %2374 = vmatprep.mubr.bf16.mxu0 %v2135
    %2375 = vmatmul.mubr.bf16.gmra.mrb[0].mxu0 %v267
    %v2376 = vpop.f32.mrb[0].mxu0
    %v2377 = vadd.f32 %v2336, %v2376
    %v2378 = vpop.f32.mrb[0].mxu0
    %v2379 = vadd.f32 %v2338, %v2378
    %v2380 = vpop.f32.mrb[0].mxu0
    %v2381 = vpop.f32.mrb[0].mxu0
    %2382 = vdwg.mxu0
    %2383 = vmatprep.subr.bf16.mxu0 %v1540
    %2384 = vmatpush1.bf16.msra.mxu0 %v1539
    %2385 = vmatprep.subr.bf16.mxu0 %v1552
    %2386 = vmatpush1.bf16.msra.mxu0 %v1551
    %2387 = vmatprep.subr.bf16.mxu0 %v1564
    %2388 = vmatpush1.bf16.msra.mxu0 %v1563
    %2389 = vmatprep.subr.bf16.mxu0 %v1576
    %2390 = vmatpush1.bf16.msra.mxu0 %v1575
    %2391 = vmatprep.subr.bf16.mxu0 %v1588
    %2392 = vmatpush1.bf16.msra.mxu0 %v1587
    %2393 = vmatprep.subr.bf16.mxu0 %v1600
    %2394 = vmatpush1.bf16.msra.mxu0 %v1599
    %2395 = vmatprep.subr.bf16.mxu0 %v1612
    %2396 = vmatpush1.bf16.msra.mxu0 %v1611
    %2397 = vmatprep.subr.bf16.mxu0 %v1624
    %2398 = vmatpush1.bf16.msra.mxu0 %v1623
    %2399 = vmatprep.subr.bf16.mxu0 %v1636
    %2400 = vmatpush1.bf16.msra.mxu0 %v1635
    %2401 = vmatprep.subr.bf16.mxu0 %v1648
    %2402 = vmatpush1.bf16.msra.mxu0 %v1647
    %2403 = vmatprep.subr.bf16.mxu0 %v1660
    %2404 = vmatpush1.bf16.msra.mxu0 %v1659
    %2405 = vmatprep.subr.bf16.mxu0 %v1672
    %2406 = vmatpush1.bf16.msra.mxu0 %v1671
    %2407 = vmatprep.subr.bf16.mxu0 %v1684
    %2408 = vmatpush1.bf16.msra.mxu0 %v1683
    %2409 = vmatprep.subr.bf16.mxu0 %v1696
    %2410 = vmatpush1.bf16.msra.mxu0 %v1695
    %2411 = vmatprep.subr.bf16.mxu0 %v1708
    %2412 = vmatpush1.bf16.msra.mxu0 %v1707
    %2413 = vmatprep.subr.bf16.mxu0 %v1720
    %2414 = vmatpush1.bf16.msra.mxu0 %v1719
    %2415 = vmatprep.mubr.bf16.mxu0 %v266
    %2416 = vmatmul.mubr.bf16.gmra.mrb[0].mxu0 %v265
    %v2417 = vpop.f32.mrb[0].mxu0
    %v2418 = vadd.f32 %v600, %v2417
    %v2419 = vpop.f32.mrb[0].mxu0
    %v2420 = vadd.f32 %v604, %v2419
    %v2421 = vpop.f32.mrb[0].mxu0
    %v2422 = vpop.f32.mrb[0].mxu0
    %2423 = vdwg.mxu0
    %2424 = vmatprep.subr.bf16.mxu0 %v1732
    %2425 = vmatpush1.bf16.msra.mxu0 %v1731
    %2426 = vmatprep.subr.bf16.mxu0 %v1744
    %2427 = vmatpush1.bf16.msra.mxu0 %v1743
    %2428 = vmatprep.subr.bf16.mxu0 %v1756
    %2429 = vmatpush1.bf16.msra.mxu0 %v1755
    %2430 = vmatprep.subr.bf16.mxu0 %v1768
    %2431 = vmatpush1.bf16.msra.mxu0 %v1767
    %2432 = vmatprep.subr.bf16.mxu0 %v1780
    %2433 = vmatpush1.bf16.msra.mxu0 %v1779
    %2434 = vmatprep.subr.bf16.mxu0 %v1792
    %2435 = vmatpush1.bf16.msra.mxu0 %v1791
    %2436 = vmatprep.subr.bf16.mxu0 %v1804
    %2437 = vmatpush1.bf16.msra.mxu0 %v1803
    %2438 = vmatprep.subr.bf16.mxu0 %v1816
    %2439 = vmatpush1.bf16.msra.mxu0 %v1815
    %2440 = vmatprep.subr.bf16.mxu0 %v1828
    %2441 = vmatpush1.bf16.msra.mxu0 %v1827
    %2442 = vmatprep.subr.bf16.mxu0 0
    %2443 = vmatpush1.bf16.msra.mxu0 0
    %2444 = vmatprep.subr.bf16.mxu0 0
    %2445 = vmatpush1.bf16.msra.mxu0 0
    %2446 = vmatprep.subr.bf16.mxu0 0
    %2447 = vmatpush1.bf16.msra.mxu0 0
    %2448 = vmatprep.subr.bf16.mxu0 0
    %2449 = vmatpush1.bf16.msra.mxu0 0
    %2450 = vmatprep.subr.bf16.mxu0 0
    %2451 = vmatpush1.bf16.msra.mxu0 0
    %2452 = vmatprep.subr.bf16.mxu0 0
    %2453 = vmatpush1.bf16.msra.mxu0 0
    %2454 = vmatprep.subr.bf16.mxu0 0
    %2455 = vmatpush1.bf16.msra.mxu0 0
    %2456 = vmatprep.mubr.bf16.mxu0 %v2135
    %2457 = vmatmul.mubr.bf16.gmra.mrb[0].mxu0 %v267
    %v2458 = vpop.f32.mrb[0].mxu0
    %v2459 = vadd.f32 %v2418, %v2458
    %v2460 = vpop.f32.mrb[0].mxu0
    %v2461 = vadd.f32 %v2420, %v2460
    %v2462 = vpop.f32.mrb[0].mxu0
    %v2463 = vpop.f32.mrb[0].mxu0
    %2464 = vdwg.mxu0
    %2465 = vmatprep.subr.bf16.mxu0 %v1542
    %2466 = vmatpush1.bf16.msra.mxu0 %v1541
    %2467 = vmatprep.subr.bf16.mxu0 %v1554
    %2468 = vmatpush1.bf16.msra.mxu0 %v1553
    %2469 = vmatprep.subr.bf16.mxu0 %v1566
    %2470 = vmatpush1.bf16.msra.mxu0 %v1565
    %2471 = vmatprep.subr.bf16.mxu0 %v1578
    %2472 = vmatpush1.bf16.msra.mxu0 %v1577
    %2473 = vmatprep.subr.bf16.mxu0 %v1590
    %2474 = vmatpush1.bf16.msra.mxu0 %v1589
    %2475 = vmatprep.subr.bf16.mxu0 %v1602
    %2476 = vmatpush1.bf16.msra.mxu0 %v1601
    %2477 = vmatprep.subr.bf16.mxu0 %v1614
    %2478 = vmatpush1.bf16.msra.mxu0 %v1613
    %2479 = vmatprep.subr.bf16.mxu0 %v1626
    %2480 = vmatpush1.bf16.msra.mxu0 %v1625
    %2481 = vmatprep.subr.bf16.mxu0 %v1638
    %2482 = vmatpush1.bf16.msra.mxu0 %v1637
    %2483 = vmatprep.subr.bf16.mxu0 %v1650
    %2484 = vmatpush1.bf16.msra.mxu0 %v1649
    %2485 = vmatprep.subr.bf16.mxu0 %v1662
    %2486 = vmatpush1.bf16.msra.mxu0 %v1661
    %2487 = vmatprep.subr.bf16.mxu0 %v1674
    %2488 = vmatpush1.bf16.msra.mxu0 %v1673
    %2489 = vmatprep.subr.bf16.mxu0 %v1686
    %2490 = vmatpush1.bf16.msra.mxu0 %v1685
    %2491 = vmatprep.subr.bf16.mxu0 %v1698
    %2492 = vmatpush1.bf16.msra.mxu0 %v1697
    %2493 = vmatprep.subr.bf16.mxu0 %v1710
    %2494 = vmatpush1.bf16.msra.mxu0 %v1709
    %2495 = vmatprep.subr.bf16.mxu0 %v1722
    %2496 = vmatpush1.bf16.msra.mxu0 %v1721
    %2497 = vmatprep.mubr.bf16.mxu0 %v266
    %2498 = vmatmul.mubr.bf16.gmra.mrb[0].mxu0 %v265
    %v2499 = vpop.f32.mrb[0].mxu0
    %v2500 = vadd.f32 %v608, %v2499
    %v2501 = vpop.f32.mrb[0].mxu0
    %v2502 = vadd.f32 %v612, %v2501
    %v2503 = vpop.f32.mrb[0].mxu0
    %v2504 = vpop.f32.mrb[0].mxu0
    %2505 = vdwg.mxu0
    %2506 = vmatprep.subr.bf16.mxu0 %v1734
    %2507 = vmatpush1.bf16.msra.mxu0 %v1733
    %2508 = vmatprep.subr.bf16.mxu0 %v1746
    %2509 = vmatpush1.bf16.msra.mxu0 %v1745
    %2510 = vmatprep.subr.bf16.mxu0 %v1758
    %2511 = vmatpush1.bf16.msra.mxu0 %v1757
    %2512 = vmatprep.subr.bf16.mxu0 %v1770
    %2513 = vmatpush1.bf16.msra.mxu0 %v1769
    %2514 = vmatprep.subr.bf16.mxu0 %v1782
    %2515 = vmatpush1.bf16.msra.mxu0 %v1781
    %2516 = vmatprep.subr.bf16.mxu0 %v1794
    %2517 = vmatpush1.bf16.msra.mxu0 %v1793
    %2518 = vmatprep.subr.bf16.mxu0 %v1806
    %2519 = vmatpush1.bf16.msra.mxu0 %v1805
    %2520 = vmatprep.subr.bf16.mxu0 %v1818
    %2521 = vmatpush1.bf16.msra.mxu0 %v1817
    %2522 = vmatprep.subr.bf16.mxu0 %v1830
    %2523 = vmatpush1.bf16.msra.mxu0 %v1829
    %2524 = vmatprep.subr.bf16.mxu0 0
    %2525 = vmatpush1.bf16.msra.mxu0 0
    %2526 = vmatprep.subr.bf16.mxu0 0
    %2527 = vmatpush1.bf16.msra.mxu0 0
    %2528 = vmatprep.subr.bf16.mxu0 0
    %2529 = vmatpush1.bf16.msra.mxu0 0
    %2530 = vmatprep.subr.bf16.mxu0 0
    %2531 = vmatpush1.bf16.msra.mxu0 0
    %2532 = vmatprep.subr.bf16.mxu0 0
    %2533 = vmatpush1.bf16.msra.mxu0 0
    %2534 = vmatprep.subr.bf16.mxu0 0
    %2535 = vmatpush1.bf16.msra.mxu0 0
    %2536 = vmatprep.subr.bf16.mxu0 0
    %2537 = vmatpush1.bf16.msra.mxu0 0
    %2538 = vmatprep.mubr.bf16.mxu0 %v2135
    %2539 = vmatmul.mubr.bf16.gmra.mrb[0].mxu0 %v267
    %v2540 = vpop.f32.mrb[0].mxu0
    %v2541 = vadd.f32 %v2500, %v2540
    %v2542 = vpop.f32.mrb[0].mxu0
    %v2543 = vadd.f32 %v2502, %v2542
    %v2544 = vpop.f32.mrb[0].mxu0
    %v2545 = vpop.f32.mrb[0].mxu0
    %2546 = vdwg.mxu0
    %2547 = vmatprep.subr.bf16.mxu0 %v1544
    %2548 = vmatpush1.bf16.msra.mxu0 %v1543
    %2549 = vmatprep.subr.bf16.mxu0 %v1556
    %2550 = vmatpush1.bf16.msra.mxu0 %v1555
    %2551 = vmatprep.subr.bf16.mxu0 %v1568
    %2552 = vmatpush1.bf16.msra.mxu0 %v1567
    %2553 = vmatprep.subr.bf16.mxu0 %v1580
    %2554 = vmatpush1.bf16.msra.mxu0 %v1579
    %2555 = vmatprep.subr.bf16.mxu0 %v1592
    %2556 = vmatpush1.bf16.msra.mxu0 %v1591
    %2557 = vmatprep.subr.bf16.mxu0 %v1604
    %2558 = vmatpush1.bf16.msra.mxu0 %v1603
    %2559 = vmatprep.subr.bf16.mxu0 %v1616
    %2560 = vmatpush1.bf16.msra.mxu0 %v1615
    %2561 = vmatprep.subr.bf16.mxu0 %v1628
    %2562 = vmatpush1.bf16.msra.mxu0 %v1627
    %2563 = vmatprep.subr.bf16.mxu0 %v1640
    %2564 = vmatpush1.bf16.msra.mxu0 %v1639
    %2565 = vmatprep.subr.bf16.mxu0 %v1652
    %2566 = vmatpush1.bf16.msra.mxu0 %v1651
    %2567 = vmatprep.subr.bf16.mxu0 %v1664
    %2568 = vmatpush1.bf16.msra.mxu0 %v1663
    %2569 = vmatprep.subr.bf16.mxu0 %v1676
    %2570 = vmatpush1.bf16.msra.mxu0 %v1675
    %2571 = vmatprep.subr.bf16.mxu0 %v1688
    %2572 = vmatpush1.bf16.msra.mxu0 %v1687
    %2573 = vmatprep.subr.bf16.mxu0 %v1700
    %2574 = vmatpush1.bf16.msra.mxu0 %v1699
    %2575 = vmatprep.subr.bf16.mxu0 %v1712
    %2576 = vmatpush1.bf16.msra.mxu0 %v1711
    %2577 = vmatprep.subr.bf16.mxu0 %v1724
    %2578 = vmatpush1.bf16.msra.mxu0 %v1723
    %2579 = vmatprep.mubr.bf16.mxu0 %v266
    %2580 = vmatmul.mubr.bf16.gmra.mrb[0].mxu0 %v265
    %v2581 = vpop.f32.mrb[0].mxu0
    %v2582 = vadd.f32 %v616, %v2581
    %v2583 = vpop.f32.mrb[0].mxu0
    %v2584 = vadd.f32 %v620, %v2583
    %v2585 = vpop.f32.mrb[0].mxu0
    %v2586 = vpop.f32.mrb[0].mxu0
    %2587 = vdwg.mxu0
    %2588 = vmatprep.subr.bf16.mxu0 %v1736
    %2589 = vmatpush1.bf16.msra.mxu0 %v1735
    %2590 = vmatprep.subr.bf16.mxu0 %v1748
    %2591 = vmatpush1.bf16.msra.mxu0 %v1747
    %2592 = vmatprep.subr.bf16.mxu0 %v1760
    %2593 = vmatpush1.bf16.msra.mxu0 %v1759
    %2594 = vmatprep.subr.bf16.mxu0 %v1772
    %2595 = vmatpush1.bf16.msra.mxu0 %v1771
    %2596 = vmatprep.subr.bf16.mxu0 %v1784
    %2597 = vmatpush1.bf16.msra.mxu0 %v1783
    %2598 = vmatprep.subr.bf16.mxu0 %v1796
    %2599 = vmatpush1.bf16.msra.mxu0 %v1795
    %2600 = vmatprep.subr.bf16.mxu0 %v1808
    %2601 = vmatpush1.bf16.msra.mxu0 %v1807
    %2602 = vmatprep.subr.bf16.mxu0 %v1820
    %2603 = vmatpush1.bf16.msra.mxu0 %v1819
    %2604 = vmatprep.subr.bf16.mxu0 %v1832
    %2605 = vmatpush1.bf16.msra.mxu0 %v1831
    %2606 = vmatprep.subr.bf16.mxu0 0
    %2607 = vmatpush1.bf16.msra.mxu0 0
    %2608 = vmatprep.subr.bf16.mxu0 0
    %2609 = vmatpush1.bf16.msra.mxu0 0
    %2610 = vmatprep.subr.bf16.mxu0 0
    %2611 = vmatpush1.bf16.msra.mxu0 0
    %2612 = vmatprep.subr.bf16.mxu0 0
    %2613 = vmatpush1.bf16.msra.mxu0 0
    %2614 = vmatprep.subr.bf16.mxu0 0
    %2615 = vmatpush1.bf16.msra.mxu0 0
    %2616 = vmatprep.subr.bf16.mxu0 0
    %2617 = vmatpush1.bf16.msra.mxu0 0
    %2618 = vmatprep.subr.bf16.mxu0 0
    %2619 = vmatpush1.bf16.msra.mxu0 0
    %2620 = vmatprep.mubr.bf16.mxu0 %v2135
    %2621 = vmatmul.mubr.bf16.gmra.mrb[0].mxu0 %v267
    %v2622 = vpop.f32.mrb[0].mxu0
    %v2623 = vadd.f32 %v2582, %v2622
    %v2624 = vpop.f32.mrb[0].mxu0
    %v2625 = vadd.f32 %v2584, %v2624
    %v2626 = vpop.f32.mrb[0].mxu0
    %v2627 = vpop.f32.mrb[0].mxu0
    %2628 = vdwg.mxu0
    %v2629 = vmax.f32 %v2213, 0.0
    %v2630 = vmax.f32 %v2215, 0.0
    %v2631 = vmax.f32 %v2295, 0.0
    %v2632 = vmax.f32 %v2297, 0.0
    %v2633 = vmax.f32 %v2377, 0.0
    %v2634 = vmax.f32 %v2379, 0.0
    %v2635 = vmax.f32 %v2459, 0.0
    %v2636 = vmax.f32 %v2461, 0.0
    %v2637 = vmax.f32 %v2541, 0.0
    %v2638 = vmax.f32 %v2543, 0.0
    %v2639 = vmax.f32 %v2623, 0.0
    %v2640 = vmax.f32 %v2625, 0.0
    %v2641 = vpack.c.bf16 %v2629, %v2629
    %v2642 = vpack.c.bf16 %v2630, %v2630
    %v2643 = vpack.c.bf16 %v2631, %v2631
    %v2644 = vpack.c.bf16 %v2632, %v2632
    %v2645 = vpack.c.bf16 %v2633, %v2633
    %v2646 = vpack.c.bf16 %v2634, %v2634
    %v2647 = vpack.c.bf16 %v2635, %v2635
    %v2648 = vpack.c.bf16 %v2636, %v2636
    %v2649 = vpack.c.bf16 %v2637, %v2637
    %v2650 = vpack.c.bf16 %v2638, %v2638
    %v2651 = vpack.c.bf16 %v2639, %v2639
    %v2652 = vpack.c.bf16 %v2640, %v2640
    %v2653 = vld [vmem:[#allocation7] sm:$0xff]
    %v2654 = vld [vmem:[#allocation7 + $0x8] sm:$0xff]
    %v2655 = vld [vmem:[#allocation7 + $0x10] sm:$0xff]
    %v2656 = vld [vmem:[#allocation7 + $0x18] sm:$0xff]
    %v2657 = vld [vmem:[#allocation7 + $0x20] sm:$0xff]
    %v2658 = vld [vmem:[#allocation7 + $0x28] sm:$0xff]
    %v2659 = vld [vmem:[#allocation7 + $0x30] sm:$0xff]
    %v2660 = vld [vmem:[#allocation7 + $0x38] sm:$0xff]
    %v2661 = vld [vmem:[#allocation7 + $0x40] sm:$0xff]
    %v2662 = vld [vmem:[#allocation7 + $0x48] sm:$0xff]
    %v2663 = vld [vmem:[#allocation7 + $0x50] sm:$0xff]
    %v2664 = vld [vmem:[#allocation7 + $0x58] sm:$0xff]
    %v2665 = vld [vmem:[#allocation7 + $0x60] sm:$0xff]
    %v2666 = vld [vmem:[#allocation7 + $0x68] sm:$0xff]
    %v2667 = vld [vmem:[#allocation7 + $0x70] sm:$0xff]
    %v2668 = vld [vmem:[#allocation7 + $0x78] sm:$0xff]
    %v2669 = vld [vmem:[#allocation7 + $0x80] sm:$0xff]
    %v2670 = vld [vmem:[#allocation7 + $0x88] sm:$0xff]
    %v2671 = vld [vmem:[#allocation7 + $0x90] sm:$0xff]
    %v2672 = vld [vmem:[#allocation7 + $0x98] sm:$0xff]
    %v2673 = vld [vmem:[#allocation7 + $0xa0] sm:$0xff]
    %v2674 = vld [vmem:[#allocation7 + $0xa8] sm:$0xff]
    %v2675 = vld [vmem:[#allocation7 + $0xb0] sm:$0xff]
    %v2676 = vld [vmem:[#allocation7 + $0xb8] sm:$0xff]
    %v2677 = vld [vmem:[#allocation7 + $0xc0] sm:$0xff]
    %v2678 = vld [vmem:[#allocation7 + $0xc8] sm:$0xff]
    %v2679 = vld [vmem:[#allocation7 + $0xd0] sm:$0xff]
    %v2680 = vld [vmem:[#allocation7 + $0xd8] sm:$0xff]
    %v2681 = vld [vmem:[#allocation7 + $0xe0] sm:$0xff]
    %v2682 = vld [vmem:[#allocation7 + $0xe8] sm:$0xff]
    %v2683 = vld [vmem:[#allocation7 + $0xf0] sm:$0xff]
    %v2684 = vld [vmem:[#allocation7 + $0xf8] sm:$0xff]
    %v2685 = vld [vmem:[#allocation7 + $0x100] sm:$0xff]
    %v2686 = vld [vmem:[#allocation7 + $0x108] sm:$0xff]
    %v2687 = vld [vmem:[#allocation7 + $0x110] sm:$0xff]
    %v2688 = vld [vmem:[#allocation7 + $0x118] sm:$0xff]
    %v2689 = vld [vmem:[#allocation7 + $0x120] sm:$0xff]
    %v2690 = vld [vmem:[#allocation7 + $0x128] sm:$0xff]
    %v2691 = vld [vmem:[#allocation7 + $0x130] sm:$0xff]
    %v2692 = vld [vmem:[#allocation7 + $0x138] sm:$0xff]
    %v2693 = vld [vmem:[#allocation7 + $0x140] sm:$0xff]
    %v2694 = vld [vmem:[#allocation7 + $0x148] sm:$0xff]
    %v2695 = vld [vmem:[#allocation7 + $0x150] sm:$0xff]
    %v2696 = vld [vmem:[#allocation7 + $0x158] sm:$0xff]
    %v2697 = vld [vmem:[#allocation7 + $0x160] sm:$0xff]
    %v2698 = vld [vmem:[#allocation7 + $0x168] sm:$0xff]
    %v2699 = vld [vmem:[#allocation7 + $0x170] sm:$0xff]
    %v2700 = vld [vmem:[#allocation7 + $0x178] sm:$0xff]
    %v2701 = vld [vmem:[#allocation7 + $0x180] sm:$0xff]
    %v2702 = vld [vmem:[#allocation7 + $0x188] sm:$0xff]
    %v2703 = vld [vmem:[#allocation7 + $0x190] sm:$0xff]
    %v2704 = vld [vmem:[#allocation7 + $0x198] sm:$0xff]
    %v2705 = vld [vmem:[#allocation7 + $0x1a0] sm:$0xff]
    %v2706 = vld [vmem:[#allocation7 + $0x1a8] sm:$0xff]
    %v2707 = vld [vmem:[#allocation7 + $0x1b0] sm:$0xff]
    %v2708 = vld [vmem:[#allocation7 + $0x1b8] sm:$0xff]
    %v2709 = vld [vmem:[#allocation7 + $0x1c0] sm:$0xff]
    %v2710 = vld [vmem:[#allocation7 + $0x1c8] sm:$0xff]
    %v2711 = vld [vmem:[#allocation7 + $0x1d0] sm:$0xff]
    %v2712 = vld [vmem:[#allocation7 + $0x1d8] sm:$0xff]
    %v2713 = vld [vmem:[#allocation7 + $0x1e0] sm:$0xff]
    %v2714 = vld [vmem:[#allocation7 + $0x1e8] sm:$0xff]
    %v2715 = vld [vmem:[#allocation7 + $0x1f0] sm:$0xff]
    %v2716 = vld [vmem:[#allocation7 + $0x1f8] sm:$0xff]
    %v2717 = vld [vmem:[#allocation7 + $0x200] sm:$0xff]
    %v2718 = vld [vmem:[#allocation7 + $0x208] sm:$0xff]
    %v2719 = vld [vmem:[#allocation7 + $0x210] sm:$0xff]
    %v2720 = vld [vmem:[#allocation7 + $0x218] sm:$0xff]
    %v2721 = vld [vmem:[#allocation7 + $0x220] sm:$0xff]
    %v2722 = vld [vmem:[#allocation7 + $0x228] sm:$0xff]
    %v2723 = vld [vmem:[#allocation7 + $0x230] sm:$0xff]
    %v2724 = vld [vmem:[#allocation7 + $0x238] sm:$0xff]
    %v2725 = vld [vmem:[#allocation7 + $0x240] sm:$0xff]
    %v2726 = vld [vmem:[#allocation7 + $0x248] sm:$0xff]
    %v2727 = vld [vmem:[#allocation7 + $0x250] sm:$0xff]
    %v2728 = vld [vmem:[#allocation7 + $0x258] sm:$0xff]
    %v2729 = vld [vmem:[#allocation7 + $0x260] sm:$0xff]
    %v2730 = vld [vmem:[#allocation7 + $0x268] sm:$0xff]
    %v2731 = vld [vmem:[#allocation7 + $0x270] sm:$0xff]
    %v2732 = vld [vmem:[#allocation7 + $0x278] sm:$0xff]
    %v2733 = vld [vmem:[#allocation7 + $0x280] sm:$0xff]
    %v2734 = vld [vmem:[#allocation7 + $0x288] sm:$0xff]
    %v2735 = vld [vmem:[#allocation7 + $0x290] sm:$0xff]
    %v2736 = vld [vmem:[#allocation7 + $0x298] sm:$0xff]
    %v2737 = vld [vmem:[#allocation7 + $0x2a0] sm:$0xff]
    %v2738 = vld [vmem:[#allocation7 + $0x2a8] sm:$0xff]
    %v2739 = vld [vmem:[#allocation7 + $0x2b0] sm:$0xff]
    %v2740 = vld [vmem:[#allocation7 + $0x2b8] sm:$0xff]
    %v2741 = vld [vmem:[#allocation7 + $0x2c0] sm:$0xff]
    %v2742 = vld [vmem:[#allocation7 + $0x2c8] sm:$0xff]
    %v2743 = vld [vmem:[#allocation7 + $0x2d0] sm:$0xff]
    %v2744 = vld [vmem:[#allocation7 + $0x2d8] sm:$0xff]
    %v2745 = vld [vmem:[#allocation7 + $0x2e0] sm:$0xff]
    %v2746 = vld [vmem:[#allocation7 + $0x2e8] sm:$0xff]
    %v2747 = vld [vmem:[#allocation7 + $0x2f0] sm:$0xff]
    %v2748 = vld [vmem:[#allocation7 + $0x2f8] sm:$0xff]
    %v2749 = vld [vmem:[#allocation7 + $0x300] sm:$0xff]
    %v2750 = vld [vmem:[#allocation7 + $0x308] sm:$0xff]
    %v2751 = vld [vmem:[#allocation7 + $0x310] sm:$0xff]
    %v2752 = vld [vmem:[#allocation7 + $0x318] sm:$0xff]
    %v2753 = vld [vmem:[#allocation7 + $0x320] sm:$0xff]
    %v2754 = vld [vmem:[#allocation7 + $0x328] sm:$0xff]
    %v2755 = vld [vmem:[#allocation7 + $0x330] sm:$0xff]
    %v2756 = vld [vmem:[#allocation7 + $0x338] sm:$0xff]
    %v2757 = vld [vmem:[#allocation7 + $0x340] sm:$0xff]
    %v2758 = vld [vmem:[#allocation7 + $0x348] sm:$0xff]
    %v2759 = vld [vmem:[#allocation7 + $0x350] sm:$0xff]
    %v2760 = vld [vmem:[#allocation7 + $0x358] sm:$0xff]
    %v2761 = vld [vmem:[#allocation7 + $0x360] sm:$0xff]
    %v2762 = vld [vmem:[#allocation7 + $0x368] sm:$0xff]
    %v2763 = vld [vmem:[#allocation7 + $0x370] sm:$0xff]
    %v2764 = vld [vmem:[#allocation7 + $0x378] sm:$0xff]
    %v2765 = vld [vmem:[#allocation7 + $0x380] sm:$0xff]
    %v2766 = vld [vmem:[#allocation7 + $0x388] sm:$0xff]
    %v2767 = vld [vmem:[#allocation7 + $0x390] sm:$0xff]
    %v2768 = vld [vmem:[#allocation7 + $0x398] sm:$0xff]
    %v2769 = vld [vmem:[#allocation7 + $0x3a0] sm:$0xff]
    %v2770 = vld [vmem:[#allocation7 + $0x3a8] sm:$0xff]
    %v2771 = vld [vmem:[#allocation7 + $0x3b0] sm:$0xff]
    %v2772 = vld [vmem:[#allocation7 + $0x3b8] sm:$0xff]
    %v2773 = vld [vmem:[#allocation7 + $0x3c0] sm:$0xff]
    %v2774 = vld [vmem:[#allocation7 + $0x3c8] sm:$0xff]
    %v2775 = vld [vmem:[#allocation7 + $0x3d0] sm:$0xff]
    %v2776 = vld [vmem:[#allocation7 + $0x3d8] sm:$0xff]
    %v2777 = vld [vmem:[#allocation7 + $0x3e0] sm:$0xff]
    %v2778 = vld [vmem:[#allocation7 + $0x3e8] sm:$0xff]
    %v2779 = vld [vmem:[#allocation7 + $0x3f0] sm:$0xff]
    %v2780 = vld [vmem:[#allocation7 + $0x3f8] sm:$0xff]
    %v2781 = vld [vmem:[#allocation7 + $0x400] sm:$0xff]
    %v2782 = vld [vmem:[#allocation7 + $0x408] sm:$0xff]
    %v2783 = vld [vmem:[#allocation7 + $0x410] sm:$0xff]
    %v2784 = vld [vmem:[#allocation7 + $0x418] sm:$0xff]
    %v2785 = vld [vmem:[#allocation7 + $0x420] sm:$0xff]
    %v2786 = vld [vmem:[#allocation7 + $0x428] sm:$0xff]
    %v2787 = vld [vmem:[#allocation7 + $0x430] sm:$0xff]
    %v2788 = vld [vmem:[#allocation7 + $0x438] sm:$0xff]
    %v2789 = vld [vmem:[#allocation7 + $0x440] sm:$0xff]
    %v2790 = vld [vmem:[#allocation7 + $0x448] sm:$0xff]
    %v2791 = vld [vmem:[#allocation7 + $0x450] sm:$0xff]
    %v2792 = vld [vmem:[#allocation7 + $0x458] sm:$0xff]
    %v2793 = vld [vmem:[#allocation7 + $0x460] sm:$0xff]
    %v2794 = vld [vmem:[#allocation7 + $0x468] sm:$0xff]
    %v2795 = vld [vmem:[#allocation7 + $0x470] sm:$0xff]
    %v2796 = vld [vmem:[#allocation7 + $0x478] sm:$0xff]
    %v2797 = vld [vmem:[#allocation7 + $0x480] sm:$0xff]
    %v2798 = vld [vmem:[#allocation7 + $0x488] sm:$0xff]
    %v2799 = vld [vmem:[#allocation7 + $0x490] sm:$0xff]
    %v2800 = vld [vmem:[#allocation7 + $0x498] sm:$0xff]
    %v2801 = vld [vmem:[#allocation7 + $0x4a0] sm:$0xff]
    %v2802 = vld [vmem:[#allocation7 + $0x4a8] sm:$0xff]
    %v2803 = vld [vmem:[#allocation7 + $0x4b0] sm:$0xff]
    %v2804 = vld [vmem:[#allocation7 + $0x4b8] sm:$0xff]
    %v2805 = vld [vmem:[#allocation7 + $0x4c0] sm:$0xff]
    %v2806 = vld [vmem:[#allocation7 + $0x4c8] sm:$0xff]
    %v2807 = vld [vmem:[#allocation7 + $0x4d0] sm:$0xff]
    %v2808 = vld [vmem:[#allocation7 + $0x4d8] sm:$0xff]
    %v2809 = vld [vmem:[#allocation7 + $0x4e0] sm:$0xff]
    %v2810 = vld [vmem:[#allocation7 + $0x4e8] sm:$0xff]
    %v2811 = vld [vmem:[#allocation7 + $0x4f0] sm:$0xff]
    %v2812 = vld [vmem:[#allocation7 + $0x4f8] sm:$0xff]
    %v2813 = vld [vmem:[#allocation7 + $0x500] sm:$0xff]
    %v2814 = vld [vmem:[#allocation7 + $0x508] sm:$0xff]
    %v2815 = vld [vmem:[#allocation7 + $0x510] sm:$0xff]
    %v2816 = vld [vmem:[#allocation7 + $0x518] sm:$0xff]
    %v2817 = vld [vmem:[#allocation7 + $0x520] sm:$0xff]
    %v2818 = vld [vmem:[#allocation7 + $0x528] sm:$0xff]
    %v2819 = vld [vmem:[#allocation7 + $0x530] sm:$0xff]
    %v2820 = vld [vmem:[#allocation7 + $0x538] sm:$0xff]
    %v2821 = vld [vmem:[#allocation7 + $0x540] sm:$0xff]
    %v2822 = vld [vmem:[#allocation7 + $0x548] sm:$0xff]
    %v2823 = vld [vmem:[#allocation7 + $0x550] sm:$0xff]
    %v2824 = vld [vmem:[#allocation7 + $0x558] sm:$0xff]
    %v2825 = vld [vmem:[#allocation7 + $0x560] sm:$0xff]
    %v2826 = vld [vmem:[#allocation7 + $0x568] sm:$0xff]
    %v2827 = vld [vmem:[#allocation7 + $0x570] sm:$0xff]
    %v2828 = vld [vmem:[#allocation7 + $0x578] sm:$0xff]
    %v2829 = vld [vmem:[#allocation7 + $0x580] sm:$0xff]
    %v2830 = vld [vmem:[#allocation7 + $0x588] sm:$0xff]
    %v2831 = vld [vmem:[#allocation7 + $0x590] sm:$0xff]
    %v2832 = vld [vmem:[#allocation7 + $0x598] sm:$0xff]
    %v2833 = vld [vmem:[#allocation7 + $0x5a0] sm:$0xff]
    %v2834 = vld [vmem:[#allocation7 + $0x5a8] sm:$0xff]
    %v2835 = vld [vmem:[#allocation7 + $0x5b0] sm:$0xff]
    %v2836 = vld [vmem:[#allocation7 + $0x5b8] sm:$0xff]
    %v2837 = vld [vmem:[#allocation7 + $0x5c0] sm:$0xff]
    %v2838 = vld [vmem:[#allocation7 + $0x5c8] sm:$0xff]
    %v2839 = vld [vmem:[#allocation7 + $0x5d0] sm:$0xff]
    %v2840 = vld [vmem:[#allocation7 + $0x5d8] sm:$0xff]
    %v2841 = vld [vmem:[#allocation7 + $0x5e0] sm:$0xff]
    %v2842 = vld [vmem:[#allocation7 + $0x5e8] sm:$0xff]
    %v2843 = vld [vmem:[#allocation7 + $0x5f0] sm:$0xff]
    %v2844 = vld [vmem:[#allocation7 + $0x5f8] sm:$0xff]
    %v2845 = vld [vmem:[#allocation9] sm:$0x3]
    %v2847 = vlaneseq
    %v2848 = vshrl.u32 %v2847, 7
    %v2849 = vsub.s32 0, %v2848
    %v2850 = vrot.slane %v2845, %v2849
    %v2851 = vlaneseq
    %v2852 = vshrl.u32 %v2851, 7
    %v2853 = vsub.s32 1, %v2852
    %v2854 = vrot.slane %v2845, %v2853
    %v3049 = vunpack.c.l.b16 %v2653
    %v3050 = vunpack.c.h.b16 %v2653
    %v3051 = vunpack.c.l.b16 %v2654
    %v3052 = vunpack.c.h.b16 %v2654
    %v3053 = vunpack.c.l.b16 %v2655
    %v3054 = vunpack.c.h.b16 %v2655
    %v3055 = vunpack.c.l.b16 %v2656
    %v3056 = vunpack.c.h.b16 %v2656
    %v3057 = vunpack.c.l.b16 %v2657
    %v3058 = vunpack.c.h.b16 %v2657
    %v3059 = vunpack.c.l.b16 %v2658
    %v3060 = vunpack.c.h.b16 %v2658
    %v3061 = vunpack.c.l.b16 %v2659
    %v3062 = vunpack.c.h.b16 %v2659
    %v3063 = vunpack.c.l.b16 %v2660
    %v3064 = vunpack.c.h.b16 %v2660
    %v3065 = vunpack.c.l.b16 %v2661
    %v3066 = vunpack.c.h.b16 %v2661
    %v3067 = vunpack.c.l.b16 %v2662
    %v3068 = vunpack.c.h.b16 %v2662
    %v3069 = vunpack.c.l.b16 %v2663
    %v3070 = vunpack.c.h.b16 %v2663
    %v3071 = vunpack.c.l.b16 %v2664
    %v3072 = vunpack.c.h.b16 %v2664
    %v3073 = vunpack.c.l.b16 %v2665
    %v3074 = vunpack.c.h.b16 %v2665
    %v3075 = vunpack.c.l.b16 %v2666
    %v3076 = vunpack.c.h.b16 %v2666
    %v3077 = vunpack.c.l.b16 %v2667
    %v3078 = vunpack.c.h.b16 %v2667
    %v3079 = vunpack.c.l.b16 %v2668
    %v3080 = vunpack.c.h.b16 %v2668
    %v3081 = vunpack.c.l.b16 %v2669
    %v3082 = vunpack.c.h.b16 %v2669
    %v3083 = vunpack.c.l.b16 %v2670
    %v3084 = vunpack.c.h.b16 %v2670
    %v3085 = vunpack.c.l.b16 %v2671
    %v3086 = vunpack.c.h.b16 %v2671
    %v3087 = vunpack.c.l.b16 %v2672
    %v3088 = vunpack.c.h.b16 %v2672
    %v3089 = vunpack.c.l.b16 %v2673
    %v3090 = vunpack.c.h.b16 %v2673
    %v3091 = vunpack.c.l.b16 %v2674
    %v3092 = vunpack.c.h.b16 %v2674
    %v3093 = vunpack.c.l.b16 %v2675
    %v3094 = vunpack.c.h.b16 %v2675
    %v3095 = vunpack.c.l.b16 %v2676
    %v3096 = vunpack.c.h.b16 %v2676
    %v3097 = vunpack.c.l.b16 %v2677
    %v3098 = vunpack.c.h.b16 %v2677
    %v3099 = vunpack.c.l.b16 %v2678
    %v3100 = vunpack.c.h.b16 %v2678
    %v3101 = vunpack.c.l.b16 %v2679
    %v3102 = vunpack.c.h.b16 %v2679
    %v3103 = vunpack.c.l.b16 %v2680
    %v3104 = vunpack.c.h.b16 %v2680
    %v3105 = vunpack.c.l.b16 %v2681
    %v3106 = vunpack.c.h.b16 %v2681
    %v3107 = vunpack.c.l.b16 %v2682
    %v3108 = vunpack.c.h.b16 %v2682
    %v3109 = vunpack.c.l.b16 %v2683
    %v3110 = vunpack.c.h.b16 %v2683
    %v3111 = vunpack.c.l.b16 %v2684
    %v3112 = vunpack.c.h.b16 %v2684
    %v3113 = vunpack.c.l.b16 %v2685
    %v3114 = vunpack.c.h.b16 %v2685
    %v3115 = vunpack.c.l.b16 %v2686
    %v3116 = vunpack.c.h.b16 %v2686
    %v3117 = vunpack.c.l.b16 %v2687
    %v3118 = vunpack.c.h.b16 %v2687
    %v3119 = vunpack.c.l.b16 %v2688
    %v3120 = vunpack.c.h.b16 %v2688
    %v3121 = vunpack.c.l.b16 %v2689
    %v3122 = vunpack.c.h.b16 %v2689
    %v3123 = vunpack.c.l.b16 %v2690
    %v3124 = vunpack.c.h.b16 %v2690
    %v3125 = vunpack.c.l.b16 %v2691
    %v3126 = vunpack.c.h.b16 %v2691
    %v3127 = vunpack.c.l.b16 %v2692
    %v3128 = vunpack.c.h.b16 %v2692
    %v3129 = vunpack.c.l.b16 %v2693
    %v3130 = vunpack.c.h.b16 %v2693
    %v3131 = vunpack.c.l.b16 %v2694
    %v3132 = vunpack.c.h.b16 %v2694
    %v3133 = vunpack.c.l.b16 %v2695
    %v3134 = vunpack.c.h.b16 %v2695
    %v3135 = vunpack.c.l.b16 %v2696
    %v3136 = vunpack.c.h.b16 %v2696
    %v3137 = vunpack.c.l.b16 %v2697
    %v3138 = vunpack.c.h.b16 %v2697
    %v3139 = vunpack.c.l.b16 %v2698
    %v3140 = vunpack.c.h.b16 %v2698
    %v3141 = vunpack.c.l.b16 %v2699
    %v3142 = vunpack.c.h.b16 %v2699
    %v3143 = vunpack.c.l.b16 %v2700
    %v3144 = vunpack.c.h.b16 %v2700
    %v3145 = vunpack.c.l.b16 %v2701
    %v3146 = vunpack.c.h.b16 %v2701
    %v3147 = vunpack.c.l.b16 %v2702
    %v3148 = vunpack.c.h.b16 %v2702
    %v3149 = vunpack.c.l.b16 %v2703
    %v3150 = vunpack.c.h.b16 %v2703
    %v3151 = vunpack.c.l.b16 %v2704
    %v3152 = vunpack.c.h.b16 %v2704
    %v3153 = vunpack.c.l.b16 %v2705
    %v3154 = vunpack.c.h.b16 %v2705
    %v3155 = vunpack.c.l.b16 %v2706
    %v3156 = vunpack.c.h.b16 %v2706
    %v3157 = vunpack.c.l.b16 %v2707
    %v3158 = vunpack.c.h.b16 %v2707
    %v3159 = vunpack.c.l.b16 %v2708
    %v3160 = vunpack.c.h.b16 %v2708
    %v3161 = vunpack.c.l.b16 %v2709
    %v3162 = vunpack.c.h.b16 %v2709
    %v3163 = vunpack.c.l.b16 %v2710
    %v3164 = vunpack.c.h.b16 %v2710
    %v3165 = vunpack.c.l.b16 %v2711
    %v3166 = vunpack.c.h.b16 %v2711
    %v3167 = vunpack.c.l.b16 %v2712
    %v3168 = vunpack.c.h.b16 %v2712
    %v3169 = vunpack.c.l.b16 %v2713
    %v3170 = vunpack.c.h.b16 %v2713
    %v3171 = vunpack.c.l.b16 %v2714
    %v3172 = vunpack.c.h.b16 %v2714
    %v3173 = vunpack.c.l.b16 %v2715
    %v3174 = vunpack.c.h.b16 %v2715
    %v3175 = vunpack.c.l.b16 %v2716
    %v3176 = vunpack.c.h.b16 %v2716
    %v3177 = vunpack.c.l.b16 %v2717
    %v3178 = vunpack.c.h.b16 %v2717
    %v3179 = vunpack.c.l.b16 %v2718
    %v3180 = vunpack.c.h.b16 %v2718
    %v3181 = vunpack.c.l.b16 %v2719
    %v3182 = vunpack.c.h.b16 %v2719
    %v3183 = vunpack.c.l.b16 %v2720
    %v3184 = vunpack.c.h.b16 %v2720
    %v3185 = vunpack.c.l.b16 %v2721
    %v3186 = vunpack.c.h.b16 %v2721
    %v3187 = vunpack.c.l.b16 %v2722
    %v3188 = vunpack.c.h.b16 %v2722
    %v3189 = vunpack.c.l.b16 %v2723
    %v3190 = vunpack.c.h.b16 %v2723
    %v3191 = vunpack.c.l.b16 %v2724
    %v3192 = vunpack.c.h.b16 %v2724
    %v3193 = vunpack.c.l.b16 %v2725
    %v3194 = vunpack.c.h.b16 %v2725
    %v3195 = vunpack.c.l.b16 %v2726
    %v3196 = vunpack.c.h.b16 %v2726
    %v3197 = vunpack.c.l.b16 %v2727
    %v3198 = vunpack.c.h.b16 %v2727
    %v3199 = vunpack.c.l.b16 %v2728
    %v3200 = vunpack.c.h.b16 %v2728
    %v3201 = vunpack.c.l.b16 %v2729
    %v3202 = vunpack.c.h.b16 %v2729
    %v3203 = vunpack.c.l.b16 %v2730
    %v3204 = vunpack.c.h.b16 %v2730
    %v3205 = vunpack.c.l.b16 %v2731
    %v3206 = vunpack.c.h.b16 %v2731
    %v3207 = vunpack.c.l.b16 %v2732
    %v3208 = vunpack.c.h.b16 %v2732
    %v3209 = vunpack.c.l.b16 %v2733
    %v3210 = vunpack.c.h.b16 %v2733
    %v3211 = vunpack.c.l.b16 %v2734
    %v3212 = vunpack.c.h.b16 %v2734
    %v3213 = vunpack.c.l.b16 %v2735
    %v3214 = vunpack.c.h.b16 %v2735
    %v3215 = vunpack.c.l.b16 %v2736
    %v3216 = vunpack.c.h.b16 %v2736
    %v3217 = vunpack.c.l.b16 %v2737
    %v3218 = vunpack.c.h.b16 %v2737
    %v3219 = vunpack.c.l.b16 %v2738
    %v3220 = vunpack.c.h.b16 %v2738
    %v3221 = vunpack.c.l.b16 %v2739
    %v3222 = vunpack.c.h.b16 %v2739
    %v3223 = vunpack.c.l.b16 %v2740
    %v3224 = vunpack.c.h.b16 %v2740
    %v3225 = vunpack.c.l.b16 %v2741
    %v3226 = vunpack.c.h.b16 %v2741
    %v3227 = vunpack.c.l.b16 %v2742
    %v3228 = vunpack.c.h.b16 %v2742
    %v3229 = vunpack.c.l.b16 %v2743
    %v3230 = vunpack.c.h.b16 %v2743
    %v3231 = vunpack.c.l.b16 %v2744
    %v3232 = vunpack.c.h.b16 %v2744
    %v3233 = vunpack.c.l.b16 %v2745
    %v3234 = vunpack.c.h.b16 %v2745
    %v3235 = vunpack.c.l.b16 %v2746
    %v3236 = vunpack.c.h.b16 %v2746
    %v3237 = vunpack.c.l.b16 %v2747
    %v3238 = vunpack.c.h.b16 %v2747
    %v3239 = vunpack.c.l.b16 %v2748
    %v3240 = vunpack.c.h.b16 %v2748
    %v3241 = vunpack.c.l.b16 %v2749
    %v3242 = vunpack.c.h.b16 %v2749
    %v3243 = vunpack.c.l.b16 %v2750
    %v3244 = vunpack.c.h.b16 %v2750
    %v3245 = vunpack.c.l.b16 %v2751
    %v3246 = vunpack.c.h.b16 %v2751
    %v3247 = vunpack.c.l.b16 %v2752
    %v3248 = vunpack.c.h.b16 %v2752
    %v3249 = vunpack.c.l.b16 %v2753
    %v3250 = vunpack.c.h.b16 %v2753
    %v3251 = vunpack.c.l.b16 %v2754
    %v3252 = vunpack.c.h.b16 %v2754
    %v3253 = vunpack.c.l.b16 %v2755
    %v3254 = vunpack.c.h.b16 %v2755
    %v3255 = vunpack.c.l.b16 %v2756
    %v3256 = vunpack.c.h.b16 %v2756
    %v3257 = vunpack.c.l.b16 %v2757
    %v3258 = vunpack.c.h.b16 %v2757
    %v3259 = vunpack.c.l.b16 %v2758
    %v3260 = vunpack.c.h.b16 %v2758
    %v3261 = vunpack.c.l.b16 %v2759
    %v3262 = vunpack.c.h.b16 %v2759
    %v3263 = vunpack.c.l.b16 %v2760
    %v3264 = vunpack.c.h.b16 %v2760
    %v3265 = vunpack.c.l.b16 %v2761
    %v3266 = vunpack.c.h.b16 %v2761
    %v3267 = vunpack.c.l.b16 %v2762
    %v3268 = vunpack.c.h.b16 %v2762
    %v3269 = vunpack.c.l.b16 %v2763
    %v3270 = vunpack.c.h.b16 %v2763
    %v3271 = vunpack.c.l.b16 %v2764
    %v3272 = vunpack.c.h.b16 %v2764
    %v3273 = vunpack.c.l.b16 %v2765
    %v3274 = vunpack.c.h.b16 %v2765
    %v3275 = vunpack.c.l.b16 %v2766
    %v3276 = vunpack.c.h.b16 %v2766
    %v3277 = vunpack.c.l.b16 %v2767
    %v3278 = vunpack.c.h.b16 %v2767
    %v3279 = vunpack.c.l.b16 %v2768
    %v3280 = vunpack.c.h.b16 %v2768
    %v3281 = vunpack.c.l.b16 %v2769
    %v3282 = vunpack.c.h.b16 %v2769
    %v3283 = vunpack.c.l.b16 %v2770
    %v3284 = vunpack.c.h.b16 %v2770
    %v3285 = vunpack.c.l.b16 %v2771
    %v3286 = vunpack.c.h.b16 %v2771
    %v3287 = vunpack.c.l.b16 %v2772
    %v3288 = vunpack.c.h.b16 %v2772
    %v3289 = vunpack.c.l.b16 %v2773
    %v3290 = vunpack.c.h.b16 %v2773
    %v3291 = vunpack.c.l.b16 %v2774
    %v3292 = vunpack.c.h.b16 %v2774
    %v3293 = vunpack.c.l.b16 %v2775
    %v3294 = vunpack.c.h.b16 %v2775
    %v3295 = vunpack.c.l.b16 %v2776
    %v3296 = vunpack.c.h.b16 %v2776
    %v3297 = vunpack.c.l.b16 %v2777
    %v3298 = vunpack.c.h.b16 %v2777
    %v3299 = vunpack.c.l.b16 %v2778
    %v3300 = vunpack.c.h.b16 %v2778
    %v3301 = vunpack.c.l.b16 %v2779
    %v3302 = vunpack.c.h.b16 %v2779
    %v3303 = vunpack.c.l.b16 %v2780
    %v3304 = vunpack.c.h.b16 %v2780
    %v3305 = vunpack.c.l.b16 %v2781
    %v3306 = vunpack.c.h.b16 %v2781
    %v3307 = vunpack.c.l.b16 %v2782
    %v3308 = vunpack.c.h.b16 %v2782
    %v3309 = vunpack.c.l.b16 %v2783
    %v3310 = vunpack.c.h.b16 %v2783
    %v3311 = vunpack.c.l.b16 %v2784
    %v3312 = vunpack.c.h.b16 %v2784
    %v3313 = vunpack.c.l.b16 %v2785
    %v3314 = vunpack.c.h.b16 %v2785
    %v3315 = vunpack.c.l.b16 %v2786
    %v3316 = vunpack.c.h.b16 %v2786
    %v3317 = vunpack.c.l.b16 %v2787
    %v3318 = vunpack.c.h.b16 %v2787
    %v3319 = vunpack.c.l.b16 %v2788
    %v3320 = vunpack.c.h.b16 %v2788
    %v3321 = vunpack.c.l.b16 %v2789
    %v3322 = vunpack.c.h.b16 %v2789
    %v3323 = vunpack.c.l.b16 %v2790
    %v3324 = vunpack.c.h.b16 %v2790
    %v3325 = vunpack.c.l.b16 %v2791
    %v3326 = vunpack.c.h.b16 %v2791
    %v3327 = vunpack.c.l.b16 %v2792
    %v3328 = vunpack.c.h.b16 %v2792
    %v3329 = vunpack.c.l.b16 %v2793
    %v3330 = vunpack.c.h.b16 %v2793
    %v3331 = vunpack.c.l.b16 %v2794
    %v3332 = vunpack.c.h.b16 %v2794
    %v3333 = vunpack.c.l.b16 %v2795
    %v3334 = vunpack.c.h.b16 %v2795
    %v3335 = vunpack.c.l.b16 %v2796
    %v3336 = vunpack.c.h.b16 %v2796
    %v3337 = vunpack.c.l.b16 %v2797
    %v3338 = vunpack.c.h.b16 %v2797
    %v3339 = vunpack.c.l.b16 %v2798
    %v3340 = vunpack.c.h.b16 %v2798
    %v3341 = vunpack.c.l.b16 %v2799
    %v3342 = vunpack.c.h.b16 %v2799
    %v3343 = vunpack.c.l.b16 %v2800
    %v3344 = vunpack.c.h.b16 %v2800
    %v3345 = vunpack.c.l.b16 %v2801
    %v3346 = vunpack.c.h.b16 %v2801
    %v3347 = vunpack.c.l.b16 %v2802
    %v3348 = vunpack.c.h.b16 %v2802
    %v3349 = vunpack.c.l.b16 %v2803
    %v3350 = vunpack.c.h.b16 %v2803
    %v3351 = vunpack.c.l.b16 %v2804
    %v3352 = vunpack.c.h.b16 %v2804
    %v3353 = vunpack.c.l.b16 %v2805
    %v3354 = vunpack.c.h.b16 %v2805
    %v3355 = vunpack.c.l.b16 %v2806
    %v3356 = vunpack.c.h.b16 %v2806
    %v3357 = vunpack.c.l.b16 %v2807
    %v3358 = vunpack.c.h.b16 %v2807
    %v3359 = vunpack.c.l.b16 %v2808
    %v3360 = vunpack.c.h.b16 %v2808
    %v3361 = vunpack.c.l.b16 %v2809
    %v3362 = vunpack.c.h.b16 %v2809
    %v3363 = vunpack.c.l.b16 %v2810
    %v3364 = vunpack.c.h.b16 %v2810
    %v3365 = vunpack.c.l.b16 %v2811
    %v3366 = vunpack.c.h.b16 %v2811
    %v3367 = vunpack.c.l.b16 %v2812
    %v3368 = vunpack.c.h.b16 %v2812
    %v3369 = vunpack.c.l.b16 %v2813
    %v3370 = vunpack.c.h.b16 %v2813
    %v3371 = vunpack.c.l.b16 %v2814
    %v3372 = vunpack.c.h.b16 %v2814
    %v3373 = vunpack.c.l.b16 %v2815
    %v3374 = vunpack.c.h.b16 %v2815
    %v3375 = vunpack.c.l.b16 %v2816
    %v3376 = vunpack.c.h.b16 %v2816
    %v3377 = vunpack.c.l.b16 %v2817
    %v3378 = vunpack.c.h.b16 %v2817
    %v3379 = vunpack.c.l.b16 %v2818
    %v3380 = vunpack.c.h.b16 %v2818
    %v3381 = vunpack.c.l.b16 %v2819
    %v3382 = vunpack.c.h.b16 %v2819
    %v3383 = vunpack.c.l.b16 %v2820
    %v3384 = vunpack.c.h.b16 %v2820
    %v3385 = vunpack.c.l.b16 %v2821
    %v3386 = vunpack.c.h.b16 %v2821
    %v3387 = vunpack.c.l.b16 %v2822
    %v3388 = vunpack.c.h.b16 %v2822
    %v3389 = vunpack.c.l.b16 %v2823
    %v3390 = vunpack.c.h.b16 %v2823
    %v3391 = vunpack.c.l.b16 %v2824
    %v3392 = vunpack.c.h.b16 %v2824
    %v3393 = vunpack.c.l.b16 %v2825
    %v3394 = vunpack.c.h.b16 %v2825
    %v3395 = vunpack.c.l.b16 %v2826
    %v3396 = vunpack.c.h.b16 %v2826
    %v3397 = vunpack.c.l.b16 %v2827
    %v3398 = vunpack.c.h.b16 %v2827
    %v3399 = vunpack.c.l.b16 %v2828
    %v3400 = vunpack.c.h.b16 %v2828
    %v3401 = vunpack.c.l.b16 %v2829
    %v3402 = vunpack.c.h.b16 %v2829
    %v3403 = vunpack.c.l.b16 %v2830
    %v3404 = vunpack.c.h.b16 %v2830
    %v3405 = vunpack.c.l.b16 %v2831
    %v3406 = vunpack.c.h.b16 %v2831
    %v3407 = vunpack.c.l.b16 %v2832
    %v3408 = vunpack.c.h.b16 %v2832
    %v3409 = vunpack.c.l.b16 %v2833
    %v3410 = vunpack.c.h.b16 %v2833
    %v3411 = vunpack.c.l.b16 %v2834
    %v3412 = vunpack.c.h.b16 %v2834
    %v3413 = vunpack.c.l.b16 %v2835
    %v3414 = vunpack.c.h.b16 %v2835
    %v3415 = vunpack.c.l.b16 %v2836
    %v3416 = vunpack.c.h.b16 %v2836
    %v3417 = vunpack.c.l.b16 %v2837
    %v3418 = vunpack.c.h.b16 %v2837
    %v3419 = vunpack.c.l.b16 %v2838
    %v3420 = vunpack.c.h.b16 %v2838
    %v3421 = vunpack.c.l.b16 %v2839
    %v3422 = vunpack.c.h.b16 %v2839
    %v3423 = vunpack.c.l.b16 %v2840
    %v3424 = vunpack.c.h.b16 %v2840
    %v3425 = vunpack.c.l.b16 %v2841
    %v3426 = vunpack.c.h.b16 %v2841
    %v3427 = vunpack.c.l.b16 %v2842
    %v3428 = vunpack.c.h.b16 %v2842
    %v3429 = vunpack.c.l.b16 %v2843
    %v3430 = vunpack.c.h.b16 %v2843
    %v3431 = vunpack.c.l.b16 %v2844
    %v3432 = vunpack.c.h.b16 %v2844
    %v3433 = vpack.c.b16 %v3051, %v3049
    %v3434 = vpack.c.b16 %v3052, %v3050
    %v3435 = vpack.c.b16 %v3055, %v3053
    %v3436 = vpack.c.b16 %v3056, %v3054
    %v3437 = vpack.c.b16 %v3059, %v3057
    %v3438 = vpack.c.b16 %v3060, %v3058
    %v3439 = vpack.c.b16 %v3063, %v3061
    %v3440 = vpack.c.b16 %v3064, %v3062
    %v3441 = vpack.c.b16 %v3067, %v3065
    %v3442 = vpack.c.b16 %v3068, %v3066
    %v3443 = vpack.c.b16 %v3071, %v3069
    %v3444 = vpack.c.b16 %v3072, %v3070
    %v3445 = vpack.c.b16 %v3075, %v3073
    %v3446 = vpack.c.b16 %v3076, %v3074
    %v3447 = vpack.c.b16 %v3079, %v3077
    %v3448 = vpack.c.b16 %v3080, %v3078
    %v3449 = vpack.c.b16 %v3083, %v3081
    %v3450 = vpack.c.b16 %v3084, %v3082
    %v3451 = vpack.c.b16 %v3087, %v3085
    %v3452 = vpack.c.b16 %v3088, %v3086
    %v3453 = vpack.c.b16 %v3091, %v3089
    %v3454 = vpack.c.b16 %v3092, %v3090
    %v3455 = vpack.c.b16 %v3095, %v3093
    %v3456 = vpack.c.b16 %v3096, %v3094
    %v3457 = vpack.c.b16 %v3099, %v3097
    %v3458 = vpack.c.b16 %v3100, %v3098
    %v3459 = vpack.c.b16 %v3103, %v3101
    %v3460 = vpack.c.b16 %v3104, %v3102
    %v3461 = vpack.c.b16 %v3107, %v3105
    %v3462 = vpack.c.b16 %v3108, %v3106
    %v3463 = vpack.c.b16 %v3111, %v3109
    %v3464 = vpack.c.b16 %v3112, %v3110
    %v3465 = vpack.c.b16 %v3115, %v3113
    %v3466 = vpack.c.b16 %v3116, %v3114
    %v3467 = vpack.c.b16 %v3119, %v3117
    %v3468 = vpack.c.b16 %v3120, %v3118
    %v3469 = vpack.c.b16 %v3123, %v3121
    %v3470 = vpack.c.b16 %v3124, %v3122
    %v3471 = vpack.c.b16 %v3127, %v3125
    %v3472 = vpack.c.b16 %v3128, %v3126
    %v3473 = vpack.c.b16 %v3131, %v3129
    %v3474 = vpack.c.b16 %v3132, %v3130
    %v3475 = vpack.c.b16 %v3135, %v3133
    %v3476 = vpack.c.b16 %v3136, %v3134
    %v3477 = vpack.c.b16 %v3139, %v3137
    %v3478 = vpack.c.b16 %v3140, %v3138
    %v3479 = vpack.c.b16 %v3143, %v3141
    %v3480 = vpack.c.b16 %v3144, %v3142
    %v3481 = vpack.c.b16 %v3147, %v3145
    %v3482 = vpack.c.b16 %v3148, %v3146
    %v3483 = vpack.c.b16 %v3151, %v3149
    %v3484 = vpack.c.b16 %v3152, %v3150
    %v3485 = vpack.c.b16 %v3155, %v3153
    %v3486 = vpack.c.b16 %v3156, %v3154
    %v3487 = vpack.c.b16 %v3159, %v3157
    %v3488 = vpack.c.b16 %v3160, %v3158
    %v3489 = vpack.c.b16 %v3163, %v3161
    %v3490 = vpack.c.b16 %v3164, %v3162
    %v3491 = vpack.c.b16 %v3167, %v3165
    %v3492 = vpack.c.b16 %v3168, %v3166
    %v3493 = vpack.c.b16 %v3171, %v3169
    %v3494 = vpack.c.b16 %v3172, %v3170
    %v3495 = vpack.c.b16 %v3175, %v3173
    %v3496 = vpack.c.b16 %v3176, %v3174
    %v3497 = vpack.c.b16 %v3179, %v3177
    %v3498 = vpack.c.b16 %v3180, %v3178
    %v3499 = vpack.c.b16 %v3183, %v3181
    %v3500 = vpack.c.b16 %v3184, %v3182
    %v3501 = vpack.c.b16 %v3187, %v3185
    %v3502 = vpack.c.b16 %v3188, %v3186
    %v3503 = vpack.c.b16 %v3191, %v3189
    %v3504 = vpack.c.b16 %v3192, %v3190
    %v3505 = vpack.c.b16 %v3195, %v3193
    %v3506 = vpack.c.b16 %v3196, %v3194
    %v3507 = vpack.c.b16 %v3199, %v3197
    %v3508 = vpack.c.b16 %v3200, %v3198
    %v3509 = vpack.c.b16 %v3203, %v3201
    %v3510 = vpack.c.b16 %v3204, %v3202
    %v3511 = vpack.c.b16 %v3207, %v3205
    %v3512 = vpack.c.b16 %v3208, %v3206
    %v3513 = vpack.c.b16 %v3211, %v3209
    %v3514 = vpack.c.b16 %v3212, %v3210
    %v3515 = vpack.c.b16 %v3215, %v3213
    %v3516 = vpack.c.b16 %v3216, %v3214
    %v3517 = vpack.c.b16 %v3219, %v3217
    %v3518 = vpack.c.b16 %v3220, %v3218
    %v3519 = vpack.c.b16 %v3223, %v3221
    %v3520 = vpack.c.b16 %v3224, %v3222
    %v3521 = vpack.c.b16 %v3227, %v3225
    %v3522 = vpack.c.b16 %v3228, %v3226
    %v3523 = vpack.c.b16 %v3231, %v3229
    %v3524 = vpack.c.b16 %v3232, %v3230
    %v3525 = vpack.c.b16 %v3235, %v3233
    %v3526 = vpack.c.b16 %v3236, %v3234
    %v3527 = vpack.c.b16 %v3239, %v3237
    %v3528 = vpack.c.b16 %v3240, %v3238
    %v3529 = vpack.c.b16 %v3243, %v3241
    %v3530 = vpack.c.b16 %v3244, %v3242
    %v3531 = vpack.c.b16 %v3247, %v3245
    %v3532 = vpack.c.b16 %v3248, %v3246
    %v3533 = vpack.c.b16 %v3251, %v3249
    %v3534 = vpack.c.b16 %v3252, %v3250
    %v3535 = vpack.c.b16 %v3255, %v3253
    %v3536 = vpack.c.b16 %v3256, %v3254
    %v3537 = vpack.c.b16 %v3259, %v3257
    %v3538 = vpack.c.b16 %v3260, %v3258
    %v3539 = vpack.c.b16 %v3263, %v3261
    %v3540 = vpack.c.b16 %v3264, %v3262
    %v3541 = vpack.c.b16 %v3267, %v3265
    %v3542 = vpack.c.b16 %v3268, %v3266
    %v3543 = vpack.c.b16 %v3271, %v3269
    %v3544 = vpack.c.b16 %v3272, %v3270
    %v3545 = vpack.c.b16 %v3275, %v3273
    %v3546 = vpack.c.b16 %v3276, %v3274
    %v3547 = vpack.c.b16 %v3279, %v3277
    %v3548 = vpack.c.b16 %v3280, %v3278
    %v3549 = vpack.c.b16 %v3283, %v3281
    %v3550 = vpack.c.b16 %v3284, %v3282
    %v3551 = vpack.c.b16 %v3287, %v3285
    %v3552 = vpack.c.b16 %v3288, %v3286
    %v3553 = vpack.c.b16 %v3291, %v3289
    %v3554 = vpack.c.b16 %v3292, %v3290
    %v3555 = vpack.c.b16 %v3295, %v3293
    %v3556 = vpack.c.b16 %v3296, %v3294
    %v3557 = vpack.c.b16 %v3299, %v3297
    %v3558 = vpack.c.b16 %v3300, %v3298
    %v3559 = vpack.c.b16 %v3303, %v3301
    %v3560 = vpack.c.b16 %v3304, %v3302
    %v3561 = vpack.c.b16 %v3307, %v3305
    %v3562 = vpack.c.b16 %v3308, %v3306
    %v3563 = vpack.c.b16 %v3311, %v3309
    %v3564 = vpack.c.b16 %v3312, %v3310
    %v3565 = vpack.c.b16 %v3315, %v3313
    %v3566 = vpack.c.b16 %v3316, %v3314
    %v3567 = vpack.c.b16 %v3319, %v3317
    %v3568 = vpack.c.b16 %v3320, %v3318
    %v3569 = vpack.c.b16 %v3323, %v3321
    %v3570 = vpack.c.b16 %v3324, %v3322
    %v3571 = vpack.c.b16 %v3327, %v3325
    %v3572 = vpack.c.b16 %v3328, %v3326
    %v3573 = vpack.c.b16 %v3331, %v3329
    %v3574 = vpack.c.b16 %v3332, %v3330
    %v3575 = vpack.c.b16 %v3335, %v3333
    %v3576 = vpack.c.b16 %v3336, %v3334
    %v3577 = vpack.c.b16 %v3339, %v3337
    %v3578 = vpack.c.b16 %v3340, %v3338
    %v3579 = vpack.c.b16 %v3343, %v3341
    %v3580 = vpack.c.b16 %v3344, %v3342
    %v3581 = vpack.c.b16 %v3347, %v3345
    %v3582 = vpack.c.b16 %v3348, %v3346
    %v3583 = vpack.c.b16 %v3351, %v3349
    %v3584 = vpack.c.b16 %v3352, %v3350
    %v3585 = vpack.c.b16 %v3355, %v3353
    %v3586 = vpack.c.b16 %v3356, %v3354
    %v3587 = vpack.c.b16 %v3359, %v3357
    %v3588 = vpack.c.b16 %v3360, %v3358
    %v3589 = vpack.c.b16 %v3363, %v3361
    %v3590 = vpack.c.b16 %v3364, %v3362
    %v3591 = vpack.c.b16 %v3367, %v3365
    %v3592 = vpack.c.b16 %v3368, %v3366
    %v3593 = vpack.c.b16 %v3371, %v3369
    %v3594 = vpack.c.b16 %v3372, %v3370
    %v3595 = vpack.c.b16 %v3375, %v3373
    %v3596 = vpack.c.b16 %v3376, %v3374
    %v3597 = vpack.c.b16 %v3379, %v3377
    %v3598 = vpack.c.b16 %v3380, %v3378
    %v3599 = vpack.c.b16 %v3383, %v3381
    %v3600 = vpack.c.b16 %v3384, %v3382
    %v3601 = vpack.c.b16 %v3387, %v3385
    %v3602 = vpack.c.b16 %v3388, %v3386
    %v3603 = vpack.c.b16 %v3391, %v3389
    %v3604 = vpack.c.b16 %v3392, %v3390
    %v3605 = vpack.c.b16 %v3395, %v3393
    %v3606 = vpack.c.b16 %v3396, %v3394
    %v3607 = vpack.c.b16 %v3399, %v3397
    %v3608 = vpack.c.b16 %v3400, %v3398
    %v3609 = vpack.c.b16 %v3403, %v3401
    %v3610 = vpack.c.b16 %v3404, %v3402
    %v3611 = vpack.c.b16 %v3407, %v3405
    %v3612 = vpack.c.b16 %v3408, %v3406
    %v3613 = vpack.c.b16 %v3411, %v3409
    %v3614 = vpack.c.b16 %v3412, %v3410
    %v3615 = vpack.c.b16 %v3415, %v3413
    %v3616 = vpack.c.b16 %v3416, %v3414
    %v3617 = vpack.c.b16 %v3419, %v3417
    %v3618 = vpack.c.b16 %v3420, %v3418
    %v3619 = vpack.c.b16 %v3423, %v3421
    %v3620 = vpack.c.b16 %v3424, %v3422
    %v3621 = vpack.c.b16 %v3427, %v3425
    %v3622 = vpack.c.b16 %v3428, %v3426
    %v3623 = vpack.c.b16 %v3431, %v3429
    %v3624 = vpack.c.b16 %v3432, %v3430
    %3817 = vmatprep.subr.bf16.mxu0 %v3434
    %3818 = vmatpush1.bf16.msra.mxu0 %v3433
    %3819 = vmatprep.subr.bf16.mxu0 %v3436
    %3820 = vmatpush1.bf16.msra.mxu0 %v3435
    %3821 = vmatprep.subr.bf16.mxu0 %v3438
    %3822 = vmatpush1.bf16.msra.mxu0 %v3437
    %3823 = vmatprep.subr.bf16.mxu0 %v3440
    %3824 = vmatpush1.bf16.msra.mxu0 %v3439
    %3825 = vmatprep.subr.bf16.mxu0 %v3442
    %3826 = vmatpush1.bf16.msra.mxu0 %v3441
    %3827 = vmatprep.subr.bf16.mxu0 %v3444
    %3828 = vmatpush1.bf16.msra.mxu0 %v3443
    %3829 = vmatprep.subr.bf16.mxu0 %v3446
    %3830 = vmatpush1.bf16.msra.mxu0 %v3445
    %3831 = vmatprep.subr.bf16.mxu0 %v3448
    %3832 = vmatpush1.bf16.msra.mxu0 %v3447
    %3833 = vmatprep.subr.bf16.mxu0 %v3450
    %3834 = vmatpush1.bf16.msra.mxu0 %v3449
    %3835 = vmatprep.subr.bf16.mxu0 %v3452
    %3836 = vmatpush1.bf16.msra.mxu0 %v3451
    %3837 = vmatprep.subr.bf16.mxu0 %v3454
    %3838 = vmatpush1.bf16.msra.mxu0 %v3453
    %3839 = vmatprep.subr.bf16.mxu0 %v3456
    %3840 = vmatpush1.bf16.msra.mxu0 %v3455
    %3841 = vmatprep.subr.bf16.mxu0 %v3458
    %3842 = vmatpush1.bf16.msra.mxu0 %v3457
    %3843 = vmatprep.subr.bf16.mxu0 %v3460
    %3844 = vmatpush1.bf16.msra.mxu0 %v3459
    %3845 = vmatprep.subr.bf16.mxu0 %v3462
    %3846 = vmatpush1.bf16.msra.mxu0 %v3461
    %3847 = vmatprep.subr.bf16.mxu0 %v3464
    %3848 = vmatpush1.bf16.msra.mxu0 %v3463
    %3849 = vmatprep.mubr.bf16.mxu0 %v2642
    %3850 = vmatmul.mubr.bf16.gmra.mrb[0].mxu0 %v2641
    %v3851 = vpop.f32.mrb[0].mxu0
    %v3852 = vadd.f32 %v2850, %v3851
    %v3853 = vpop.f32.mrb[0].mxu0
    %v3854 = vadd.f32 %v2854, %v3853
    %v3855 = vpop.f32.mrb[0].mxu0
    %v3856 = vpop.f32.mrb[0].mxu0
    %3857 = vdwg.mxu0
    %3858 = vmatprep.subr.bf16.mxu0 %v3466
    %3859 = vmatpush1.bf16.msra.mxu0 %v3465
    %3860 = vmatprep.subr.bf16.mxu0 %v3468
    %3861 = vmatpush1.bf16.msra.mxu0 %v3467
    %3862 = vmatprep.subr.bf16.mxu0 %v3470
    %3863 = vmatpush1.bf16.msra.mxu0 %v3469
    %3864 = vmatprep.subr.bf16.mxu0 %v3472
    %3865 = vmatpush1.bf16.msra.mxu0 %v3471
    %3866 = vmatprep.subr.bf16.mxu0 %v3474
    %3867 = vmatpush1.bf16.msra.mxu0 %v3473
    %3868 = vmatprep.subr.bf16.mxu0 %v3476
    %3869 = vmatpush1.bf16.msra.mxu0 %v3475
    %3870 = vmatprep.subr.bf16.mxu0 %v3478
    %3871 = vmatpush1.bf16.msra.mxu0 %v3477
    %3872 = vmatprep.subr.bf16.mxu0 %v3480
    %3873 = vmatpush1.bf16.msra.mxu0 %v3479
    %3874 = vmatprep.subr.bf16.mxu0 %v3482
    %3875 = vmatpush1.bf16.msra.mxu0 %v3481
    %3876 = vmatprep.subr.bf16.mxu0 %v3484
    %3877 = vmatpush1.bf16.msra.mxu0 %v3483
    %3878 = vmatprep.subr.bf16.mxu0 %v3486
    %3879 = vmatpush1.bf16.msra.mxu0 %v3485
    %3880 = vmatprep.subr.bf16.mxu0 %v3488
    %3881 = vmatpush1.bf16.msra.mxu0 %v3487
    %3882 = vmatprep.subr.bf16.mxu0 %v3490
    %3883 = vmatpush1.bf16.msra.mxu0 %v3489
    %3884 = vmatprep.subr.bf16.mxu0 %v3492
    %3885 = vmatpush1.bf16.msra.mxu0 %v3491
    %3886 = vmatprep.subr.bf16.mxu0 %v3494
    %3887 = vmatpush1.bf16.msra.mxu0 %v3493
    %3888 = vmatprep.subr.bf16.mxu0 %v3496
    %3889 = vmatpush1.bf16.msra.mxu0 %v3495
    %3890 = vmatprep.mubr.bf16.mxu0 %v2644
    %3891 = vmatmul.mubr.bf16.gmra.mrb[0].mxu0 %v2643
    %v3892 = vpop.f32.mrb[0].mxu0
    %v3893 = vadd.f32 %v3852, %v3892
    %v3894 = vpop.f32.mrb[0].mxu0
    %v3895 = vadd.f32 %v3854, %v3894
    %v3896 = vpop.f32.mrb[0].mxu0
    %v3897 = vpop.f32.mrb[0].mxu0
    %3898 = vdwg.mxu0
    %3899 = vmatprep.subr.bf16.mxu0 %v3498
    %3900 = vmatpush1.bf16.msra.mxu0 %v3497
    %3901 = vmatprep.subr.bf16.mxu0 %v3500
    %3902 = vmatpush1.bf16.msra.mxu0 %v3499
    %3903 = vmatprep.subr.bf16.mxu0 %v3502
    %3904 = vmatpush1.bf16.msra.mxu0 %v3501
    %3905 = vmatprep.subr.bf16.mxu0 %v3504
    %3906 = vmatpush1.bf16.msra.mxu0 %v3503
    %3907 = vmatprep.subr.bf16.mxu0 %v3506
    %3908 = vmatpush1.bf16.msra.mxu0 %v3505
    %3909 = vmatprep.subr.bf16.mxu0 %v3508
    %3910 = vmatpush1.bf16.msra.mxu0 %v3507
    %3911 = vmatprep.subr.bf16.mxu0 %v3510
    %3912 = vmatpush1.bf16.msra.mxu0 %v3509
    %3913 = vmatprep.subr.bf16.mxu0 %v3512
    %3914 = vmatpush1.bf16.msra.mxu0 %v3511
    %3915 = vmatprep.subr.bf16.mxu0 %v3514
    %3916 = vmatpush1.bf16.msra.mxu0 %v3513
    %3917 = vmatprep.subr.bf16.mxu0 %v3516
    %3918 = vmatpush1.bf16.msra.mxu0 %v3515
    %3919 = vmatprep.subr.bf16.mxu0 %v3518
    %3920 = vmatpush1.bf16.msra.mxu0 %v3517
    %3921 = vmatprep.subr.bf16.mxu0 %v3520
    %3922 = vmatpush1.bf16.msra.mxu0 %v3519
    %3923 = vmatprep.subr.bf16.mxu0 %v3522
    %3924 = vmatpush1.bf16.msra.mxu0 %v3521
    %3925 = vmatprep.subr.bf16.mxu0 %v3524
    %3926 = vmatpush1.bf16.msra.mxu0 %v3523
    %3927 = vmatprep.subr.bf16.mxu0 %v3526
    %3928 = vmatpush1.bf16.msra.mxu0 %v3525
    %3929 = vmatprep.subr.bf16.mxu0 %v3528
    %3930 = vmatpush1.bf16.msra.mxu0 %v3527
    %3931 = vmatprep.mubr.bf16.mxu0 %v2646
    %3932 = vmatmul.mubr.bf16.gmra.mrb[0].mxu0 %v2645
    %v3933 = vpop.f32.mrb[0].mxu0
    %v3934 = vadd.f32 %v3893, %v3933
    %v3935 = vpop.f32.mrb[0].mxu0
    %v3936 = vadd.f32 %v3895, %v3935
    %v3937 = vpop.f32.mrb[0].mxu0
    %v3938 = vpop.f32.mrb[0].mxu0
    %3939 = vdwg.mxu0
    %3940 = vmatprep.subr.bf16.mxu0 %v3530
    %3941 = vmatpush1.bf16.msra.mxu0 %v3529
    %3942 = vmatprep.subr.bf16.mxu0 %v3532
    %3943 = vmatpush1.bf16.msra.mxu0 %v3531
    %3944 = vmatprep.subr.bf16.mxu0 %v3534
    %3945 = vmatpush1.bf16.msra.mxu0 %v3533
    %3946 = vmatprep.subr.bf16.mxu0 %v3536
    %3947 = vmatpush1.bf16.msra.mxu0 %v3535
    %3948 = vmatprep.subr.bf16.mxu0 %v3538
    %3949 = vmatpush1.bf16.msra.mxu0 %v3537
    %3950 = vmatprep.subr.bf16.mxu0 %v3540
    %3951 = vmatpush1.bf16.msra.mxu0 %v3539
    %3952 = vmatprep.subr.bf16.mxu0 %v3542
    %3953 = vmatpush1.bf16.msra.mxu0 %v3541
    %3954 = vmatprep.subr.bf16.mxu0 %v3544
    %3955 = vmatpush1.bf16.msra.mxu0 %v3543
    %3956 = vmatprep.subr.bf16.mxu0 %v3546
    %3957 = vmatpush1.bf16.msra.mxu0 %v3545
    %3958 = vmatprep.subr.bf16.mxu0 %v3548
    %3959 = vmatpush1.bf16.msra.mxu0 %v3547
    %3960 = vmatprep.subr.bf16.mxu0 %v3550
    %3961 = vmatpush1.bf16.msra.mxu0 %v3549
    %3962 = vmatprep.subr.bf16.mxu0 %v3552
    %3963 = vmatpush1.bf16.msra.mxu0 %v3551
    %3964 = vmatprep.subr.bf16.mxu0 %v3554
    %3965 = vmatpush1.bf16.msra.mxu0 %v3553
    %3966 = vmatprep.subr.bf16.mxu0 %v3556
    %3967 = vmatpush1.bf16.msra.mxu0 %v3555
    %3968 = vmatprep.subr.bf16.mxu0 %v3558
    %3969 = vmatpush1.bf16.msra.mxu0 %v3557
    %3970 = vmatprep.subr.bf16.mxu0 %v3560
    %3971 = vmatpush1.bf16.msra.mxu0 %v3559
    %3972 = vmatprep.mubr.bf16.mxu0 %v2648
    %3973 = vmatmul.mubr.bf16.gmra.mrb[0].mxu0 %v2647
    %v3974 = vpop.f32.mrb[0].mxu0
    %v3975 = vadd.f32 %v3934, %v3974
    %v3976 = vpop.f32.mrb[0].mxu0
    %v3977 = vadd.f32 %v3936, %v3976
    %v3978 = vpop.f32.mrb[0].mxu0
    %v3979 = vpop.f32.mrb[0].mxu0
    %3980 = vdwg.mxu0
    %3981 = vmatprep.subr.bf16.mxu0 %v3562
    %3982 = vmatpush1.bf16.msra.mxu0 %v3561
    %3983 = vmatprep.subr.bf16.mxu0 %v3564
    %3984 = vmatpush1.bf16.msra.mxu0 %v3563
    %3985 = vmatprep.subr.bf16.mxu0 %v3566
    %3986 = vmatpush1.bf16.msra.mxu0 %v3565
    %3987 = vmatprep.subr.bf16.mxu0 %v3568
    %3988 = vmatpush1.bf16.msra.mxu0 %v3567
    %3989 = vmatprep.subr.bf16.mxu0 %v3570
    %3990 = vmatpush1.bf16.msra.mxu0 %v3569
    %3991 = vmatprep.subr.bf16.mxu0 %v3572
    %3992 = vmatpush1.bf16.msra.mxu0 %v3571
    %3993 = vmatprep.subr.bf16.mxu0 %v3574
    %3994 = vmatpush1.bf16.msra.mxu0 %v3573
    %3995 = vmatprep.subr.bf16.mxu0 %v3576
    %3996 = vmatpush1.bf16.msra.mxu0 %v3575
    %3997 = vmatprep.subr.bf16.mxu0 %v3578
    %3998 = vmatpush1.bf16.msra.mxu0 %v3577
    %3999 = vmatprep.subr.bf16.mxu0 %v3580
    %4000 = vmatpush1.bf16.msra.mxu0 %v3579
    %4001 = vmatprep.subr.bf16.mxu0 %v3582
    %4002 = vmatpush1.bf16.msra.mxu0 %v3581
    %4003 = vmatprep.subr.bf16.mxu0 %v3584
    %4004 = vmatpush1.bf16.msra.mxu0 %v3583
    %4005 = vmatprep.subr.bf16.mxu0 %v3586
    %4006 = vmatpush1.bf16.msra.mxu0 %v3585
    %4007 = vmatprep.subr.bf16.mxu0 %v3588
    %4008 = vmatpush1.bf16.msra.mxu0 %v3587
    %4009 = vmatprep.subr.bf16.mxu0 %v3590
    %4010 = vmatpush1.bf16.msra.mxu0 %v3589
    %4011 = vmatprep.subr.bf16.mxu0 %v3592
    %4012 = vmatpush1.bf16.msra.mxu0 %v3591
    %4013 = vmatprep.mubr.bf16.mxu0 %v2650
    %4014 = vmatmul.mubr.bf16.gmra.mrb[0].mxu0 %v2649
    %v4015 = vpop.f32.mrb[0].mxu0
    %v4016 = vadd.f32 %v3975, %v4015
    %v4017 = vpop.f32.mrb[0].mxu0
    %v4018 = vadd.f32 %v3977, %v4017
    %v4019 = vpop.f32.mrb[0].mxu0
    %v4020 = vpop.f32.mrb[0].mxu0
    %4021 = vdwg.mxu0
    %4022 = vmatprep.subr.bf16.mxu0 %v3594
    %4023 = vmatpush1.bf16.msra.mxu0 %v3593
    %4024 = vmatprep.subr.bf16.mxu0 %v3596
    %4025 = vmatpush1.bf16.msra.mxu0 %v3595
    %4026 = vmatprep.subr.bf16.mxu0 %v3598
    %4027 = vmatpush1.bf16.msra.mxu0 %v3597
    %4028 = vmatprep.subr.bf16.mxu0 %v3600
    %4029 = vmatpush1.bf16.msra.mxu0 %v3599
    %4030 = vmatprep.subr.bf16.mxu0 %v3602
    %4031 = vmatpush1.bf16.msra.mxu0 %v3601
    %4032 = vmatprep.subr.bf16.mxu0 %v3604
    %4033 = vmatpush1.bf16.msra.mxu0 %v3603
    %4034 = vmatprep.subr.bf16.mxu0 %v3606
    %4035 = vmatpush1.bf16.msra.mxu0 %v3605
    %4036 = vmatprep.subr.bf16.mxu0 %v3608
    %4037 = vmatpush1.bf16.msra.mxu0 %v3607
    %4038 = vmatprep.subr.bf16.mxu0 %v3610
    %4039 = vmatpush1.bf16.msra.mxu0 %v3609
    %4040 = vmatprep.subr.bf16.mxu0 %v3612
    %4041 = vmatpush1.bf16.msra.mxu0 %v3611
    %4042 = vmatprep.subr.bf16.mxu0 %v3614
    %4043 = vmatpush1.bf16.msra.mxu0 %v3613
    %4044 = vmatprep.subr.bf16.mxu0 %v3616
    %4045 = vmatpush1.bf16.msra.mxu0 %v3615
    %4046 = vmatprep.subr.bf16.mxu0 %v3618
    %4047 = vmatpush1.bf16.msra.mxu0 %v3617
    %4048 = vmatprep.subr.bf16.mxu0 %v3620
    %4049 = vmatpush1.bf16.msra.mxu0 %v3619
    %4050 = vmatprep.subr.bf16.mxu0 %v3622
    %4051 = vmatpush1.bf16.msra.mxu0 %v3621
    %4052 = vmatprep.subr.bf16.mxu0 %v3624
    %4053 = vmatpush1.bf16.msra.mxu0 %v3623
    %4054 = vmatprep.mubr.bf16.mxu0 %v2652
    %4055 = vmatmul.mubr.bf16.gmra.mrb[0].mxu0 %v2651
    %v4056 = vpop.f32.mrb[0].mxu0
    %v4057 = vadd.f32 %v4016, %v4056
    %v4058 = vpop.f32.mrb[0].mxu0
    %v4059 = vadd.f32 %v4018, %v4058
    %v4060 = vpop.f32.mrb[0].mxu0
    %v4061 = vpop.f32.mrb[0].mxu0
    %4062 = vdwg.mxu0
    %v4063 = vmax.f32 %v4057, 0.0
    %v4064 = vmax.f32 %v4059, 0.0
    %v4065 = vpack.c.bf16 %v4063, %v4063
    %v4066 = vpack.c.bf16 %v4064, %v4064
    %v4067 = vld [vmem:[%s6] sm:$0xf]
    %v4068 = vld [vmem:[%s6 + $0x4] sm:$0xf]
    %v4069 = vld [vmem:[%s6 + $0x8] sm:$0xf]
    %v4070 = vld [vmem:[%s6 + $0xc] sm:$0xf]
    %v4071 = vld [vmem:[%s6 + $0x10] sm:$0xf]
    %v4072 = vld [vmem:[%s6 + $0x14] sm:$0xf]
    %v4073 = vld [vmem:[%s6 + $0x18] sm:$0xf]
    %v4074 = vld [vmem:[%s6 + $0x1c] sm:$0xf]
    %v4075 = vld [vmem:[%s6 + $0x20] sm:$0xf]
    %v4076 = vld [vmem:[%s6 + $0x24] sm:$0xf]
    %v4077 = vld [vmem:[%s6 + $0x28] sm:$0xf]
    %v4078 = vld [vmem:[%s6 + $0x2c] sm:$0xf]
    %v4079 = vld [vmem:[%s6 + $0x30] sm:$0xf]
    %v4080 = vld [vmem:[%s6 + $0x34] sm:$0xf]
    %v4081 = vld [vmem:[%s6 + $0x38] sm:$0xf]
    %v4082 = vld [vmem:[%s6 + $0x3c] sm:$0xf]
    %v4083 = vld [vmem:[%s6 + $0x40] sm:$0xf]
    %v4084 = vld [vmem:[%s6 + $0x44] sm:$0xf]
    %v4085 = vld [vmem:[%s6 + $0x48] sm:$0xf]
    %v4086 = vld [vmem:[%s6 + $0x4c] sm:$0xf]
    %v4087 = vld [vmem:[%s6 + $0x50] sm:$0xf]
    %v4088 = vld [vmem:[%s6 + $0x54] sm:$0xf]
    %v4089 = vld [vmem:[%s6 + $0x58] sm:$0xf]
    %v4090 = vld [vmem:[%s6 + $0x5c] sm:$0xf]
    %v4091 = vld [vmem:[%s6 + $0x60] sm:$0xf]
    %v4092 = vld [vmem:[%s6 + $0x64] sm:$0xf]
    %v4093 = vld [vmem:[%s6 + $0x68] sm:$0xf]
    %v4094 = vld [vmem:[%s6 + $0x6c] sm:$0xf]
    %v4095 = vld [vmem:[%s6 + $0x70] sm:$0xf]
    %v4096 = vld [vmem:[%s6 + $0x74] sm:$0xf]
    %v4097 = vld [vmem:[%s6 + $0x78] sm:$0xf]
    %v4098 = vld [vmem:[%s6 + $0x7c] sm:$0xf]
    %v4099 = vld [vmem:[#allocation10] sm:$0x1]
    %v4101 = vlaneseq
    %v4102 = vshrl.u32 %v4101, 7
    %v4103 = vsub.s32 0, %v4102
    %v4104 = vrot.slane %v4099, %v4103
    %v4138 = vunpack.c.l.b16 %v4067
    %v4139 = vunpack.c.l.b16 %v4068
    %v4140 = vunpack.c.l.b16 %v4069
    %v4141 = vunpack.c.l.b16 %v4070
    %v4142 = vunpack.c.l.b16 %v4071
    %v4143 = vunpack.c.l.b16 %v4072
    %v4144 = vunpack.c.l.b16 %v4073
    %v4145 = vunpack.c.l.b16 %v4074
    %v4146 = vunpack.c.l.b16 %v4075
    %v4147 = vunpack.c.l.b16 %v4076
    %v4148 = vunpack.c.l.b16 %v4077
    %v4149 = vunpack.c.l.b16 %v4078
    %v4150 = vunpack.c.l.b16 %v4079
    %v4151 = vunpack.c.l.b16 %v4080
    %v4152 = vunpack.c.l.b16 %v4081
    %v4153 = vunpack.c.l.b16 %v4082
    %v4154 = vunpack.c.l.b16 %v4083
    %v4155 = vunpack.c.l.b16 %v4084
    %v4156 = vunpack.c.l.b16 %v4085
    %v4157 = vunpack.c.l.b16 %v4086
    %v4158 = vunpack.c.l.b16 %v4087
    %v4159 = vunpack.c.l.b16 %v4088
    %v4160 = vunpack.c.l.b16 %v4089
    %v4161 = vunpack.c.l.b16 %v4090
    %v4162 = vunpack.c.l.b16 %v4091
    %v4163 = vunpack.c.l.b16 %v4092
    %v4164 = vunpack.c.l.b16 %v4093
    %v4165 = vunpack.c.l.b16 %v4094
    %v4166 = vunpack.c.l.b16 %v4095
    %v4167 = vunpack.c.l.b16 %v4096
    %v4168 = vunpack.c.l.b16 %v4097
    %v4169 = vunpack.c.l.b16 %v4098
    %v4170 = vpack.c.b16 %v4139, %v4138
    %v4171 = vpack.c.b16 %v4141, %v4140
    %v4172 = vpack.c.b16 %v4143, %v4142
    %v4173 = vpack.c.b16 %v4145, %v4144
    %v4174 = vpack.c.b16 %v4147, %v4146
    %v4175 = vpack.c.b16 %v4149, %v4148
    %v4176 = vpack.c.b16 %v4151, %v4150
    %v4177 = vpack.c.b16 %v4153, %v4152
    %v4178 = vpack.c.b16 %v4155, %v4154
    %v4179 = vpack.c.b16 %v4157, %v4156
    %v4180 = vpack.c.b16 %v4159, %v4158
    %v4181 = vpack.c.b16 %v4161, %v4160
    %v4182 = vpack.c.b16 %v4163, %v4162
    %v4183 = vpack.c.b16 %v4165, %v4164
    %v4184 = vpack.c.b16 %v4167, %v4166
    %v4185 = vpack.c.b16 %v4169, %v4168
    %4202 = vmatprep.subr.bf16.mxu0 0
    %4203 = vmatpush1.bf16.msra.mxu0 %v4170
    %4204 = vmatprep.subr.bf16.mxu0 0
    %4205 = vmatpush1.bf16.msra.mxu0 %v4171
    %4206 = vmatprep.subr.bf16.mxu0 0
    %4207 = vmatpush1.bf16.msra.mxu0 %v4172
    %4208 = vmatprep.subr.bf16.mxu0 0
    %4209 = vmatpush1.bf16.msra.mxu0 %v4173
    %4210 = vmatprep.subr.bf16.mxu0 0
    %4211 = vmatpush1.bf16.msra.mxu0 %v4174
    %4212 = vmatprep.subr.bf16.mxu0 0
    %4213 = vmatpush1.bf16.msra.mxu0 %v4175
    %4214 = vmatprep.subr.bf16.mxu0 0
    %4215 = vmatpush1.bf16.msra.mxu0 %v4176
    %4216 = vmatprep.subr.bf16.mxu0 0
    %4217 = vmatpush1.bf16.msra.mxu0 %v4177
    %4218 = vmatprep.subr.bf16.mxu0 0
    %4219 = vmatpush1.bf16.msra.mxu0 %v4178
    %4220 = vmatprep.subr.bf16.mxu0 0
    %4221 = vmatpush1.bf16.msra.mxu0 %v4179
    %4222 = vmatprep.subr.bf16.mxu0 0
    %4223 = vmatpush1.bf16.msra.mxu0 %v4180
    %4224 = vmatprep.subr.bf16.mxu0 0
    %4225 = vmatpush1.bf16.msra.mxu0 %v4181
    %4226 = vmatprep.subr.bf16.mxu0 0
    %4227 = vmatpush1.bf16.msra.mxu0 %v4182
    %4228 = vmatprep.subr.bf16.mxu0 0
    %4229 = vmatpush1.bf16.msra.mxu0 %v4183
    %4230 = vmatprep.subr.bf16.mxu0 0
    %4231 = vmatpush1.bf16.msra.mxu0 %v4184
    %4232 = vmatprep.subr.bf16.mxu0 0
    %4233 = vmatpush1.bf16.msra.mxu0 %v4185
    %4234 = vmatprep.mubr.bf16.mxu0 %v4066
    %4235 = vmatmul.mubr.bf16.gmra.mrb[0].mxu0 %v4065
    %v4236 = vpop.f32.mrb[0].mxu0
    %v4237 = vadd.f32 %v4104, %v4236
    %v4238 = vpop.f32.mrb[0].mxu0
    %v4239 = vpop.f32.mrb[0].mxu0
    %v4240 = vpop.f32.mrb[0].mxu0
    %4241 = vdwg.mxu0
    %v4242 = vmax.f32 %v4237, 0.0
    %v4243 = vpack.c.bf16 %v4242, %v4242
    %v4244 = vld [vmem:[%s1] sm:$0x3]
    %v4245 = vpack.c.bf16 %v4244, %v4244
    %v4246 = vld [vmem:[#allocation12] sm:$0xf]
    %v4247 = vld [vmem:[#allocation13] sm:$0xf]
    %v4248 = vld [vmem:[#allocation13 + $0x4] sm:$0xf]
    %v4249 = vld [vmem:[#allocation13 + $0x8] sm:$0xf]
    %v4250 = vld [vmem:[#allocation13 + $0xc] sm:$0xf]
    %v4255 = vunpack.c.l.b16 %v4247
    %v4256 = vunpack.c.l.b16 %v4248
    %v4257 = vunpack.c.l.b16 %v4249
    %v4258 = vunpack.c.l.b16 %v4250
    %v4259 = vpack.c.b16 %v4256, %v4255
    %v4260 = vpack.c.b16 %v4258, %v4257
    %vm4263 = vcmask 261120
    %v4265 = vsel %vm4263, %v4243, 0
    %4267 = vmatprep.subr.bf16.mxu0 0
    %4268 = vmatpush1.bf16.msra.mxu0 %v4259
    %4269 = vmatprep.subr.bf16.mxu0 0
    %4270 = vmatpush1.bf16.msra.mxu0 %v4260
    %4271 = vmatprep.subr.bf16.mxu0 0
    %4272 = vmatpush1.bf16.msra.mxu0 0
    %4273 = vmatprep.subr.bf16.mxu0 0
    %4274 = vmatpush1.bf16.msra.mxu0 0
    %4275 = vmatprep.subr.bf16.mxu0 0
    %4276 = vmatpush1.bf16.msra.mxu0 0
    %4277 = vmatprep.subr.bf16.mxu0 0
    %4278 = vmatpush1.bf16.msra.mxu0 0
    %4279 = vmatprep.subr.bf16.mxu0 0
    %4280 = vmatpush1.bf16.msra.mxu0 0
    %4281 = vmatprep.subr.bf16.mxu0 0
    %4282 = vmatpush1.bf16.msra.mxu0 0
    %4283 = vmatprep.subr.bf16.mxu0 0
    %4284 = vmatpush1.bf16.msra.mxu0 0
    %4285 = vmatprep.subr.bf16.mxu0 0
    %4286 = vmatpush1.bf16.msra.mxu0 0
    %4287 = vmatprep.subr.bf16.mxu0 0
    %4288 = vmatpush1.bf16.msra.mxu0 0
    %4289 = vmatprep.subr.bf16.mxu0 0
    %4290 = vmatpush1.bf16.msra.mxu0 0
    %4291 = vmatprep.subr.bf16.mxu0 0
    %4292 = vmatpush1.bf16.msra.mxu0 0
    %4293 = vmatprep.subr.bf16.mxu0 0
    %4294 = vmatpush1.bf16.msra.mxu0 0
    %4295 = vmatprep.subr.bf16.mxu0 0
    %4296 = vmatpush1.bf16.msra.mxu0 0
    %4297 = vmatprep.subr.bf16.mxu0 0
    %4298 = vmatpush1.bf16.msra.mxu0 0
    %4299 = vmatprep.mubr.bf16.mxu0 0
    %4300 = vmatmul.mubr.bf16.gmra.mrb[0].mxu0 %v4265
    %v4301 = vpop.f32.mrb[0].mxu0
    %v4302 = vadd.f32 0.0, %v4301
    %v4303 = vpop.f32.mrb[0].mxu0
    %v4304 = vpop.f32.mrb[0].mxu0
    %v4305 = vpop.f32.mrb[0].mxu0
    %4306 = vdwg.mxu0
    %vm4307 = vcmask 56320
    %v4309 = vsel %vm4307, %v4245, 0
    %vm4311 = vcmask 1042432
    %vm4312 = vcmask 1043456
    %v4313 = vsel %vm4311, 4294967295, 65535
    %v4314 = vsel %vm4312, %v4313, 0
    %v4316 = vand.u32 %v4246, %v4314
    %4318 = vmatprep.subr.bf16.mxu0 0
    %4319 = vmatpush1.bf16.msra.mxu0 %v4316
    %4320 = vmatprep.subr.bf16.mxu0 0
    %4321 = vmatpush1.bf16.msra.mxu0 0
    %4322 = vmatprep.subr.bf16.mxu0 0
    %4323 = vmatpush1.bf16.msra.mxu0 0
    %4324 = vmatprep.subr.bf16.mxu0 0
    %4325 = vmatpush1.bf16.msra.mxu0 0
    %4326 = vmatprep.subr.bf16.mxu0 0
    %4327 = vmatpush1.bf16.msra.mxu0 0
    %4328 = vmatprep.subr.bf16.mxu0 0
    %4329 = vmatpush1.bf16.msra.mxu0 0
    %4330 = vmatprep.subr.bf16.mxu0 0
    %4331 = vmatpush1.bf16.msra.mxu0 0
    %4332 = vmatprep.subr.bf16.mxu0 0
    %4333 = vmatpush1.bf16.msra.mxu0 0
    %4334 = vmatprep.subr.bf16.mxu0 0
    %4335 = vmatpush1.bf16.msra.mxu0 0
    %4336 = vmatprep.subr.bf16.mxu0 0
    %4337 = vmatpush1.bf16.msra.mxu0 0
    %4338 = vmatprep.subr.bf16.mxu0 0
    %4339 = vmatpush1.bf16.msra.mxu0 0
    %4340 = vmatprep.subr.bf16.mxu0 0
    %4341 = vmatpush1.bf16.msra.mxu0 0
    %4342 = vmatprep.subr.bf16.mxu0 0
    %4343 = vmatpush1.bf16.msra.mxu0 0
    %4344 = vmatprep.subr.bf16.mxu0 0
    %4345 = vmatpush1.bf16.msra.mxu0 0
    %4346 = vmatprep.subr.bf16.mxu0 0
    %4347 = vmatpush1.bf16.msra.mxu0 0
    %4348 = vmatprep.subr.bf16.mxu0 0
    %4349 = vmatpush1.bf16.msra.mxu0 0
    %4350 = vmatprep.mubr.bf16.mxu0 0
    %4351 = vmatmul.mubr.bf16.gmra.mrb[0].mxu0 %v4309
    %v4352 = vpop.f32.mrb[0].mxu0
    %v4353 = vadd.f32 %v4302, %v4352
    %v4354 = vpop.f32.mrb[0].mxu0
    %v4355 = vpop.f32.mrb[0].mxu0
    %v4356 = vpop.f32.mrb[0].mxu0
    %4357 = vdwg.mxu0
    %v4358 = vld [vmem:[#allocation15] sm:$0x1]
    %v4360 = vlaneseq
    %v4361 = vshrl.u32 %v4360, 7
    %v4362 = vsub.s32 0, %v4361
    %v4363 = vrot.slane %v4358, %v4362
    %v4365 = vadd.f32 %v4353, %v4363
    %v4366 = vmax.f32 %v4365, 0.0
    %v4367 = vpack.c.bf16 %v4366, %v4366
    %v4368 = vld [vmem:[#allocation16] sm:$0xf]
    %v4369 = vld [vmem:[#allocation16 + $0x4] sm:$0xf]
    %v4370 = vld [vmem:[#allocation16 + $0x8] sm:$0xf]
    %v4371 = vld [vmem:[#allocation16 + $0xc] sm:$0xf]
    %v4372 = vld [vmem:[#allocation16 + $0x10] sm:$0xf]
    %v4373 = vld [vmem:[#allocation16 + $0x14] sm:$0xf]
    %v4374 = vld [vmem:[#allocation16 + $0x18] sm:$0xf]
    %v4375 = vld [vmem:[#allocation16 + $0x1c] sm:$0xf]
    %v4376 = vld [vmem:[#allocation18] sm:$0x1]
    %v4378 = vlaneseq
    %v4379 = vshrl.u32 %v4378, 7
    %v4380 = vsub.s32 0, %v4379
    %v4381 = vrot.slane %v4376, %v4380
    %v4391 = vunpack.c.l.b16 %v4368
    %v4392 = vunpack.c.l.b16 %v4369
    %v4393 = vunpack.c.l.b16 %v4370
    %v4394 = vunpack.c.l.b16 %v4371
    %v4395 = vunpack.c.l.b16 %v4372
    %v4396 = vunpack.c.l.b16 %v4373
    %v4397 = vunpack.c.l.b16 %v4374
    %v4398 = vunpack.c.l.b16 %v4375
    %v4399 = vpack.c.b16 %v4392, %v4391
    %v4400 = vpack.c.b16 %v4394, %v4393
    %v4401 = vpack.c.b16 %v4396, %v4395
    %v4402 = vpack.c.b16 %v4398, %v4397
    %vm4407 = vcmask 523264
    %v4409 = vsel %vm4407, %v4367, 0
    %4411 = vmatprep.subr.bf16.mxu0 0
    %4412 = vmatpush1.bf16.msra.mxu0 %v4399
    %4413 = vmatprep.subr.bf16.mxu0 0
    %4414 = vmatpush1.bf16.msra.mxu0 %v4400
    %4415 = vmatprep.subr.bf16.mxu0 0
    %4416 = vmatpush1.bf16.msra.mxu0 %v4401
    %4417 = vmatprep.subr.bf16.mxu0 0
    %4418 = vmatpush1.bf16.msra.mxu0 %v4402
    %4419 = vmatprep.subr.bf16.mxu0 0
    %4420 = vmatpush1.bf16.msra.mxu0 0
    %4421 = vmatprep.subr.bf16.mxu0 0
    %4422 = vmatpush1.bf16.msra.mxu0 0
    %4423 = vmatprep.subr.bf16.mxu0 0
    %4424 = vmatpush1.bf16.msra.mxu0 0
    %4425 = vmatprep.subr.bf16.mxu0 0
    %4426 = vmatpush1.bf16.msra.mxu0 0
    %4427 = vmatprep.subr.bf16.mxu0 0
    %4428 = vmatpush1.bf16.msra.mxu0 0
    %4429 = vmatprep.subr.bf16.mxu0 0
    %4430 = vmatpush1.bf16.msra.mxu0 0
    %4431 = vmatprep.subr.bf16.mxu0 0
    %4432 = vmatpush1.bf16.msra.mxu0 0
    %4433 = vmatprep.subr.bf16.mxu0 0
    %4434 = vmatpush1.bf16.msra.mxu0 0
    %4435 = vmatprep.subr.bf16.mxu0 0
    %4436 = vmatpush1.bf16.msra.mxu0 0
    %4437 = vmatprep.subr.bf16.mxu0 0
    %4438 = vmatpush1.bf16.msra.mxu0 0
    %4439 = vmatprep.subr.bf16.mxu0 0
    %4440 = vmatpush1.bf16.msra.mxu0 0
    %4441 = vmatprep.subr.bf16.mxu0 0
    %4442 = vmatpush1.bf16.msra.mxu0 0
    %4443 = vmatprep.mubr.bf16.mxu0 0
    %4444 = vmatmul.mubr.bf16.gmra.mrb[0].mxu0 %v4409
    %v4445 = vpop.f32.mrb[0].mxu0
    %v4446 = vadd.f32 %v4381, %v4445
    %v4447 = vpop.f32.mrb[0].mxu0
    %v4448 = vpop.f32.mrb[0].mxu0
    %v4449 = vpop.f32.mrb[0].mxu0
    %4450 = vdwg.mxu0
    %v4451 = vmax.f32 %v4446, 0.0
    %v4452 = vpack.c.bf16 %v4451, %v4451
    %v4453 = vld [vmem:[#allocation19] sm:$0xf]
    %v4454 = vld [vmem:[#allocation19 + $0x4] sm:$0xf]
    %v4455 = vld [vmem:[#allocation19 + $0x8] sm:$0xf]
    %v4456 = vld [vmem:[#allocation19 + $0xc] sm:$0xf]
    %v4457 = vld [vmem:[#allocation19 + $0x10] sm:$0xf]
    %v4458 = vld [vmem:[#allocation19 + $0x14] sm:$0xf]
    %v4459 = vld [vmem:[#allocation19 + $0x18] sm:$0xf]
    %v4460 = vld [vmem:[#allocation19 + $0x1c] sm:$0xf]
    %v4461 = vld [vmem:[#allocation19 + $0x20] sm:$0xf]
    %v4462 = vld [vmem:[#allocation19 + $0x24] sm:$0xf]
    %v4463 = vld [vmem:[#allocation19 + $0x28] sm:$0xf]
    %v4464 = vld [vmem:[#allocation19 + $0x2c] sm:$0xf]
    %v4465 = vld [vmem:[#allocation19 + $0x30] sm:$0xf]
    %v4466 = vld [vmem:[#allocation19 + $0x34] sm:$0xf]
    %v4467 = vld [vmem:[#allocation19 + $0x38] sm:$0xf]
    %v4468 = vld [vmem:[#allocation19 + $0x3c] sm:$0xf]
    %v4469 = vld [vmem:[#allocation21] sm:$0x1]
    %v4471 = vlaneseq
    %v4472 = vshrl.u32 %v4471, 7
    %v4473 = vsub.s32 0, %v4472
    %v4474 = vrot.slane %v4469, %v4473
    %v4492 = vunpack.c.l.b16 %v4453
    %v4493 = vunpack.c.l.b16 %v4454
    %v4494 = vunpack.c.l.b16 %v4455
    %v4495 = vunpack.c.l.b16 %v4456
    %v4496 = vunpack.c.l.b16 %v4457
    %v4497 = vunpack.c.l.b16 %v4458
    %v4498 = vunpack.c.l.b16 %v4459
    %v4499 = vunpack.c.l.b16 %v4460
    %v4500 = vunpack.c.l.b16 %v4461
    %v4501 = vunpack.c.l.b16 %v4462
    %v4502 = vunpack.c.l.b16 %v4463
    %v4503 = vunpack.c.l.b16 %v4464
    %v4504 = vunpack.c.l.b16 %v4465
    %v4505 = vunpack.c.l.b16 %v4466
    %v4506 = vunpack.c.l.b16 %v4467
    %v4507 = vunpack.c.l.b16 %v4468
    %v4508 = vpack.c.b16 %v4493, %v4492
    %v4509 = vpack.c.b16 %v4495, %v4494
    %v4510 = vpack.c.b16 %v4497, %v4496
    %v4511 = vpack.c.b16 %v4499, %v4498
    %v4512 = vpack.c.b16 %v4501, %v4500
    %v4513 = vpack.c.b16 %v4503, %v4502
    %v4514 = vpack.c.b16 %v4505, %v4504
    %v4515 = vpack.c.b16 %v4507, %v4506
    %4524 = vmatprep.subr.bf16.mxu0 0
    %4525 = vmatpush1.bf16.msra.mxu0 %v4508
    %4526 = vmatprep.subr.bf16.mxu0 0
    %4527 = vmatpush1.bf16.msra.mxu0 %v4509
    %4528 = vmatprep.subr.bf16.mxu0 0
    %4529 = vmatpush1.bf16.msra.mxu0 %v4510
    %4530 = vmatprep.subr.bf16.mxu0 0
    %4531 = vmatpush1.bf16.msra.mxu0 %v4511
    %4532 = vmatprep.subr.bf16.mxu0 0
    %4533 = vmatpush1.bf16.msra.mxu0 %v4512
    %4534 = vmatprep.subr.bf16.mxu0 0
    %4535 = vmatpush1.bf16.msra.mxu0 %v4513
    %4536 = vmatprep.subr.bf16.mxu0 0
    %4537 = vmatpush1.bf16.msra.mxu0 %v4514
    %4538 = vmatprep.subr.bf16.mxu0 0
    %4539 = vmatpush1.bf16.msra.mxu0 %v4515
    %4540 = vmatprep.subr.bf16.mxu0 0
    %4541 = vmatpush1.bf16.msra.mxu0 0
    %4542 = vmatprep.subr.bf16.mxu0 0
    %4543 = vmatpush1.bf16.msra.mxu0 0
    %4544 = vmatprep.subr.bf16.mxu0 0
    %4545 = vmatpush1.bf16.msra.mxu0 0
    %4546 = vmatprep.subr.bf16.mxu0 0
    %4547 = vmatpush1.bf16.msra.mxu0 0
    %4548 = vmatprep.subr.bf16.mxu0 0
    %4549 = vmatpush1.bf16.msra.mxu0 0
    %4550 = vmatprep.subr.bf16.mxu0 0
    %4551 = vmatpush1.bf16.msra.mxu0 0
    %4552 = vmatprep.subr.bf16.mxu0 0
    %4553 = vmatpush1.bf16.msra.mxu0 0
    %4554 = vmatprep.subr.bf16.mxu0 0
    %4555 = vmatpush1.bf16.msra.mxu0 0
    %4556 = vmatprep.mubr.bf16.mxu0 0
    %4557 = vmatmul.mubr.bf16.gmra.mrb[0].mxu0 %v4452
    %v4558 = vpop.f32.mrb[0].mxu0
    %v4559 = vadd.f32 %v4474, %v4558
    %v4560 = vpop.f32.mrb[0].mxu0
    %v4561 = vpop.f32.mrb[0].mxu0
    %v4562 = vpop.f32.mrb[0].mxu0
    %4563 = vdwg.mxu0
    %v4564 = vmax.f32 %v4559, 0.0
    %v4565 = vpack.c.bf16 %v4564, %v4564
    %v4566 = vld [vmem:[#allocation22] sm:$0xf]
    %v4567 = vld [vmem:[#allocation22 + $0x4] sm:$0xf]
    %v4568 = vld [vmem:[#allocation22 + $0x8] sm:$0xf]
    %v4569 = vld [vmem:[#allocation22 + $0xc] sm:$0xf]
    %v4570 = vld [vmem:[#allocation22 + $0x10] sm:$0xf]
    %v4571 = vld [vmem:[#allocation22 + $0x14] sm:$0xf]
    %v4572 = vld [vmem:[#allocation22 + $0x18] sm:$0xf]
    %v4573 = vld [vmem:[#allocation22 + $0x1c] sm:$0xf]
    %v4574 = vld [vmem:[#allocation22 + $0x20] sm:$0xf]
    %v4575 = vld [vmem:[#allocation22 + $0x24] sm:$0xf]
    %v4576 = vld [vmem:[#allocation22 + $0x28] sm:$0xf]
    %v4577 = vld [vmem:[#allocation22 + $0x2c] sm:$0xf]
    %v4578 = vld [vmem:[#allocation22 + $0x30] sm:$0xf]
    %v4579 = vld [vmem:[#allocation22 + $0x34] sm:$0xf]
    %v4580 = vld [vmem:[#allocation22 + $0x38] sm:$0xf]
    %v4581 = vld [vmem:[#allocation22 + $0x3c] sm:$0xf]
    %v4582 = vld [vmem:[#allocation24] sm:$0x1]
    %v4584 = vlaneseq
    %v4585 = vshrl.u32 %v4584, 7
    %v4586 = vsub.s32 0, %v4585
    %v4587 = vrot.slane %v4582, %v4586
    %v4605 = vunpack.c.l.b16 %v4566
    %v4606 = vunpack.c.l.b16 %v4567
    %v4607 = vunpack.c.l.b16 %v4568
    %v4608 = vunpack.c.l.b16 %v4569
    %v4609 = vunpack.c.l.b16 %v4570
    %v4610 = vunpack.c.l.b16 %v4571
    %v4611 = vunpack.c.l.b16 %v4572
    %v4612 = vunpack.c.l.b16 %v4573
    %v4613 = vunpack.c.l.b16 %v4574
    %v4614 = vunpack.c.l.b16 %v4575
    %v4615 = vunpack.c.l.b16 %v4576
    %v4616 = vunpack.c.l.b16 %v4577
    %v4617 = vunpack.c.l.b16 %v4578
    %v4618 = vunpack.c.l.b16 %v4579
    %v4619 = vunpack.c.l.b16 %v4580
    %v4620 = vunpack.c.l.b16 %v4581
    %v4621 = vpack.c.b16 %v4606, %v4605
    %v4622 = vpack.c.b16 %v4608, %v4607
    %v4623 = vpack.c.b16 %v4610, %v4609
    %v4624 = vpack.c.b16 %v4612, %v4611
    %v4625 = vpack.c.b16 %v4614, %v4613
    %v4626 = vpack.c.b16 %v4616, %v4615
    %v4627 = vpack.c.b16 %v4618, %v4617
    %v4628 = vpack.c.b16 %v4620, %v4619
    %4637 = vmatprep.subr.bf16.mxu0 0
    %4638 = vmatpush1.bf16.msra.mxu0 %v4621
    %4639 = vmatprep.subr.bf16.mxu0 0
    %4640 = vmatpush1.bf16.msra.mxu0 %v4622
    %4641 = vmatprep.subr.bf16.mxu0 0
    %4642 = vmatpush1.bf16.msra.mxu0 %v4623
    %4643 = vmatprep.subr.bf16.mxu0 0
    %4644 = vmatpush1.bf16.msra.mxu0 %v4624
    %4645 = vmatprep.subr.bf16.mxu0 0
    %4646 = vmatpush1.bf16.msra.mxu0 %v4625
    %4647 = vmatprep.subr.bf16.mxu0 0
    %4648 = vmatpush1.bf16.msra.mxu0 %v4626
    %4649 = vmatprep.subr.bf16.mxu0 0
    %4650 = vmatpush1.bf16.msra.mxu0 %v4627
    %4651 = vmatprep.subr.bf16.mxu0 0
    %4652 = vmatpush1.bf16.msra.mxu0 %v4628
    %4653 = vmatprep.subr.bf16.mxu0 0
    %4654 = vmatpush1.bf16.msra.mxu0 0
    %4655 = vmatprep.subr.bf16.mxu0 0
    %4656 = vmatpush1.bf16.msra.mxu0 0
    %4657 = vmatprep.subr.bf16.mxu0 0
    %4658 = vmatpush1.bf16.msra.mxu0 0
    %4659 = vmatprep.subr.bf16.mxu0 0
    %4660 = vmatpush1.bf16.msra.mxu0 0
    %4661 = vmatprep.subr.bf16.mxu0 0
    %4662 = vmatpush1.bf16.msra.mxu0 0
    %4663 = vmatprep.subr.bf16.mxu0 0
    %4664 = vmatpush1.bf16.msra.mxu0 0
    %4665 = vmatprep.subr.bf16.mxu0 0
    %4666 = vmatpush1.bf16.msra.mxu0 0
    %4667 = vmatprep.subr.bf16.mxu0 0
    %4668 = vmatpush1.bf16.msra.mxu0 0
    %4669 = vmatprep.mubr.bf16.mxu0 0
    %4670 = vmatmul.mubr.bf16.gmra.mrb[0].mxu0 %v4565
    %v4671 = vpop.f32.mrb[0].mxu0
    %v4672 = vadd.f32 %v4587, %v4671
    %v4673 = vpop.f32.mrb[0].mxu0
    %v4674 = vpop.f32.mrb[0].mxu0
    %v4675 = vpop.f32.mrb[0].mxu0
    %4676 = vdwg.mxu0
    %4677 = vst [vmem:[%s17] sm:$0x3] %v4672
    // Predicated region
    $region130: #{q_net_forward.1} parent=1 // pred_check
      _
    $region131: #{q_net_forward.1} parent=1 // pred_check_branch
      %4679 = sbr.rel (0) target = $region133
    $region132: #{q_net_forward.1} parent=1 // pred_region
      _
    $region133: #{q_net_forward.1} parent=1 // pred_fallthru
      _
    // Predicated region
    $region134: #{q_net_forward.1} parent=1 // pred_check
      _
    $region135: #{q_net_forward.1} parent=1 // pred_check_branch
      %4681 = sbr.rel (0) target = $region137
    $region136: #{q_net_forward.1} parent=1 // pred_region
      _
    $region137: #{q_net_forward.1} parent=1 // pred_fallthru
      _
    %4682 = vsyncpa [#allocation3], 1
    %4683 = vsyncpa [#allocation5], 1
    %4684 = vsyncpa [#allocation8], 1
    %4685 = vsyncpa [#allocation11], 1
    %4686 = vsyncpa [#allocation14], 1
    %4687 = vsyncpa [#allocation17], 1
    %4688 = vsyncpa [#allocation20], 1
    %4689 = vsyncpa [#allocation23], 1

</llo_original>
